<compile_context>
chip_gen: v6e
topology: v6e:2x2x1
jax: 0.10.0
libtpu: 0.0.40
codegen_flags: <defaults>
</compile_context>

<pallas_src>
import jax
import jax.numpy as jnp
from jax.experimental import pallas as pl
from jax.experimental.pallas import tpu as pltpu


def graph_gcn_kernel(h_ref, adj_ref, w1_ref, w2_ref, wc_ref, out_ref):
    # Lane-major layout (graph batch on the 128-lane axis).  Per grid step:
    #   h_ref  : (N, Fin, GB)   node features
    #   adj_ref: (N, N, GB)     raw adjacency (self loops handled algebraically)
    #   w1_ref : (Fin, HID, 1)  GCN layer-1 weight (in x out, trailing lane dim 1)
    #   w2_ref : (HID, HID, 1)  GCN layer-2 weight
    #   wc_ref : (HID, 1)       classifier weight column, pre-scaled by 1/N
    #   out_ref: (1, GB)        lane-dense per-graph logits (bias added by wrapper)
    adj = adj_ref[...]                                     # (N, N, GB) f32
    n_nodes, _, gb = adj.shape
    hid = w1_ref.shape[1]

    # degree of (A + I) = row-sum(A) + 1 (always >= 1, so torch's inf guard is
    # dead code and omitted); rsqrt runs on the EUP.
    deg = jnp.sum(adj, axis=1, keepdims=True) + 1.0        # (N, 1, GB)
    d_is = jax.lax.rsqrt(deg)                              # D^{-1/2}
    d_inv = d_is * d_is                                    # D^{-1}
    # Hoist the aggregation-width broadcasts once; both GCN layers reuse them.
    d_is_b = jnp.broadcast_to(d_is, (n_nodes, hid, gb))
    d_inv_b = jnp.broadcast_to(d_inv, (n_nodes, hid, gb))
    # Pre-slice adjacency columns once (each (N, 1, GB)); reused by both layers.
    adj_cols = [adj[:, m:m + 1, :] for m in range(n_nodes)]

    def linear(x, w_ref):
        # (N, Fi, GB) @ (Fi, Fo) -> (N, Fo, GB) as Fi lane-dense VPU
        # broadcast-multiply-accumulates (K = 4 / 32 is far too small for MXU).
        w = w_ref[...]                                     # (Fi, Fo, 1)
        fi = w.shape[0]
        acc = x[:, 0:1, :] * w[0:1]                        # (N,1,GB)*(1,Fo,1)->(N,Fo,GB)
        for i in range(1, fi):
            acc = acc + x[:, i:i + 1, :] * w[i:i + 1]
        return acc

    def aggregate(x):
        # adj_norm @ x with adj_norm = D^{-1/2}(A + I)D^{-1/2}; self-loop folded
        # in algebraically:  d_is * (A @ (d_is * x)) + d_inv * x.   Pure VPU.
        xs = d_is_b * x                                    # (N, HID, GB)
        ax = adj_cols[0] * xs[0:1]
        for m in range(1, n_nodes):
            ax = ax + adj_cols[m] * xs[m:m + 1]
        return d_is_b * ax + d_inv_b * x

    h = h_ref[...]                                         # (N, Fin, GB)
    h1 = jnp.maximum(aggregate(linear(h, w1_ref)), 0.0)    # GCN layer 1 + relu
    h2 = jnp.maximum(aggregate(linear(h1, w2_ref)), 0.0)   # GCN layer 2 + relu

    # Fused mean-pool + classifier (1/N already folded into wc by the wrapper).
    pooled = jnp.sum(h2, axis=0)                           # (HID, GB) node-sum
    logits = jnp.sum(wc_ref[...] * pooled, axis=0, keepdims=True)   # (1, GB)
    out_ref[...] = logits                                  # lane-dense full-width store


def graph_gcn_forward(h, adj, w1, w2, wc, bc, *, graphs_per_block=128):
    """Batched GraphGCN forward.

    h: (B, N, Fin), adj: (B, N, N), w1: (Fin, HID), w2: (HID, HID),
    wc: (HID, 1), bc: (1, 1).  Returns per-graph logits of shape (B,).
    """
    B, N, Fin = h.shape
    HID = w1.shape[1]
    gpb = min(graphs_per_block, B)
    assert B % gpb == 0, "pad the graph batch to a multiple of graphs_per_block"
    nb = B // gpb   # keep nb >= 2 (and even) when possible so both v7x TCs get work

    # Lane-major inputs: graph batch on the minor (lane) axis.
    h_lm = jnp.transpose(h, (1, 2, 0)).astype(jnp.float32)        # (N, Fin, B)
    adj_lm = jnp.transpose(adj, (1, 2, 0)).astype(jnp.float32)    # (N, N, B)
    # Weights get a trailing length-1 lane axis so their output-feature axis
    # sits on sublanes, matching the (N, F, B) intermediates.
    w1_k = w1.astype(jnp.float32)[:, :, None]                     # (Fin, HID, 1)
    w2_k = w2.astype(jnp.float32)[:, :, None]                     # (HID, HID, 1)
    # Fold the 1/N of mean pooling into the classifier weight column.
    wc_k = (wc.reshape(HID, 1) / jnp.float32(N)).astype(jnp.float32)

    out = pl.pallas_call(
        graph_gcn_kernel,
        out_shape=jax.ShapeDtypeStruct((1, B), jnp.float32),
        grid=(nb,),
        in_specs=[
            pl.BlockSpec((N, Fin, gpb), lambda i: (0, 0, i)),     # H block
            pl.BlockSpec((N, N, gpb), lambda i: (0, 0, i)),       # adj block
            pl.BlockSpec((Fin, HID, 1), lambda i: (0, 0, 0)),     # W1 (resident)
            pl.BlockSpec((HID, HID, 1), lambda i: (0, 0, 0)),     # W2 (resident)
            pl.BlockSpec((HID, 1), lambda i: (0, 0)),             # wc (1/N folded)
        ],
        out_specs=pl.BlockSpec((1, gpb), lambda i: (0, i)),       # lane-dense row slab
        compiler_params=pltpu.CompilerParams(
            dimension_semantics=("parallel",),                    # batch axis -> megacore
            vmem_limit_bytes=32 * 1024 * 1024,
        ),
    )(h_lm, adj_lm, w1_k, w2_k, wc_k)
    # Bias added here instead of shipping a (1,1) VMEM block into the kernel.
    return out.reshape(B) + bc.reshape(())


def reference_forward(h, adj, w1, w2, wc, bc):
    """Pure-JAX single-graph reference mirroring the PyTorch module literally."""
    n = adj.shape[0]
    a_hat = adj + jnp.eye(n, dtype=adj.dtype)
    deg = a_hat.sum(axis=1)
    dinv = jnp.power(deg, -0.5)
    dinv = jnp.where(jnp.isinf(dinv), 0.0, dinv)
    adj_norm = a_hat * dinv[:, None] * dinv[None, :]
    h1 = jax.nn.relu(adj_norm @ (h @ w1))
    h2 = jax.nn.relu(adj_norm @ (h1 @ w2))
    pooled = h2.mean(axis=0)
    return pooled @ wc[:, 0] + bc[0, 0]


if __name__ == "__main__":
    key = jax.random.PRNGKey(0)
    num_graphs, n_nodes, in_features, hidden_features = 256, 8, 4, 32

    k_h, k_a, k_w1, k_w2, k_wc, k_bc = jax.random.split(key, 6)

    # Node features for a batch of graphs.
    H = jax.random.normal(k_h, (num_graphs, n_nodes, in_features), dtype=jnp.float32)

    # Symmetric 0/1 adjacencies with empty diagonals.
    a_raw = jax.random.uniform(k_a, (num_graphs, n_nodes, n_nodes))
    adj = (a_raw + jnp.swapaxes(a_raw, 1, 2) > 1.0).astype(jnp.float32)
    adj = adj * (1.0 - jnp.eye(n_nodes, dtype=jnp.float32))[None]

    # Deterministic synthetic parameters (torch Linear weights pre-transposed to (in, out)).
    W1 = 0.1 * jax.random.normal(k_w1, (in_features, hidden_features), dtype=jnp.float32)
    W2 = 0.1 * jax.random.normal(k_w2, (hidden_features, hidden_features), dtype=jnp.float32)
    Wc = 0.1 * jax.random.normal(k_wc, (hidden_features, 1), dtype=jnp.float32)
    bc = 0.1 * jax.random.normal(k_bc, (1, 1), dtype=jnp.float32)

    # Reference (literal translation of the torch module), vmapped over graphs.
    ref = jax.vmap(lambda hh, aa: reference_forward(hh, aa, W1, W2, Wc, bc))(H, adj)

    out = graph_gcn_forward(H, adj, W1, W2, Wc, bc)
    jax.block_until_ready(out)
    assert out.shape == (num_graphs,)
    assert jnp.allclose(out, ref, atol=2e-4, rtol=2e-4), \
        ("kernel mismatch", float(jnp.abs(out - ref).max()))

    print("KERNEL_OK")
</pallas_src>

<mosaic_0001>
module attributes {stable_mosaic.version = 11 : i64} {
  func.func @graph_gcn_kernel(%arg0: i32, %arg1: memref<8x4x128xf32, #tpu.memory_space<vmem>>, %arg2: memref<8x8x128xf32, #tpu.memory_space<vmem>>, %arg3: memref<4x32x1xf32, #tpu.memory_space<vmem>>, %arg4: memref<32x32x1xf32, #tpu.memory_space<vmem>>, %arg5: memref<32x1xf32, #tpu.memory_space<vmem>>, %arg6: memref<1x128xf32, #tpu.memory_space<vmem>>) attributes {dimension_semantics = [#tpu.dimension_semantics<parallel>], iteration_bounds = array<i64: 2>, scalar_prefetch = 0 : i64, scratch_operands = 0 : i64, tpu.core_type = #tpu.core_type<tc>, window_params = [{transform_indices = @transform_0, window_bounds = array<i64: 8, 4, 128>}, {transform_indices = @transform_1, window_bounds = array<i64: 8, 8, 128>}, {pipeline_mode = #tpu.pipeline_mode<synchronous>, transform_indices = @transform_2, window_bounds = array<i64: 4, 32, 1>}, {pipeline_mode = #tpu.pipeline_mode<synchronous>, transform_indices = @transform_3, window_bounds = array<i64: 32, 32, 1>}, {pipeline_mode = #tpu.pipeline_mode<synchronous>, transform_indices = @transform_4, window_bounds = array<i64: 32, 1>}, {transform_indices = @transform_5, window_bounds = array<i64: 1, 128>}]} {
    %c0 = arith.constant 0 : index
    %c0_0 = arith.constant 0 : index
    %c0_1 = arith.constant 0 : index
    %0 = vector.load %arg2[%c0, %c0_0, %c0_1] : memref<8x8x128xf32, #tpu.memory_space<vmem>>, vector<8x8x128xf32>
    %cst = arith.constant dense<0.000000e+00> : vector<8x128xf32>
    %1 = vector.multi_reduction <add>, %0, %cst [1] : vector<8x8x128xf32> to vector<8x128xf32>
    %2 = vector.shape_cast %1 : vector<8x128xf32> to vector<8x1x128xf32>
    %cst_2 = arith.constant 1.000000e+00 : f32
    %3 = vector.broadcast %cst_2 : f32 to vector<8x1x128xf32>
    %4 = arith.addf %2, %3 : vector<8x1x128xf32>
    %5 = math.rsqrt %4 : vector<8x1x128xf32>
    %6 = arith.mulf %5, %5 : vector<8x1x128xf32>
    %7 = vector.shape_cast %5 : vector<8x1x128xf32> to vector<8x1x128xf32>
    %8 = vector.broadcast %7 : vector<8x1x128xf32> to vector<8x32x128xf32>
    %9 = vector.shape_cast %6 : vector<8x1x128xf32> to vector<8x1x128xf32>
    %10 = vector.broadcast %9 : vector<8x1x128xf32> to vector<8x32x128xf32>
    %11 = vector.extract_strided_slice %0 {offsets = [0, 0, 0], sizes = [8, 1, 128], strides = [1, 1, 1]} : vector<8x8x128xf32> to vector<8x1x128xf32>
    %12 = vector.extract_strided_slice %0 {offsets = [0, 1, 0], sizes = [8, 1, 128], strides = [1, 1, 1]} : vector<8x8x128xf32> to vector<8x1x128xf32>
    %13 = vector.extract_strided_slice %0 {offsets = [0, 2, 0], sizes = [8, 1, 128], strides = [1, 1, 1]} : vector<8x8x128xf32> to vector<8x1x128xf32>
    %14 = vector.extract_strided_slice %0 {offsets = [0, 3, 0], sizes = [8, 1, 128], strides = [1, 1, 1]} : vector<8x8x128xf32> to vector<8x1x128xf32>
    %15 = vector.extract_strided_slice %0 {offsets = [0, 4, 0], sizes = [8, 1, 128], strides = [1, 1, 1]} : vector<8x8x128xf32> to vector<8x1x128xf32>
    %16 = vector.extract_strided_slice %0 {offsets = [0, 5, 0], sizes = [8, 1, 128], strides = [1, 1, 1]} : vector<8x8x128xf32> to vector<8x1x128xf32>
    %17 = vector.extract_strided_slice %0 {offsets = [0, 6, 0], sizes = [8, 1, 128], strides = [1, 1, 1]} : vector<8x8x128xf32> to vector<8x1x128xf32>
    %18 = vector.extract_strided_slice %0 {offsets = [0, 7, 0], sizes = [8, 1, 128], strides = [1, 1, 1]} : vector<8x8x128xf32> to vector<8x1x128xf32>
    %c0_3 = arith.constant 0 : index
    %c0_4 = arith.constant 0 : index
    %c0_5 = arith.constant 0 : index
    %19 = vector.load %arg1[%c0_3, %c0_4, %c0_5] : memref<8x4x128xf32, #tpu.memory_space<vmem>>, vector<8x4x128xf32>
    %c0_6 = arith.constant 0 : index
    %c0_7 = arith.constant 0 : index
    %c0_8 = arith.constant 0 : index
    %20 = vector.load %arg3[%c0_6, %c0_7, %c0_8] : memref<4x32x1xf32, #tpu.memory_space<vmem>>, vector<4x32x1xf32>
    %21 = vector.extract_strided_slice %19 {offsets = [0, 0, 0], sizes = [8, 1, 128], strides = [1, 1, 1]} : vector<8x4x128xf32> to vector<8x1x128xf32>
    %22 = vector.extract_strided_slice %20 {offsets = [0, 0, 0], sizes = [1, 32, 1], strides = [1, 1, 1]} : vector<4x32x1xf32> to vector<1x32x1xf32>
    %23 = vector.broadcast %21 : vector<8x1x128xf32> to vector<8x32x128xf32>
    %24 = vector.broadcast %22 : vector<1x32x1xf32> to vector<8x32x128xf32>
    %25 = arith.mulf %23, %24 : vector<8x32x128xf32>
    %26 = vector.extract_strided_slice %19 {offsets = [0, 1, 0], sizes = [8, 1, 128], strides = [1, 1, 1]} : vector<8x4x128xf32> to vector<8x1x128xf32>
    %27 = vector.extract_strided_slice %20 {offsets = [1, 0, 0], sizes = [1, 32, 1], strides = [1, 1, 1]} : vector<4x32x1xf32> to vector<1x32x1xf32>
    %28 = vector.broadcast %26 : vector<8x1x128xf32> to vector<8x32x128xf32>
    %29 = vector.broadcast %27 : vector<1x32x1xf32> to vector<8x32x128xf32>
    %30 = arith.mulf %28, %29 : vector<8x32x128xf32>
    %31 = arith.addf %25, %30 : vector<8x32x128xf32>
    %32 = vector.extract_strided_slice %19 {offsets = [0, 2, 0], sizes = [8, 1, 128], strides = [1, 1, 1]} : vector<8x4x128xf32> to vector<8x1x128xf32>
    %33 = vector.extract_strided_slice %20 {offsets = [2, 0, 0], sizes = [1, 32, 1], strides = [1, 1, 1]} : vector<4x32x1xf32> to vector<1x32x1xf32>
    %34 = vector.broadcast %32 : vector<8x1x128xf32> to vector<8x32x128xf32>
    %35 = vector.broadcast %33 : vector<1x32x1xf32> to vector<8x32x128xf32>
    %36 = arith.mulf %34, %35 : vector<8x32x128xf32>
    %37 = arith.addf %31, %36 : vector<8x32x128xf32>
    %38 = vector.extract_strided_slice %19 {offsets = [0, 3, 0], sizes = [8, 1, 128], strides = [1, 1, 1]} : vector<8x4x128xf32> to vector<8x1x128xf32>
    %39 = vector.extract_strided_slice %20 {offsets = [3, 0, 0], sizes = [1, 32, 1], strides = [1, 1, 1]} : vector<4x32x1xf32> to vector<1x32x1xf32>
    %40 = vector.broadcast %38 : vector<8x1x128xf32> to vector<8x32x128xf32>
    %41 = vector.broadcast %39 : vector<1x32x1xf32> to vector<8x32x128xf32>
    %42 = arith.mulf %40, %41 : vector<8x32x128xf32>
    %43 = arith.addf %37, %42 : vector<8x32x128xf32>
    %44 = arith.mulf %8, %43 : vector<8x32x128xf32>
    %45 = vector.extract_strided_slice %44 {offsets = [0, 0, 0], sizes = [1, 32, 128], strides = [1, 1, 1]} : vector<8x32x128xf32> to vector<1x32x128xf32>
    %46 = vector.broadcast %11 : vector<8x1x128xf32> to vector<8x32x128xf32>
    %47 = vector.broadcast %45 : vector<1x32x128xf32> to vector<8x32x128xf32>
    %48 = arith.mulf %46, %47 : vector<8x32x128xf32>
    %49 = vector.extract_strided_slice %44 {offsets = [1, 0, 0], sizes = [1, 32, 128], strides = [1, 1, 1]} : vector<8x32x128xf32> to vector<1x32x128xf32>
    %50 = vector.broadcast %12 : vector<8x1x128xf32> to vector<8x32x128xf32>
    %51 = vector.broadcast %49 : vector<1x32x128xf32> to vector<8x32x128xf32>
    %52 = arith.mulf %50, %51 : vector<8x32x128xf32>
    %53 = arith.addf %48, %52 : vector<8x32x128xf32>
    %54 = vector.extract_strided_slice %44 {offsets = [2, 0, 0], sizes = [1, 32, 128], strides = [1, 1, 1]} : vector<8x32x128xf32> to vector<1x32x128xf32>
    %55 = vector.broadcast %13 : vector<8x1x128xf32> to vector<8x32x128xf32>
    %56 = vector.broadcast %54 : vector<1x32x128xf32> to vector<8x32x128xf32>
    %57 = arith.mulf %55, %56 : vector<8x32x128xf32>
    %58 = arith.addf %53, %57 : vector<8x32x128xf32>
    %59 = vector.extract_strided_slice %44 {offsets = [3, 0, 0], sizes = [1, 32, 128], strides = [1, 1, 1]} : vector<8x32x128xf32> to vector<1x32x128xf32>
    %60 = vector.broadcast %14 : vector<8x1x128xf32> to vector<8x32x128xf32>
    %61 = vector.broadcast %59 : vector<1x32x128xf32> to vector<8x32x128xf32>
    %62 = arith.mulf %60, %61 : vector<8x32x128xf32>
    %63 = arith.addf %58, %62 : vector<8x32x128xf32>
    %64 = vector.extract_strided_slice %44 {offsets = [4, 0, 0], sizes = [1, 32, 128], strides = [1, 1, 1]} : vector<8x32x128xf32> to vector<1x32x128xf32>
    %65 = vector.broadcast %15 : vector<8x1x128xf32> to vector<8x32x128xf32>
    %66 = vector.broadcast %64 : vector<1x32x128xf32> to vector<8x32x128xf32>
    %67 = arith.mulf %65, %66 : vector<8x32x128xf32>
    %68 = arith.addf %63, %67 : vector<8x32x128xf32>
    %69 = vector.extract_strided_slice %44 {offsets = [5, 0, 0], sizes = [1, 32, 128], strides = [1, 1, 1]} : vector<8x32x128xf32> to vector<1x32x128xf32>
    %70 = vector.broadcast %16 : vector<8x1x128xf32> to vector<8x32x128xf32>
    %71 = vector.broadcast %69 : vector<1x32x128xf32> to vector<8x32x128xf32>
    %72 = arith.mulf %70, %71 : vector<8x32x128xf32>
    %73 = arith.addf %68, %72 : vector<8x32x128xf32>
    %74 = vector.extract_strided_slice %44 {offsets = [6, 0, 0], sizes = [1, 32, 128], strides = [1, 1, 1]} : vector<8x32x128xf32> to vector<1x32x128xf32>
    %75 = vector.broadcast %17 : vector<8x1x128xf32> to vector<8x32x128xf32>
    %76 = vector.broadcast %74 : vector<1x32x128xf32> to vector<8x32x128xf32>
    %77 = arith.mulf %75, %76 : vector<8x32x128xf32>
    %78 = arith.addf %73, %77 : vector<8x32x128xf32>
    %79 = vector.extract_strided_slice %44 {offsets = [7, 0, 0], sizes = [1, 32, 128], strides = [1, 1, 1]} : vector<8x32x128xf32> to vector<1x32x128xf32>
    %80 = vector.broadcast %18 : vector<8x1x128xf32> to vector<8x32x128xf32>
    %81 = vector.broadcast %79 : vector<1x32x128xf32> to vector<8x32x128xf32>
    %82 = arith.mulf %80, %81 : vector<8x32x128xf32>
    %83 = arith.addf %78, %82 : vector<8x32x128xf32>
    %84 = arith.mulf %8, %83 : vector<8x32x128xf32>
    %85 = arith.mulf %10, %43 : vector<8x32x128xf32>
    %86 = arith.addf %84, %85 : vector<8x32x128xf32>
    %cst_9 = arith.constant 0.000000e+00 : f32
    %87 = vector.broadcast %cst_9 : f32 to vector<8x32x128xf32>
    %88 = arith.maximumf %86, %87 : vector<8x32x128xf32>
    %c0_10 = arith.constant 0 : index
    %c0_11 = arith.constant 0 : index
    %c0_12 = arith.constant 0 : index
    %89 = vector.load %arg4[%c0_10, %c0_11, %c0_12] : memref<32x32x1xf32, #tpu.memory_space<vmem>>, vector<32x32x1xf32>
    %90 = vector.extract_strided_slice %88 {offsets = [0, 0, 0], sizes = [8, 1, 128], strides = [1, 1, 1]} : vector<8x32x128xf32> to vector<8x1x128xf32>
    %91 = vector.extract_strided_slice %89 {offsets = [0, 0, 0], sizes = [1, 32, 1], strides = [1, 1, 1]} : vector<32x32x1xf32> to vector<1x32x1xf32>
    %92 = vector.broadcast %90 : vector<8x1x128xf32> to vector<8x32x128xf32>
    %93 = vector.broadcast %91 : vector<1x32x1xf32> to vector<8x32x128xf32>
    %94 = arith.mulf %92, %93 : vector<8x32x128xf32>
    %95 = vector.extract_strided_slice %88 {offsets = [0, 1, 0], sizes = [8, 1, 128], strides = [1, 1, 1]} : vector<8x32x128xf32> to vector<8x1x128xf32>
    %96 = vector.extract_strided_slice %89 {offsets = [1, 0, 0], sizes = [1, 32, 1], strides = [1, 1, 1]} : vector<32x32x1xf32> to vector<1x32x1xf32>
    %97 = vector.broadcast %95 : vector<8x1x128xf32> to vector<8x32x128xf32>
    %98 = vector.broadcast %96 : vector<1x32x1xf32> to vector<8x32x128xf32>
    %99 = arith.mulf %97, %98 : vector<8x32x128xf32>
    %100 = arith.addf %94, %99 : vector<8x32x128xf32>
    %101 = vector.extract_strided_slice %88 {offsets = [0, 2, 0], sizes = [8, 1, 128], strides = [1, 1, 1]} : vector<8x32x128xf32> to vector<8x1x128xf32>
    %102 = vector.extract_strided_slice %89 {offsets = [2, 0, 0], sizes = [1, 32, 1], strides = [1, 1, 1]} : vector<32x32x1xf32> to vector<1x32x1xf32>
    %103 = vector.broadcast %101 : vector<8x1x128xf32> to vector<8x32x128xf32>
    %104 = vector.broadcast %102 : vector<1x32x1xf32> to vector<8x32x128xf32>
    %105 = arith.mulf %103, %104 : vector<8x32x128xf32>
    %106 = arith.addf %100, %105 : vector<8x32x128xf32>
    %107 = vector.extract_strided_slice %88 {offsets = [0, 3, 0], sizes = [8, 1, 128], strides = [1, 1, 1]} : vector<8x32x128xf32> to vector<8x1x128xf32>
    %108 = vector.extract_strided_slice %89 {offsets = [3, 0, 0], sizes = [1, 32, 1], strides = [1, 1, 1]} : vector<32x32x1xf32> to vector<1x32x1xf32>
    %109 = vector.broadcast %107 : vector<8x1x128xf32> to vector<8x32x128xf32>
    %110 = vector.broadcast %108 : vector<1x32x1xf32> to vector<8x32x128xf32>
    %111 = arith.mulf %109, %110 : vector<8x32x128xf32>
    %112 = arith.addf %106, %111 : vector<8x32x128xf32>
    %113 = vector.extract_strided_slice %88 {offsets = [0, 4, 0], sizes = [8, 1, 128], strides = [1, 1, 1]} : vector<8x32x128xf32> to vector<8x1x128xf32>
    %114 = vector.extract_strided_slice %89 {offsets = [4, 0, 0], sizes = [1, 32, 1], strides = [1, 1, 1]} : vector<32x32x1xf32> to vector<1x32x1xf32>
    %115 = vector.broadcast %113 : vector<8x1x128xf32> to vector<8x32x128xf32>
    %116 = vector.broadcast %114 : vector<1x32x1xf32> to vector<8x32x128xf32>
    %117 = arith.mulf %115, %116 : vector<8x32x128xf32>
    %118 = arith.addf %112, %117 : vector<8x32x128xf32>
    %119 = vector.extract_strided_slice %88 {offsets = [0, 5, 0], sizes = [8, 1, 128], strides = [1, 1, 1]} : vector<8x32x128xf32> to vector<8x1x128xf32>
    %120 = vector.extract_strided_slice %89 {offsets = [5, 0, 0], sizes = [1, 32, 1], strides = [1, 1, 1]} : vector<32x32x1xf32> to vector<1x32x1xf32>
    %121 = vector.broadcast %119 : vector<8x1x128xf32> to vector<8x32x128xf32>
    %122 = vector.broadcast %120 : vector<1x32x1xf32> to vector<8x32x128xf32>
    %123 = arith.mulf %121, %122 : vector<8x32x128xf32>
    %124 = arith.addf %118, %123 : vector<8x32x128xf32>
    %125 = vector.extract_strided_slice %88 {offsets = [0, 6, 0], sizes = [8, 1, 128], strides = [1, 1, 1]} : vector<8x32x128xf32> to vector<8x1x128xf32>
    %126 = vector.extract_strided_slice %89 {offsets = [6, 0, 0], sizes = [1, 32, 1], strides = [1, 1, 1]} : vector<32x32x1xf32> to vector<1x32x1xf32>
    %127 = vector.broadcast %125 : vector<8x1x128xf32> to vector<8x32x128xf32>
    %128 = vector.broadcast %126 : vector<1x32x1xf32> to vector<8x32x128xf32>
    %129 = arith.mulf %127, %128 : vector<8x32x128xf32>
    %130 = arith.addf %124, %129 : vector<8x32x128xf32>
    %131 = vector.extract_strided_slice %88 {offsets = [0, 7, 0], sizes = [8, 1, 128], strides = [1, 1, 1]} : vector<8x32x128xf32> to vector<8x1x128xf32>
    %132 = vector.extract_strided_slice %89 {offsets = [7, 0, 0], sizes = [1, 32, 1], strides = [1, 1, 1]} : vector<32x32x1xf32> to vector<1x32x1xf32>
    %133 = vector.broadcast %131 : vector<8x1x128xf32> to vector<8x32x128xf32>
    %134 = vector.broadcast %132 : vector<1x32x1xf32> to vector<8x32x128xf32>
    %135 = arith.mulf %133, %134 : vector<8x32x128xf32>
    %136 = arith.addf %130, %135 : vector<8x32x128xf32>
    %137 = vector.extract_strided_slice %88 {offsets = [0, 8, 0], sizes = [8, 1, 128], strides = [1, 1, 1]} : vector<8x32x128xf32> to vector<8x1x128xf32>
    %138 = vector.extract_strided_slice %89 {offsets = [8, 0, 0], sizes = [1, 32, 1], strides = [1, 1, 1]} : vector<32x32x1xf32> to vector<1x32x1xf32>
    %139 = vector.broadcast %137 : vector<8x1x128xf32> to vector<8x32x128xf32>
    %140 = vector.broadcast %138 : vector<1x32x1xf32> to vector<8x32x128xf32>
    %141 = arith.mulf %139, %140 : vector<8x32x128xf32>
    %142 = arith.addf %136, %141 : vector<8x32x128xf32>
    %143 = vector.extract_strided_slice %88 {offsets = [0, 9, 0], sizes = [8, 1, 128], strides = [1, 1, 1]} : vector<8x32x128xf32> to vector<8x1x128xf32>
    %144 = vector.extract_strided_slice %89 {offsets = [9, 0, 0], sizes = [1, 32, 1], strides = [1, 1, 1]} : vector<32x32x1xf32> to vector<1x32x1xf32>
    %145 = vector.broadcast %143 : vector<8x1x128xf32> to vector<8x32x128xf32>
    %146 = vector.broadcast %144 : vector<1x32x1xf32> to vector<8x32x128xf32>
    %147 = arith.mulf %145, %146 : vector<8x32x128xf32>
    %148 = arith.addf %142, %147 : vector<8x32x128xf32>
    %149 = vector.extract_strided_slice %88 {offsets = [0, 10, 0], sizes = [8, 1, 128], strides = [1, 1, 1]} : vector<8x32x128xf32> to vector<8x1x128xf32>
    %150 = vector.extract_strided_slice %89 {offsets = [10, 0, 0], sizes = [1, 32, 1], strides = [1, 1, 1]} : vector<32x32x1xf32> to vector<1x32x1xf32>
    %151 = vector.broadcast %149 : vector<8x1x128xf32> to vector<8x32x128xf32>
    %152 = vector.broadcast %150 : vector<1x32x1xf32> to vector<8x32x128xf32>
    %153 = arith.mulf %151, %152 : vector<8x32x128xf32>
    %154 = arith.addf %148, %153 : vector<8x32x128xf32>
    %155 = vector.extract_strided_slice %88 {offsets = [0, 11, 0], sizes = [8, 1, 128], strides = [1, 1, 1]} : vector<8x32x128xf32> to vector<8x1x128xf32>
    %156 = vector.extract_strided_slice %89 {offsets = [11, 0, 0], sizes = [1, 32, 1], strides = [1, 1, 1]} : vector<32x32x1xf32> to vector<1x32x1xf32>
    %157 = vector.broadcast %155 : vector<8x1x128xf32> to vector<8x32x128xf32>
    %158 = vector.broadcast %156 : vector<1x32x1xf32> to vector<8x32x128xf32>
    %159 = arith.mulf %157, %158 : vector<8x32x128xf32>
    %160 = arith.addf %154, %159 : vector<8x32x128xf32>
    %161 = vector.extract_strided_slice %88 {offsets = [0, 12, 0], sizes = [8, 1, 128], strides = [1, 1, 1]} : vector<8x32x128xf32> to vector<8x1x128xf32>
    %162 = vector.extract_strided_slice %89 {offsets = [12, 0, 0], sizes = [1, 32, 1], strides = [1, 1, 1]} : vector<32x32x1xf32> to vector<1x32x1xf32>
    %163 = vector.broadcast %161 : vector<8x1x128xf32> to vector<8x32x128xf32>
    %164 = vector.broadcast %162 : vector<1x32x1xf32> to vector<8x32x128xf32>
    %165 = arith.mulf %163, %164 : vector<8x32x128xf32>
    %166 = arith.addf %160, %165 : vector<8x32x128xf32>
    %167 = vector.extract_strided_slice %88 {offsets = [0, 13, 0], sizes = [8, 1, 128], strides = [1, 1, 1]} : vector<8x32x128xf32> to vector<8x1x128xf32>
    %168 = vector.extract_strided_slice %89 {offsets = [13, 0, 0], sizes = [1, 32, 1], strides = [1, 1, 1]} : vector<32x32x1xf32> to vector<1x32x1xf32>
    %169 = vector.broadcast %167 : vector<8x1x128xf32> to vector<8x32x128xf32>
    %170 = vector.broadcast %168 : vector<1x32x1xf32> to vector<8x32x128xf32>
    %171 = arith.mulf %169, %170 : vector<8x32x128xf32>
    %172 = arith.addf %166, %171 : vector<8x32x128xf32>
    %173 = vector.extract_strided_slice %88 {offsets = [0, 14, 0], sizes = [8, 1, 128], strides = [1, 1, 1]} : vector<8x32x128xf32> to vector<8x1x128xf32>
    %174 = vector.extract_strided_slice %89 {offsets = [14, 0, 0], sizes = [1, 32, 1], strides = [1, 1, 1]} : vector<32x32x1xf32> to vector<1x32x1xf32>
    %175 = vector.broadcast %173 : vector<8x1x128xf32> to vector<8x32x128xf32>
    %176 = vector.broadcast %174 : vector<1x32x1xf32> to vector<8x32x128xf32>
    %177 = arith.mulf %175, %176 : vector<8x32x128xf32>
    %178 = arith.addf %172, %177 : vector<8x32x128xf32>
    %179 = vector.extract_strided_slice %88 {offsets = [0, 15, 0], sizes = [8, 1, 128], strides = [1, 1, 1]} : vector<8x32x128xf32> to vector<8x1x128xf32>
    %180 = vector.extract_strided_slice %89 {offsets = [15, 0, 0], sizes = [1, 32, 1], strides = [1, 1, 1]} : vector<32x32x1xf32> to vector<1x32x1xf32>
    %181 = vector.broadcast %179 : vector<8x1x128xf32> to vector<8x32x128xf32>
    %182 = vector.broadcast %180 : vector<1x32x1xf32> to vector<8x32x128xf32>
    %183 = arith.mulf %181, %182 : vector<8x32x128xf32>
    %184 = arith.addf %178, %183 : vector<8x32x128xf32>
    %185 = vector.extract_strided_slice %88 {offsets = [0, 16, 0], sizes = [8, 1, 128], strides = [1, 1, 1]} : vector<8x32x128xf32> to vector<8x1x128xf32>
    %186 = vector.extract_strided_slice %89 {offsets = [16, 0, 0], sizes = [1, 32, 1], strides = [1, 1, 1]} : vector<32x32x1xf32> to vector<1x32x1xf32>
    %187 = vector.broadcast %185 : vector<8x1x128xf32> to vector<8x32x128xf32>
    %188 = vector.broadcast %186 : vector<1x32x1xf32> to vector<8x32x128xf32>
    %189 = arith.mulf %187, %188 : vector<8x32x128xf32>
    %190 = arith.addf %184, %189 : vector<8x32x128xf32>
    %191 = vector.extract_strided_slice %88 {offsets = [0, 17, 0], sizes = [8, 1, 128], strides = [1, 1, 1]} : vector<8x32x128xf32> to vector<8x1x128xf32>
    %192 = vector.extract_strided_slice %89 {offsets = [17, 0, 0], sizes = [1, 32, 1], strides = [1, 1, 1]} : vector<32x32x1xf32> to vector<1x32x1xf32>
    %193 = vector.broadcast %191 : vector<8x1x128xf32> to vector<8x32x128xf32>
    %194 = vector.broadcast %192 : vector<1x32x1xf32> to vector<8x32x128xf32>
    %195 = arith.mulf %193, %194 : vector<8x32x128xf32>
    %196 = arith.addf %190, %195 : vector<8x32x128xf32>
    %197 = vector.extract_strided_slice %88 {offsets = [0, 18, 0], sizes = [8, 1, 128], strides = [1, 1, 1]} : vector<8x32x128xf32> to vector<8x1x128xf32>
    %198 = vector.extract_strided_slice %89 {offsets = [18, 0, 0], sizes = [1, 32, 1], strides = [1, 1, 1]} : vector<32x32x1xf32> to vector<1x32x1xf32>
    %199 = vector.broadcast %197 : vector<8x1x128xf32> to vector<8x32x128xf32>
    %200 = vector.broadcast %198 : vector<1x32x1xf32> to vector<8x32x128xf32>
    %201 = arith.mulf %199, %200 : vector<8x32x128xf32>
    %202 = arith.addf %196, %201 : vector<8x32x128xf32>
    %203 = vector.extract_strided_slice %88 {offsets = [0, 19, 0], sizes = [8, 1, 128], strides = [1, 1, 1]} : vector<8x32x128xf32> to vector<8x1x128xf32>
    %204 = vector.extract_strided_slice %89 {offsets = [19, 0, 0], sizes = [1, 32, 1], strides = [1, 1, 1]} : vector<32x32x1xf32> to vector<1x32x1xf32>
    %205 = vector.broadcast %203 : vector<8x1x128xf32> to vector<8x32x128xf32>
    %206 = vector.broadcast %204 : vector<1x32x1xf32> to vector<8x32x128xf32>
    %207 = arith.mulf %205, %206 : vector<8x32x128xf32>
    %208 = arith.addf %202, %207 : vector<8x32x128xf32>
    %209 = vector.extract_strided_slice %88 {offsets = [0, 20, 0], sizes = [8, 1, 128], strides = [1, 1, 1]} : vector<8x32x128xf32> to vector<8x1x128xf32>
    %210 = vector.extract_strided_slice %89 {offsets = [20, 0, 0], sizes = [1, 32, 1], strides = [1, 1, 1]} : vector<32x32x1xf32> to vector<1x32x1xf32>
    %211 = vector.broadcast %209 : vector<8x1x128xf32> to vector<8x32x128xf32>
    %212 = vector.broadcast %210 : vector<1x32x1xf32> to vector<8x32x128xf32>
    %213 = arith.mulf %211, %212 : vector<8x32x128xf32>
    %214 = arith.addf %208, %213 : vector<8x32x128xf32>
    %215 = vector.extract_strided_slice %88 {offsets = [0, 21, 0], sizes = [8, 1, 128], strides = [1, 1, 1]} : vector<8x32x128xf32> to vector<8x1x128xf32>
    %216 = vector.extract_strided_slice %89 {offsets = [21, 0, 0], sizes = [1, 32, 1], strides = [1, 1, 1]} : vector<32x32x1xf32> to vector<1x32x1xf32>
    %217 = vector.broadcast %215 : vector<8x1x128xf32> to vector<8x32x128xf32>
    %218 = vector.broadcast %216 : vector<1x32x1xf32> to vector<8x32x128xf32>
    %219 = arith.mulf %217, %218 : vector<8x32x128xf32>
    %220 = arith.addf %214, %219 : vector<8x32x128xf32>
    %221 = vector.extract_strided_slice %88 {offsets = [0, 22, 0], sizes = [8, 1, 128], strides = [1, 1, 1]} : vector<8x32x128xf32> to vector<8x1x128xf32>
    %222 = vector.extract_strided_slice %89 {offsets = [22, 0, 0], sizes = [1, 32, 1], strides = [1, 1, 1]} : vector<32x32x1xf32> to vector<1x32x1xf32>
    %223 = vector.broadcast %221 : vector<8x1x128xf32> to vector<8x32x128xf32>
    %224 = vector.broadcast %222 : vector<1x32x1xf32> to vector<8x32x128xf32>
    %225 = arith.mulf %223, %224 : vector<8x32x128xf32>
    %226 = arith.addf %220, %225 : vector<8x32x128xf32>
    %227 = vector.extract_strided_slice %88 {offsets = [0, 23, 0], sizes = [8, 1, 128], strides = [1, 1, 1]} : vector<8x32x128xf32> to vector<8x1x128xf32>
    %228 = vector.extract_strided_slice %89 {offsets = [23, 0, 0], sizes = [1, 32, 1], strides = [1, 1, 1]} : vector<32x32x1xf32> to vector<1x32x1xf32>
    %229 = vector.broadcast %227 : vector<8x1x128xf32> to vector<8x32x128xf32>
    %230 = vector.broadcast %228 : vector<1x32x1xf32> to vector<8x32x128xf32>
    %231 = arith.mulf %229, %230 : vector<8x32x128xf32>
    %232 = arith.addf %226, %231 : vector<8x32x128xf32>
    %233 = vector.extract_strided_slice %88 {offsets = [0, 24, 0], sizes = [8, 1, 128], strides = [1, 1, 1]} : vector<8x32x128xf32> to vector<8x1x128xf32>
    %234 = vector.extract_strided_slice %89 {offsets = [24, 0, 0], sizes = [1, 32, 1], strides = [1, 1, 1]} : vector<32x32x1xf32> to vector<1x32x1xf32>
    %235 = vector.broadcast %233 : vector<8x1x128xf32> to vector<8x32x128xf32>
    %236 = vector.broadcast %234 : vector<1x32x1xf32> to vector<8x32x128xf32>
    %237 = arith.mulf %235, %236 : vector<8x32x128xf32>
    %238 = arith.addf %232, %237 : vector<8x32x128xf32>
    %239 = vector.extract_strided_slice %88 {offsets = [0, 25, 0], sizes = [8, 1, 128], strides = [1, 1, 1]} : vector<8x32x128xf32> to vector<8x1x128xf32>
    %240 = vector.extract_strided_slice %89 {offsets = [25, 0, 0], sizes = [1, 32, 1], strides = [1, 1, 1]} : vector<32x32x1xf32> to vector<1x32x1xf32>
    %241 = vector.broadcast %239 : vector<8x1x128xf32> to vector<8x32x128xf32>
    %242 = vector.broadcast %240 : vector<1x32x1xf32> to vector<8x32x128xf32>
    %243 = arith.mulf %241, %242 : vector<8x32x128xf32>
    %244 = arith.addf %238, %243 : vector<8x32x128xf32>
    %245 = vector.extract_strided_slice %88 {offsets = [0, 26, 0], sizes = [8, 1, 128], strides = [1, 1, 1]} : vector<8x32x128xf32> to vector<8x1x128xf32>
    %246 = vector.extract_strided_slice %89 {offsets = [26, 0, 0], sizes = [1, 32, 1], strides = [1, 1, 1]} : vector<32x32x1xf32> to vector<1x32x1xf32>
    %247 = vector.broadcast %245 : vector<8x1x128xf32> to vector<8x32x128xf32>
    %248 = vector.broadcast %246 : vector<1x32x1xf32> to vector<8x32x128xf32>
    %249 = arith.mulf %247, %248 : vector<8x32x128xf32>
    %250 = arith.addf %244, %249 : vector<8x32x128xf32>
    %251 = vector.extract_strided_slice %88 {offsets = [0, 27, 0], sizes = [8, 1, 128], strides = [1, 1, 1]} : vector<8x32x128xf32> to vector<8x1x128xf32>
    %252 = vector.extract_strided_slice %89 {offsets = [27, 0, 0], sizes = [1, 32, 1], strides = [1, 1, 1]} : vector<32x32x1xf32> to vector<1x32x1xf32>
    %253 = vector.broadcast %251 : vector<8x1x128xf32> to vector<8x32x128xf32>
    %254 = vector.broadcast %252 : vector<1x32x1xf32> to vector<8x32x128xf32>
    %255 = arith.mulf %253, %254 : vector<8x32x128xf32>
    %256 = arith.addf %250, %255 : vector<8x32x128xf32>
    %257 = vector.extract_strided_slice %88 {offsets = [0, 28, 0], sizes = [8, 1, 128], strides = [1, 1, 1]} : vector<8x32x128xf32> to vector<8x1x128xf32>
    %258 = vector.extract_strided_slice %89 {offsets = [28, 0, 0], sizes = [1, 32, 1], strides = [1, 1, 1]} : vector<32x32x1xf32> to vector<1x32x1xf32>
    %259 = vector.broadcast %257 : vector<8x1x128xf32> to vector<8x32x128xf32>
    %260 = vector.broadcast %258 : vector<1x32x1xf32> to vector<8x32x128xf32>
    %261 = arith.mulf %259, %260 : vector<8x32x128xf32>
    %262 = arith.addf %256, %261 : vector<8x32x128xf32>
    %263 = vector.extract_strided_slice %88 {offsets = [0, 29, 0], sizes = [8, 1, 128], strides = [1, 1, 1]} : vector<8x32x128xf32> to vector<8x1x128xf32>
    %264 = vector.extract_strided_slice %89 {offsets = [29, 0, 0], sizes = [1, 32, 1], strides = [1, 1, 1]} : vector<32x32x1xf32> to vector<1x32x1xf32>
    %265 = vector.broadcast %263 : vector<8x1x128xf32> to vector<8x32x128xf32>
    %266 = vector.broadcast %264 : vector<1x32x1xf32> to vector<8x32x128xf32>
    %267 = arith.mulf %265, %266 : vector<8x32x128xf32>
    %268 = arith.addf %262, %267 : vector<8x32x128xf32>
    %269 = vector.extract_strided_slice %88 {offsets = [0, 30, 0], sizes = [8, 1, 128], strides = [1, 1, 1]} : vector<8x32x128xf32> to vector<8x1x128xf32>
    %270 = vector.extract_strided_slice %89 {offsets = [30, 0, 0], sizes = [1, 32, 1], strides = [1, 1, 1]} : vector<32x32x1xf32> to vector<1x32x1xf32>
    %271 = vector.broadcast %269 : vector<8x1x128xf32> to vector<8x32x128xf32>
    %272 = vector.broadcast %270 : vector<1x32x1xf32> to vector<8x32x128xf32>
    %273 = arith.mulf %271, %272 : vector<8x32x128xf32>
    %274 = arith.addf %268, %273 : vector<8x32x128xf32>
    %275 = vector.extract_strided_slice %88 {offsets = [0, 31, 0], sizes = [8, 1, 128], strides = [1, 1, 1]} : vector<8x32x128xf32> to vector<8x1x128xf32>
    %276 = vector.extract_strided_slice %89 {offsets = [31, 0, 0], sizes = [1, 32, 1], strides = [1, 1, 1]} : vector<32x32x1xf32> to vector<1x32x1xf32>
    %277 = vector.broadcast %275 : vector<8x1x128xf32> to vector<8x32x128xf32>
    %278 = vector.broadcast %276 : vector<1x32x1xf32> to vector<8x32x128xf32>
    %279 = arith.mulf %277, %278 : vector<8x32x128xf32>
    %280 = arith.addf %274, %279 : vector<8x32x128xf32>
    %281 = arith.mulf %8, %280 : vector<8x32x128xf32>
    %282 = vector.extract_strided_slice %281 {offsets = [0, 0, 0], sizes = [1, 32, 128], strides = [1, 1, 1]} : vector<8x32x128xf32> to vector<1x32x128xf32>
    %283 = vector.broadcast %11 : vector<8x1x128xf32> to vector<8x32x128xf32>
    %284 = vector.broadcast %282 : vector<1x32x128xf32> to vector<8x32x128xf32>
    %285 = arith.mulf %283, %284 : vector<8x32x128xf32>
    %286 = vector.extract_strided_slice %281 {offsets = [1, 0, 0], sizes = [1, 32, 128], strides = [1, 1, 1]} : vector<8x32x128xf32> to vector<1x32x128xf32>
    %287 = vector.broadcast %12 : vector<8x1x128xf32> to vector<8x32x128xf32>
    %288 = vector.broadcast %286 : vector<1x32x128xf32> to vector<8x32x128xf32>
    %289 = arith.mulf %287, %288 : vector<8x32x128xf32>
    %290 = arith.addf %285, %289 : vector<8x32x128xf32>
    %291 = vector.extract_strided_slice %281 {offsets = [2, 0, 0], sizes = [1, 32, 128], strides = [1, 1, 1]} : vector<8x32x128xf32> to vector<1x32x128xf32>
    %292 = vector.broadcast %13 : vector<8x1x128xf32> to vector<8x32x128xf32>
    %293 = vector.broadcast %291 : vector<1x32x128xf32> to vector<8x32x128xf32>
    %294 = arith.mulf %292, %293 : vector<8x32x128xf32>
    %295 = arith.addf %290, %294 : vector<8x32x128xf32>
    %296 = vector.extract_strided_slice %281 {offsets = [3, 0, 0], sizes = [1, 32, 128], strides = [1, 1, 1]} : vector<8x32x128xf32> to vector<1x32x128xf32>
    %297 = vector.broadcast %14 : vector<8x1x128xf32> to vector<8x32x128xf32>
    %298 = vector.broadcast %296 : vector<1x32x128xf32> to vector<8x32x128xf32>
    %299 = arith.mulf %297, %298 : vector<8x32x128xf32>
    %300 = arith.addf %295, %299 : vector<8x32x128xf32>
    %301 = vector.extract_strided_slice %281 {offsets = [4, 0, 0], sizes = [1, 32, 128], strides = [1, 1, 1]} : vector<8x32x128xf32> to vector<1x32x128xf32>
    %302 = vector.broadcast %15 : vector<8x1x128xf32> to vector<8x32x128xf32>
    %303 = vector.broadcast %301 : vector<1x32x128xf32> to vector<8x32x128xf32>
    %304 = arith.mulf %302, %303 : vector<8x32x128xf32>
    %305 = arith.addf %300, %304 : vector<8x32x128xf32>
    %306 = vector.extract_strided_slice %281 {offsets = [5, 0, 0], sizes = [1, 32, 128], strides = [1, 1, 1]} : vector<8x32x128xf32> to vector<1x32x128xf32>
    %307 = vector.broadcast %16 : vector<8x1x128xf32> to vector<8x32x128xf32>
    %308 = vector.broadcast %306 : vector<1x32x128xf32> to vector<8x32x128xf32>
    %309 = arith.mulf %307, %308 : vector<8x32x128xf32>
    %310 = arith.addf %305, %309 : vector<8x32x128xf32>
    %311 = vector.extract_strided_slice %281 {offsets = [6, 0, 0], sizes = [1, 32, 128], strides = [1, 1, 1]} : vector<8x32x128xf32> to vector<1x32x128xf32>
    %312 = vector.broadcast %17 : vector<8x1x128xf32> to vector<8x32x128xf32>
    %313 = vector.broadcast %311 : vector<1x32x128xf32> to vector<8x32x128xf32>
    %314 = arith.mulf %312, %313 : vector<8x32x128xf32>
    %315 = arith.addf %310, %314 : vector<8x32x128xf32>
    %316 = vector.extract_strided_slice %281 {offsets = [7, 0, 0], sizes = [1, 32, 128], strides = [1, 1, 1]} : vector<8x32x128xf32> to vector<1x32x128xf32>
    %317 = vector.broadcast %18 : vector<8x1x128xf32> to vector<8x32x128xf32>
    %318 = vector.broadcast %316 : vector<1x32x128xf32> to vector<8x32x128xf32>
    %319 = arith.mulf %317, %318 : vector<8x32x128xf32>
    %320 = arith.addf %315, %319 : vector<8x32x128xf32>
    %321 = arith.mulf %8, %320 : vector<8x32x128xf32>
    %322 = arith.mulf %10, %280 : vector<8x32x128xf32>
    %323 = arith.addf %321, %322 : vector<8x32x128xf32>
    %cst_13 = arith.constant 0.000000e+00 : f32
    %324 = vector.broadcast %cst_13 : f32 to vector<8x32x128xf32>
    %325 = arith.maximumf %323, %324 : vector<8x32x128xf32>
    %cst_14 = arith.constant dense<0.000000e+00> : vector<32x128xf32>
    %326 = vector.multi_reduction <add>, %325, %cst_14 [0] : vector<8x32x128xf32> to vector<32x128xf32>
    %c0_15 = arith.constant 0 : index
    %c0_16 = arith.constant 0 : index
    %327 = vector.load %arg5[%c0_15, %c0_16] : memref<32x1xf32, #tpu.memory_space<vmem>>, vector<32x1xf32>
    %328 = vector.broadcast %327 : vector<32x1xf32> to vector<32x128xf32>
    %329 = arith.mulf %328, %326 : vector<32x128xf32>
    %cst_17 = arith.constant dense<0.000000e+00> : vector<128xf32>
    %330 = vector.multi_reduction <add>, %329, %cst_17 [0] : vector<32x128xf32> to vector<128xf32>
    %331 = vector.shape_cast %330 : vector<128xf32> to vector<1x128xf32>
    %c0_18 = arith.constant 0 : index
    %c0_19 = arith.constant 0 : index
    %332 = vector.load %arg6[%c0_18, %c0_19] : memref<1x128xf32, #tpu.memory_space<vmem>>, vector<1x128xf32>
    tpu.vector_store %arg6[%c0_18, %c0_19], %331 {strides = array<i32>} : memref<1x128xf32, #tpu.memory_space<vmem>>, vector<1x128xf32>,
    return
  }
  func.func @transform_0(%arg0: i32) -> (i32, i32, i32) {
    %c0_i32 = arith.constant 0 : i32
    %c0_i32_0 = arith.constant 0 : i32
    %c0_i32_1 = arith.constant 0 : i32
    return %c0_i32, %c0_i32_0, %arg0 : i32, i32, i32
  }
  func.func @transform_1(%arg0: i32) -> (i32, i32, i32) {
    %c0_i32 = arith.constant 0 : i32
    %c0_i32_0 = arith.constant 0 : i32
    %c0_i32_1 = arith.constant 0 : i32
    return %c0_i32, %c0_i32_0, %arg0 : i32, i32, i32
  }
  func.func @transform_2(%arg0: i32) -> (i32, i32, i32) {
    %c0_i32 = arith.constant 0 : i32
    %c0_i32_0 = arith.constant 0 : i32
    %c0_i32_1 = arith.constant 0 : i32
    %c0_i32_2 = arith.constant 0 : i32
    return %c0_i32, %c0_i32_0, %c0_i32_1 : i32, i32, i32
  }
  func.func @transform_3(%arg0: i32) -> (i32, i32, i32) {
    %c0_i32 = arith.constant 0 : i32
    %c0_i32_0 = arith.constant 0 : i32
    %c0_i32_1 = arith.constant 0 : i32
    %c0_i32_2 = arith.constant 0 : i32
    return %c0_i32, %c0_i32_0, %c0_i32_1 : i32, i32, i32
  }
  func.func @transform_4(%arg0: i32) -> (i32, i32) {
    %c0_i32 = arith.constant 0 : i32
    %c0_i32_0 = arith.constant 0 : i32
    %c0_i32_1 = arith.constant 0 : i32
    return %c0_i32, %c0_i32_0 : i32, i32
  }
  func.func @transform_5(%arg0: i32) -> (i32, i32) {
    %c0_i32 = arith.constant 0 : i32
    %c0_i32_0 = arith.constant 0 : i32
    return %c0_i32, %arg0 : i32, i32
  }
}

</mosaic_0001>

<llo_original>
// kernel: tpu_custom_call.1
$region0: #{tpu_custom_call.1}
  #allocation0 [shape = 'u32[]', space=smem, size = 0x4, offset = 0x4, fixed_abs, tag = 'smem constant byte address 0x4 - core index']
  #allocation1 [shape = 'u32[144,128]{1,0:T(1,128)}', space=vmem, size = 0x12000, scoped, tag = 'internal scratch']
  %s0 = inlined_call_operand.vmem [shape: f32[8,4,256], index: 0, kind: input, shape index: {}]
  %s1 = inlined_call_operand.vmem [shape: f32[8,8,256], index: 1, kind: input, shape index: {}]
  %s2 = inlined_call_operand.vmem [shape: f32[4,32,1], index: 2, kind: input, shape index: {}]
  %s3 = inlined_call_operand.vmem [shape: f32[32,32,1], index: 3, kind: input, shape index: {}]
  %s4 = inlined_call_operand.vmem [shape: f32[32,1], index: 4, kind: input, shape index: {}]
  %s5 = inlined_call_operand.hbm [shape: f32[1,256], index: 5, kind: output, shape index: {}]
  %s6 = sld [smem:[#allocation0]]
  $region132: #{tpu_custom_call.1} parent=0
    _
  %s8 = ssub.s32 1, %s6
  %s9 = scalar_select 0, %s8, %s6
  $region1: #{tpu_custom_call.1} parent=0
    #allocation2 [shape = 'u8[32768]{0}', space=vmem, size = 0x8000, scoped, tag = 'input window, operand 0']
    #allocation3 [shape = 'u8[65536]{0}', space=vmem, size = 0x10000, scoped, tag = 'input window, operand 1']
    #allocation4 [shape = 'u8[1024]{0}', space=vmem, size = 0x400, scoped, tag = 'output window, operand 0']
    #allocation5 [shape = 's32[2]{0}', space=sflag, size = 0x8, scoped, tag = 'scoped memory for tpu_custom_call.1']
    %10 = vsyncpa [#allocation5], 0
    %s11 = scalar_lea.sflag [#allocation5], 1
    %12 = vsyncpa %s11, 0
    loop: start=0, step=1, limit=4
    $region2: #{tpu_custom_call.1} parent=1 // loop_pre_header
      _
    $region3: #{tpu_custom_call.1} parent=1 // loop_header
      %s14 = sphi 0, %s18
      %p15 = scmp.ge.s32.totalorder %s14, 4
      %s24 = sphi 0, %s26
      %s27 = sphi 0, %s24
      %s28 = sphi 0, %s27
      %s44 = sphi 0, %s28
      %s50 = sphi 0, %s52
      %s53 = sphi 0, %s50
      %s54 = sphi 0, %s53
      %s70 = sphi 0, %s54
      %s74 = sphi 0, %s74
      %s76 = sphi 0, %s74
      %s77 = sphi 0, %s76
      %s91 = sphi 0, %s77
      %s95 = sphi 0, %s95
      %s97 = sphi 0, %s95
      %s98 = sphi 0, %s97
      %s112 = sphi 0, %s98
      %s116 = sphi 0, %s116
      %s118 = sphi 0, %s116
      %s119 = sphi 0, %s118
      %s133 = sphi 0, %s119
      %s139 = sphi 0, %s141
      %s142 = sphi 0, %s139
      %s143 = sphi 0, %s142
      %s159 = sphi 0, %s143
    $region4: #{tpu_custom_call.1} parent=1 // loop_header_branch
      %17 = sbr.rel (%p15) target = $region8
    $region5: #{tpu_custom_call.1} parent=1 // loop_body
      %s19 = ssub.s32 %s14, 1
      %s20 = ssub.s32 %s14, 2
      %s21 = sadd.s32 %s14, 1
      %s22 = ssub.s32 %s14, %s21
      %p23 = scmp.eq.s32.totalorder %s22, 0
      %s25 = sadd.s32 %s24, 1
      %s26 = scalar_select %p23, %s24, %s25
      %p29 = pneg %p23
      %p30 = scmp.eq.s32.totalorder %s14, 1
      %p31 = por %p29, %p30
      %p32 = scmp.ne.s32.totalorder %s24, %s27
      %p33 = scmp.eq.s32.totalorder %s14, 0
      %p34 = por %p32, %p33
      %p35 = scmp.ne.s32.totalorder %s24, %s27
      %p36 = scmp.eq.s32.totalorder %s19, 1
      %p37 = por %p35, %p36
      %p38 = scmp.ne.s32.totalorder %s27, %s28
      %p39 = scmp.eq.s32.totalorder %s19, 0
      %p40 = por %p38, %p39
      %p41 = scmp.ne.s32.totalorder %s27, %s28
      %p42 = scmp.eq.s32.totalorder %s20, 1
      %p43 = por %p41, %p42
      %p45 = scmp.ne.s32.totalorder %s28, %s44
      %p46 = scmp.eq.s32.totalorder %s20, 0
      %p47 = por %p45, %p46
      %s48 = ssub.s32 %s14, %s21
      %p49 = scmp.eq.s32.totalorder %s48, 0
      %s51 = sadd.s32 %s50, 1
      %s52 = scalar_select %p49, %s50, %s51
      %p55 = pneg %p49
      %p56 = scmp.eq.s32.totalorder %s14, 1
      %p57 = por %p55, %p56
      %p58 = scmp.ne.s32.totalorder %s50, %s53
      %p59 = scmp.eq.s32.totalorder %s14, 0
      %p60 = por %p58, %p59
      %p61 = scmp.ne.s32.totalorder %s50, %s53
      %p62 = scmp.eq.s32.totalorder %s19, 1
      %p63 = por %p61, %p62
      %p64 = scmp.ne.s32.totalorder %s53, %s54
      %p65 = scmp.eq.s32.totalorder %s19, 0
      %p66 = por %p64, %p65
      %p67 = scmp.ne.s32.totalorder %s53, %s54
      %p68 = scmp.eq.s32.totalorder %s20, 1
      %p69 = por %p67, %p68
      %p71 = scmp.ne.s32.totalorder %s54, %s70
      %p72 = scmp.eq.s32.totalorder %s20, 0
      %p73 = por %p71, %p72
      %s75 = sadd.s32 %s74, 1
      %p78 = scmp.eq.s32.totalorder %s14, 1
      %p79 = scmp.ne.s32.totalorder %s74, %s76
      %p80 = scmp.eq.s32.totalorder %s14, 0
      %p81 = por %p79, %p80
      %p82 = scmp.ne.s32.totalorder %s74, %s76
      %p83 = scmp.eq.s32.totalorder %s19, 1
      %p84 = por %p82, %p83
      %p85 = scmp.ne.s32.totalorder %s76, %s77
      %p86 = scmp.eq.s32.totalorder %s19, 0
      %p87 = por %p85, %p86
      %p88 = scmp.ne.s32.totalorder %s76, %s77
      %p89 = scmp.eq.s32.totalorder %s20, 1
      %p90 = por %p88, %p89
      %p92 = scmp.ne.s32.totalorder %s77, %s91
      %p93 = scmp.eq.s32.totalorder %s20, 0
      %p94 = por %p92, %p93
      %s96 = sadd.s32 %s95, 1
      %p99 = scmp.eq.s32.totalorder %s14, 1
      %p100 = scmp.ne.s32.totalorder %s95, %s97
      %p101 = scmp.eq.s32.totalorder %s14, 0
      %p102 = por %p100, %p101
      %p103 = scmp.ne.s32.totalorder %s95, %s97
      %p104 = scmp.eq.s32.totalorder %s19, 1
      %p105 = por %p103, %p104
      %p106 = scmp.ne.s32.totalorder %s97, %s98
      %p107 = scmp.eq.s32.totalorder %s19, 0
      %p108 = por %p106, %p107
      %p109 = scmp.ne.s32.totalorder %s97, %s98
      %p110 = scmp.eq.s32.totalorder %s20, 1
      %p111 = por %p109, %p110
      %p113 = scmp.ne.s32.totalorder %s98, %s112
      %p114 = scmp.eq.s32.totalorder %s20, 0
      %p115 = por %p113, %p114
      %s117 = sadd.s32 %s116, 1
      %p120 = scmp.eq.s32.totalorder %s14, 1
      %p121 = scmp.ne.s32.totalorder %s116, %s118
      %p122 = scmp.eq.s32.totalorder %s14, 0
      %p123 = por %p121, %p122
      %p124 = scmp.ne.s32.totalorder %s116, %s118
      %p125 = scmp.eq.s32.totalorder %s19, 1
      %p126 = por %p124, %p125
      %p127 = scmp.ne.s32.totalorder %s118, %s119
      %p128 = scmp.eq.s32.totalorder %s19, 0
      %p129 = por %p127, %p128
      %p130 = scmp.ne.s32.totalorder %s118, %s119
      %p131 = scmp.eq.s32.totalorder %s20, 1
      %p132 = por %p130, %p131
      %p134 = scmp.ne.s32.totalorder %s119, %s133
      %p135 = scmp.eq.s32.totalorder %s20, 0
      %p136 = por %p134, %p135
      %s137 = ssub.s32 %s14, %s21
      %p138 = scmp.eq.s32.totalorder %s137, 0
      %s140 = sadd.s32 %s139, 1
      %s141 = scalar_select %p138, %s139, %s140
      %p144 = pneg %p138
      %p145 = scmp.eq.s32.totalorder %s14, 1
      %p146 = por %p144, %p145
      %p147 = scmp.ne.s32.totalorder %s139, %s142
      %p148 = scmp.eq.s32.totalorder %s14, 0
      %p149 = por %p147, %p148
      %p150 = scmp.ne.s32.totalorder %s139, %s142
      %p151 = scmp.eq.s32.totalorder %s19, 1
      %p152 = por %p150, %p151
      %p153 = scmp.ne.s32.totalorder %s142, %s143
      %p154 = scmp.eq.s32.totalorder %s19, 0
      %p155 = por %p153, %p154
      %p156 = scmp.ne.s32.totalorder %s142, %s143
      %p157 = scmp.eq.s32.totalorder %s20, 1
      %p158 = por %p156, %p157
      %p160 = scmp.ne.s32.totalorder %s143, %s159
      %p161 = scmp.eq.s32.totalorder %s20, 0
      %p162 = por %p160, %p161
      %p163 = scmp.le.s32.totalorder 1, %s14
      %p164 = scmp.lt.s32.totalorder %s14, 3
      %p165 = pnand %p163, %p164
      %p166 = pneg %p165
      // Predicated region
      $region9: #{tpu_custom_call.1} parent=5 // pred_check
        _
      $region10: #{tpu_custom_call.1} parent=5 // pred_check_branch
        %168 = sbr.rel (%p165) target = $region12
      $region11: #{tpu_custom_call.1} parent=5 // pred_region
        %s169 = ssub.s32 %s14, 1
        // Predicated region
        $region13: #{tpu_custom_call.1} parent=11 // pred_check
          %p170 = pneg %p87
        $region14: #{tpu_custom_call.1} parent=11 // pred_check_branch
          %172 = sbr.rel (%p170) target = $region16
        $region15: #{tpu_custom_call.1} parent=11 // pred_region
          _
        $region16: #{tpu_custom_call.1} parent=11 // pred_fallthru
          _
        // Predicated region
        $region17: #{tpu_custom_call.1} parent=11 // pred_check
          %p173 = pneg %p108
        $region18: #{tpu_custom_call.1} parent=11 // pred_check_branch
          %175 = sbr.rel (%p173) target = $region20
        $region19: #{tpu_custom_call.1} parent=11 // pred_region
          _
        $region20: #{tpu_custom_call.1} parent=11 // pred_fallthru
          _
        // Predicated region
        $region21: #{tpu_custom_call.1} parent=11 // pred_check
          %p176 = pneg %p129
        $region22: #{tpu_custom_call.1} parent=11 // pred_check_branch
          %178 = sbr.rel (%p176) target = $region24
        $region23: #{tpu_custom_call.1} parent=11 // pred_region
          _
        $region24: #{tpu_custom_call.1} parent=11 // pred_fallthru
          _
      $region12: #{tpu_custom_call.1} parent=5 // pred_fallthru
        _
      %p179 = scmp.lt.s32.totalorder %s14, 2
      // Predicated region
      $region25: #{tpu_custom_call.1} parent=5 // pred_check
        %p180 = pneg %p179
      $region26: #{tpu_custom_call.1} parent=5 // pred_check_branch
        %182 = sbr.rel (%p180) target = $region28
      $region27: #{tpu_custom_call.1} parent=5 // pred_region
        // Predicated region
        $region29: #{tpu_custom_call.1} parent=27 // pred_check
          %p183 = pneg %p34
        $region30: #{tpu_custom_call.1} parent=27 // pred_check_branch
          %185 = sbr.rel (%p183) target = $region32
        $region31: #{tpu_custom_call.1} parent=27 // pred_region
          %s186 = sand.u32 %s24, 1
          %s187 = sand.u32 %s24, 1
          %s188 = smul.addr %s187, 32
          %s189 = scalar_lea.vmem [#allocation2], %s188
          %s190 = smul.addr %s14, 4
          %s191 = scalar_lea.vmem %s0, %s190
          // Predicated region
          $region33: #{tpu_custom_call.1} parent=31 // pred_check
            _
          $region34: #{tpu_custom_call.1} parent=31 // pred_check_branch
            %193 = sbr.rel (0) target = $region36
          $region35: #{tpu_custom_call.1} parent=31 // pred_region
            // Predicated region
            $region37: #{tpu_custom_call.1} parent=35 // pred_check
              _
            $region38: #{tpu_custom_call.1} parent=35 // pred_check_branch
              %195 = sbr.rel target = $region40
            $region39: #{tpu_custom_call.1} parent=35 // pred_region
              // Predicated region
              $region52: #{tpu_custom_call.1} parent=39 // pred_check
                _
              $region53: #{tpu_custom_call.1} parent=39 // pred_check_branch
                %225 = sbr.rel (0) target = $region55
              $region54: #{tpu_custom_call.1} parent=39 // pred_region
                loop: start=0, step=1, limit=1
                $region56: #{tpu_custom_call.1} parent=54 // loop_pre_header
                  _
                $region57: #{tpu_custom_call.1} parent=54 // loop_header
                  %s227 = sphi 0, %s231
                  %p228 = scmp.ge.s32.totalorder %s227, 1
                  %s232 = sphi %s191, %s191
                  %s233 = sphi %s189, %s189
                $region58: #{tpu_custom_call.1} parent=54 // loop_header_branch
                  %230 = sbr.rel (%p228) target = $region62
                $region59: #{tpu_custom_call.1} parent=54 // loop_body
                  _
                $region60: #{tpu_custom_call.1} parent=54 // loop_footer
                  %s231 = sadd.s32 1, %s227
                $region61: #{tpu_custom_call.1} parent=54 // loop_footer_branch
                  %226 = sbr.rel target = $region57
                $region62: #{tpu_custom_call.1} parent=54 // loop_exit
                  _
                %s235 = ssub.s32 16, 1
                loop: start=0, step=1, limit=1
                $region63: #{tpu_custom_call.1} parent=54 // loop_pre_header
                  _
                $region64: #{tpu_custom_call.1} parent=54 // loop_header
                  %s237 = sphi 0, %s241
                  %p238 = scmp.ge.s32.totalorder %s237, 1
                  %s242 = sphi %s191, %s191
                  %s243 = sphi %s189, %s189
                $region65: #{tpu_custom_call.1} parent=54 // loop_header_branch
                  %240 = sbr.rel (%p238) target = $region69
                $region66: #{tpu_custom_call.1} parent=54 // loop_body
                  %v244 = vld [vmem:[%s242] sm:%s235]
                  %245 = vst [vmem:[%s243] sm:%s235] %v244
                  %v246 = vld [vmem:[%s242 + $0x8] sm:%s235]
                  %247 = vst [vmem:[%s243 + $0x4] sm:%s235] %v246
                  %v248 = vld [vmem:[%s242 + $0x10] sm:%s235]
                  %249 = vst [vmem:[%s243 + $0x8] sm:%s235] %v248
                  %v250 = vld [vmem:[%s242 + $0x18] sm:%s235]
                  %251 = vst [vmem:[%s243 + $0xc] sm:%s235] %v250
                  %v252 = vld [vmem:[%s242 + $0x20] sm:%s235]
                  %253 = vst [vmem:[%s243 + $0x10] sm:%s235] %v252
                  %v254 = vld [vmem:[%s242 + $0x28] sm:%s235]
                  %255 = vst [vmem:[%s243 + $0x14] sm:%s235] %v254
                  %v256 = vld [vmem:[%s242 + $0x30] sm:%s235]
                  %257 = vst [vmem:[%s243 + $0x18] sm:%s235] %v256
                  %v258 = vld [vmem:[%s242 + $0x38] sm:%s235]
                  %259 = vst [vmem:[%s243 + $0x1c] sm:%s235] %v258
                $region67: #{tpu_custom_call.1} parent=54 // loop_footer
                  %s241 = sadd.s32 1, %s237
                $region68: #{tpu_custom_call.1} parent=54 // loop_footer_branch
                  %236 = sbr.rel target = $region64
                $region69: #{tpu_custom_call.1} parent=54 // loop_exit
                  _
              $region55: #{tpu_custom_call.1} parent=39 // pred_fallthru
                _
            $region40: #{tpu_custom_call.1} parent=35 // pred_fallthru
              _
            // Predicated region
            $region41: #{tpu_custom_call.1} parent=35 // pred_check
              _
            $region42: #{tpu_custom_call.1} parent=35 // pred_check_branch
              %197 = sbr.rel (0) target = $region44
            $region43: #{tpu_custom_call.1} parent=35 // pred_region
              %s199 = ssub.s32 16, 1
              loop: start=0, step=1, limit=1
              $region45: #{tpu_custom_call.1} parent=43 // loop_pre_header
                _
              $region46: #{tpu_custom_call.1} parent=43 // loop_header
                %s201 = sphi 0, %s205
                %p202 = scmp.ge.s32.totalorder %s201, 1
                %s206 = sphi %s191, %s191
                %s207 = sphi %s189, %s189
              $region47: #{tpu_custom_call.1} parent=43 // loop_header_branch
                %204 = sbr.rel (%p202) target = $region51
              $region48: #{tpu_custom_call.1} parent=43 // loop_body
                %v208 = vld [vmem:[%s206] sm:%s199]
                %209 = vst [vmem:[%s207] sm:%s199] %v208
                %v210 = vld [vmem:[%s206 + $0x8] sm:%s199]
                %211 = vst [vmem:[%s207 + $0x4] sm:%s199] %v210
                %v212 = vld [vmem:[%s206 + $0x10] sm:%s199]
                %213 = vst [vmem:[%s207 + $0x8] sm:%s199] %v212
                %v214 = vld [vmem:[%s206 + $0x18] sm:%s199]
                %215 = vst [vmem:[%s207 + $0xc] sm:%s199] %v214
                %v216 = vld [vmem:[%s206 + $0x20] sm:%s199]
                %217 = vst [vmem:[%s207 + $0x10] sm:%s199] %v216
                %v218 = vld [vmem:[%s206 + $0x28] sm:%s199]
                %219 = vst [vmem:[%s207 + $0x14] sm:%s199] %v218
                %v220 = vld [vmem:[%s206 + $0x30] sm:%s199]
                %221 = vst [vmem:[%s207 + $0x18] sm:%s199] %v220
                %v222 = vld [vmem:[%s206 + $0x38] sm:%s199]
                %223 = vst [vmem:[%s207 + $0x1c] sm:%s199] %v222
              $region49: #{tpu_custom_call.1} parent=43 // loop_footer
                %s205 = sadd.s32 1, %s201
              $region50: #{tpu_custom_call.1} parent=43 // loop_footer_branch
                %200 = sbr.rel target = $region46
              $region51: #{tpu_custom_call.1} parent=43 // loop_exit
                _
            $region44: #{tpu_custom_call.1} parent=35 // pred_fallthru
              _
          $region36: #{tpu_custom_call.1} parent=31 // pred_fallthru
            _
          %260 = vnop
        $region32: #{tpu_custom_call.1} parent=27 // pred_fallthru
          _
        // Predicated region
        $region70: #{tpu_custom_call.1} parent=27 // pred_check
          %p261 = pneg %p60
        $region71: #{tpu_custom_call.1} parent=27 // pred_check_branch
          %263 = sbr.rel (%p261) target = $region73
        $region72: #{tpu_custom_call.1} parent=27 // pred_region
          %s264 = sand.u32 %s50, 1
          %s265 = sand.u32 %s50, 1
          %s266 = smul.addr %s265, 64
          %s267 = scalar_lea.vmem [#allocation3], %s266
          %s268 = smul.addr %s14, 8
          %s269 = scalar_lea.vmem %s1, %s268
          // Predicated region
          $region74: #{tpu_custom_call.1} parent=72 // pred_check
            _
          $region75: #{tpu_custom_call.1} parent=72 // pred_check_branch
            %271 = sbr.rel (0) target = $region77
          $region76: #{tpu_custom_call.1} parent=72 // pred_region
            // Predicated region
            $region78: #{tpu_custom_call.1} parent=76 // pred_check
              _
            $region79: #{tpu_custom_call.1} parent=76 // pred_check_branch
              %273 = sbr.rel (0) target = $region81
            $region80: #{tpu_custom_call.1} parent=76 // pred_region
              // Predicated region
              $region93: #{tpu_custom_call.1} parent=80 // pred_check
                _
              $region94: #{tpu_custom_call.1} parent=80 // pred_check_branch
                %303 = sbr.rel (0) target = $region96
              $region95: #{tpu_custom_call.1} parent=80 // pred_region
                loop: start=0, step=1, limit=1
                $region97: #{tpu_custom_call.1} parent=95 // loop_pre_header
                  _
                $region98: #{tpu_custom_call.1} parent=95 // loop_header
                  %s305 = sphi 0, %s309
                  %p306 = scmp.ge.s32.totalorder %s305, 1
                  %s310 = sphi %s269, %s269
                  %s311 = sphi %s267, %s267
                $region99: #{tpu_custom_call.1} parent=95 // loop_header_branch
                  %308 = sbr.rel (%p306) target = $region103
                $region100: #{tpu_custom_call.1} parent=95 // loop_body
                  %v312 = vld [vmem:[%s310] sm:$0xff]
                  %313 = vst [vmem:[%s311] sm:$0xff] %v312
                  %v314 = vld [vmem:[%s310 + $0x10] sm:$0xff]
                  %315 = vst [vmem:[%s311 + $0x8] sm:$0xff] %v314
                  %v316 = vld [vmem:[%s310 + $0x20] sm:$0xff]
                  %317 = vst [vmem:[%s311 + $0x10] sm:$0xff] %v316
                  %v318 = vld [vmem:[%s310 + $0x30] sm:$0xff]
                  %319 = vst [vmem:[%s311 + $0x18] sm:$0xff] %v318
                  %v320 = vld [vmem:[%s310 + $0x40] sm:$0xff]
                  %321 = vst [vmem:[%s311 + $0x20] sm:$0xff] %v320
                  %v322 = vld [vmem:[%s310 + $0x50] sm:$0xff]
                  %323 = vst [vmem:[%s311 + $0x28] sm:$0xff] %v322
                  %v324 = vld [vmem:[%s310 + $0x60] sm:$0xff]
                  %325 = vst [vmem:[%s311 + $0x30] sm:$0xff] %v324
                  %v326 = vld [vmem:[%s310 + $0x70] sm:$0xff]
                  %327 = vst [vmem:[%s311 + $0x38] sm:$0xff] %v326
                $region101: #{tpu_custom_call.1} parent=95 // loop_footer
                  %s309 = sadd.s32 1, %s305
                $region102: #{tpu_custom_call.1} parent=95 // loop_footer_branch
                  %304 = sbr.rel target = $region98
                $region103: #{tpu_custom_call.1} parent=95 // loop_exit
                  _
              $region96: #{tpu_custom_call.1} parent=80 // pred_fallthru
                _
              // Predicated region
              $region104: #{tpu_custom_call.1} parent=80 // pred_check
                _
              $region105: #{tpu_custom_call.1} parent=80 // pred_check_branch
                %329 = sbr.rel target = $region107
              $region106: #{tpu_custom_call.1} parent=80 // pred_region
                _
              $region107: #{tpu_custom_call.1} parent=80 // pred_fallthru
                _
            $region81: #{tpu_custom_call.1} parent=76 // pred_fallthru
              _
            // Predicated region
            $region82: #{tpu_custom_call.1} parent=76 // pred_check
              _
            $region83: #{tpu_custom_call.1} parent=76 // pred_check_branch
              %275 = sbr.rel target = $region85
            $region84: #{tpu_custom_call.1} parent=76 // pred_region
              %s277 = ssub.s32 256, 1
              loop: start=0, step=1, limit=1
              $region86: #{tpu_custom_call.1} parent=84 // loop_pre_header
                _
              $region87: #{tpu_custom_call.1} parent=84 // loop_header
                %s279 = sphi 0, %s283
                %p280 = scmp.ge.s32.totalorder %s279, 1
                %s284 = sphi %s269, %s269
                %s285 = sphi %s267, %s267
              $region88: #{tpu_custom_call.1} parent=84 // loop_header_branch
                %282 = sbr.rel (%p280) target = $region92
              $region89: #{tpu_custom_call.1} parent=84 // loop_body
                %v286 = vld [vmem:[%s284] sm:%s277]
                %287 = vst [vmem:[%s285] sm:%s277] %v286
                %v288 = vld [vmem:[%s284 + $0x10] sm:%s277]
                %289 = vst [vmem:[%s285 + $0x8] sm:%s277] %v288
                %v290 = vld [vmem:[%s284 + $0x20] sm:%s277]
                %291 = vst [vmem:[%s285 + $0x10] sm:%s277] %v290
                %v292 = vld [vmem:[%s284 + $0x30] sm:%s277]
                %293 = vst [vmem:[%s285 + $0x18] sm:%s277] %v292
                %v294 = vld [vmem:[%s284 + $0x40] sm:%s277]
                %295 = vst [vmem:[%s285 + $0x20] sm:%s277] %v294
                %v296 = vld [vmem:[%s284 + $0x50] sm:%s277]
                %297 = vst [vmem:[%s285 + $0x28] sm:%s277] %v296
                %v298 = vld [vmem:[%s284 + $0x60] sm:%s277]
                %299 = vst [vmem:[%s285 + $0x30] sm:%s277] %v298
                %v300 = vld [vmem:[%s284 + $0x70] sm:%s277]
                %301 = vst [vmem:[%s285 + $0x38] sm:%s277] %v300
              $region90: #{tpu_custom_call.1} parent=84 // loop_footer
                %s283 = sadd.s32 1, %s279
              $region91: #{tpu_custom_call.1} parent=84 // loop_footer_branch
                %278 = sbr.rel target = $region87
              $region92: #{tpu_custom_call.1} parent=84 // loop_exit
                _
            $region85: #{tpu_custom_call.1} parent=76 // pred_fallthru
              _
          $region77: #{tpu_custom_call.1} parent=72 // pred_fallthru
            _
          %330 = vnop
        $region73: #{tpu_custom_call.1} parent=27 // pred_fallthru
          _
      $region28: #{tpu_custom_call.1} parent=5 // pred_fallthru
        _
      %p331 = scmp.le.s32.totalorder 1, %s14
      %p332 = scmp.lt.s32.totalorder %s14, 3
      %p333 = pnand %p331, %p332
      %p334 = pneg %p333
      // Predicated region
      $region108: #{tpu_custom_call.1} parent=5 // pred_check
        _
      $region109: #{tpu_custom_call.1} parent=5 // pred_check_branch
        %336 = sbr.rel (%p333) target = $region111
      $region110: #{tpu_custom_call.1} parent=5 // pred_region
        %s337 = ssub.s32 %s14, 1
        %s338 = sand.u32 %s27, 1
        %s339 = sand.u32 %s27, 1
        %s340 = smul.addr %s339, 32
        %s341 = scalar_lea.vmem [#allocation2], %s340
        // Predicated region
        $region112: #{tpu_custom_call.1} parent=110 // pred_check
          %p342 = pneg %p40
        $region113: #{tpu_custom_call.1} parent=110 // pred_check_branch
          %344 = sbr.rel (%p342) target = $region115
        $region114: #{tpu_custom_call.1} parent=110 // pred_region
          _
        $region115: #{tpu_custom_call.1} parent=110 // pred_fallthru
          _
        %s345 = sand.u32 %s53, 1
        %s346 = sand.u32 %s53, 1
        %s347 = smul.addr %s346, 64
        %s348 = scalar_lea.vmem [#allocation3], %s347
        // Predicated region
        $region116: #{tpu_custom_call.1} parent=110 // pred_check
          %p349 = pneg %p66
        $region117: #{tpu_custom_call.1} parent=110 // pred_check_branch
          %351 = sbr.rel (%p349) target = $region119
        $region118: #{tpu_custom_call.1} parent=110 // pred_region
          _
        $region119: #{tpu_custom_call.1} parent=110 // pred_fallthru
          _
        %s352 = sand.u32 %s27, 1
        %s353 = sand.u32 %s27, 1
        %s354 = smul.addr %s353, 32
        %s355 = scalar_lea.vmem [#allocation2], %s354
        %p356 = pneg %p40
        %p357 = pneg %p37
        %s358 = sand.u32 %s53, 1
        %s359 = sand.u32 %s53, 1
        %s360 = smul.addr %s359, 64
        %s361 = scalar_lea.vmem [#allocation3], %s360
        %p362 = pneg %p66
        %p363 = pneg %p63
        %p364 = pneg %p87
        %p365 = pneg %p84
        %p366 = pneg %p108
        %p367 = pneg %p105
        %p368 = pneg %p129
        %p369 = pneg %p126
        %p370 = pneg %p155
        %p371 = pneg %p152
        %s372 = sand.u32 %s142, 1
        %s373 = scalar_lea.sflag [#allocation5], %s372
        %s374 = sand.u32 %s142, 1
        %s375 = scalar_lea.vmem [#allocation4], %s374
        %v376 = vld [vmem:[%s348] sm:$0xff]
        %v377 = vld [vmem:[%s348 + $0x8] sm:$0xff]
        %v378 = vld [vmem:[%s348 + $0x10] sm:$0xff]
        %v379 = vld [vmem:[%s348 + $0x18] sm:$0xff]
        %v380 = vld [vmem:[%s348 + $0x20] sm:$0xff]
        %v381 = vld [vmem:[%s348 + $0x28] sm:$0xff]
        %v382 = vld [vmem:[%s348 + $0x30] sm:$0xff]
        %v383 = vld [vmem:[%s348 + $0x38] sm:$0xff]
        %v384 = vrot.slane %v376, 4
        %v385 = vadd.f32 %v376, %v384
        %v386 = vrot.slane %v385, 2
        %v387 = vadd.f32 %v385, %v386
        %v388 = vrot.slane %v387, 1
        %v389 = vadd.f32 %v387, %v388
        %v390 = vrot.slane %v377, 4
        %v391 = vadd.f32 %v377, %v390
        %v392 = vrot.slane %v391, 2
        %v393 = vadd.f32 %v391, %v392
        %v394 = vrot.slane %v393, 1
        %v395 = vadd.f32 %v393, %v394
        %v396 = vrot.slane %v378, 4
        %v397 = vadd.f32 %v378, %v396
        %v398 = vrot.slane %v397, 2
        %v399 = vadd.f32 %v397, %v398
        %v400 = vrot.slane %v399, 1
        %v401 = vadd.f32 %v399, %v400
        %v402 = vrot.slane %v379, 4
        %v403 = vadd.f32 %v379, %v402
        %v404 = vrot.slane %v403, 2
        %v405 = vadd.f32 %v403, %v404
        %v406 = vrot.slane %v405, 1
        %v407 = vadd.f32 %v405, %v406
        %v408 = vrot.slane %v380, 4
        %v409 = vadd.f32 %v380, %v408
        %v410 = vrot.slane %v409, 2
        %v411 = vadd.f32 %v409, %v410
        %v412 = vrot.slane %v411, 1
        %v413 = vadd.f32 %v411, %v412
        %v414 = vrot.slane %v381, 4
        %v415 = vadd.f32 %v381, %v414
        %v416 = vrot.slane %v415, 2
        %v417 = vadd.f32 %v415, %v416
        %v418 = vrot.slane %v417, 1
        %v419 = vadd.f32 %v417, %v418
        %v420 = vrot.slane %v382, 4
        %v421 = vadd.f32 %v382, %v420
        %v422 = vrot.slane %v421, 2
        %v423 = vadd.f32 %v421, %v422
        %v424 = vrot.slane %v423, 1
        %v425 = vadd.f32 %v423, %v424
        %v426 = vrot.slane %v383, 4
        %v427 = vadd.f32 %v383, %v426
        %v428 = vrot.slane %v427, 2
        %v429 = vadd.f32 %v427, %v428
        %v430 = vrot.slane %v429, 1
        %v431 = vadd.f32 %v429, %v430
        %v432 = vadd.f32 %v389, 1.0
        %v433 = vadd.f32 %v395, 1.0
        %v434 = vadd.f32 %v401, 1.0
        %v435 = vadd.f32 %v407, 1.0
        %v436 = vadd.f32 %v413, 1.0
        %v437 = vadd.f32 %v419, 1.0
        %v438 = vadd.f32 %v425, 1.0
        %v439 = vadd.f32 %v431, 1.0
        %v440 = vrsqrt.pop %v432
        %v441 = vrsqrt.pop %v433
        %v442 = vrsqrt.pop %v434
        %v443 = vrsqrt.pop %v435
        %v444 = vrsqrt.pop %v436
        %v445 = vrsqrt.pop %v437
        %v446 = vrsqrt.pop %v438
        %v447 = vrsqrt.pop %v439
        %v448 = vmul.f32 %v440, %v440
        %v449 = vmul.f32 %v441, %v441
        %v450 = vmul.f32 %v442, %v442
        %v451 = vmul.f32 %v443, %v443
        %v452 = vmul.f32 %v444, %v444
        %v453 = vmul.f32 %v445, %v445
        %v454 = vmul.f32 %v446, %v446
        %v455 = vmul.f32 %v447, %v447
        %v456 = vld [vmem:[%s341] sm:$0xf]
        %v457 = vld [vmem:[%s341 + $0x4] sm:$0xf]
        %v458 = vld [vmem:[%s341 + $0x8] sm:$0xf]
        %v459 = vld [vmem:[%s341 + $0xc] sm:$0xf]
        %v460 = vld [vmem:[%s341 + $0x10] sm:$0xf]
        %v461 = vld [vmem:[%s341 + $0x14] sm:$0xf]
        %v462 = vld [vmem:[%s341 + $0x18] sm:$0xf]
        %v463 = vld [vmem:[%s341 + $0x1c] sm:$0xf]
        %v464 = vld [vmem:[%s2] sm:$0xff]
        %v465 = vld [vmem:[%s2 + $0x8] sm:$0xff]
        %v466 = vld [vmem:[%s2 + $0x10] sm:$0xff]
        %v467 = vld [vmem:[%s2 + $0x18] sm:$0xff]
        %v468 = vld [vmem:[%s2 + $0x20] sm:$0xff]
        %v469 = vld [vmem:[%s2 + $0x28] sm:$0xff]
        %v470 = vld [vmem:[%s2 + $0x30] sm:$0xff]
        %v471 = vld [vmem:[%s2 + $0x38] sm:$0xff]
        %v472 = vld [vmem:[%s2 + $0x40] sm:$0xff]
        %v473 = vld [vmem:[%s2 + $0x48] sm:$0xff]
        %v474 = vld [vmem:[%s2 + $0x50] sm:$0xff]
        %v475 = vld [vmem:[%s2 + $0x58] sm:$0xff]
        %v476 = vld [vmem:[%s2 + $0x60] sm:$0xff]
        %v477 = vld [vmem:[%s2 + $0x68] sm:$0xff]
        %v478 = vld [vmem:[%s2 + $0x70] sm:$0xff]
        %v479 = vld [vmem:[%s2 + $0x78] sm:$0xff]
        %v480 = vlaneseq
        %v481 = vshrl.u32 %v480, 7
        %v482 = vsub.s32 0, %v481
        %v483 = vrot.slane %v456, %v482
        %v484 = vlaneseq
        %v485 = vshrl.u32 %v484, 7
        %v486 = vsub.s32 0, %v485
        %v487 = vrot.slane %v457, %v486
        %v488 = vlaneseq
        %v489 = vshrl.u32 %v488, 7
        %v490 = vsub.s32 0, %v489
        %v491 = vrot.slane %v458, %v490
        %v492 = vlaneseq
        %v493 = vshrl.u32 %v492, 7
        %v494 = vsub.s32 0, %v493
        %v495 = vrot.slane %v459, %v494
        %v496 = vlaneseq
        %v497 = vshrl.u32 %v496, 7
        %v498 = vsub.s32 0, %v497
        %v499 = vrot.slane %v460, %v498
        %v500 = vlaneseq
        %v501 = vshrl.u32 %v500, 7
        %v502 = vsub.s32 0, %v501
        %v503 = vrot.slane %v461, %v502
        %v504 = vlaneseq
        %v505 = vshrl.u32 %v504, 7
        %v506 = vsub.s32 0, %v505
        %v507 = vrot.slane %v462, %v506
        %v508 = vlaneseq
        %v509 = vshrl.u32 %v508, 7
        %v510 = vsub.s32 0, %v509
        %v511 = vrot.slane %v463, %v510
        %513 = vset.pattern.permute.xlu0 0
        %514 = vperm.xlu0 %513, %v464
        %v515 = vpop.permute.xlu0 %514
        %518 = vset.pattern.permute.xlu0 0
        %519 = vperm.xlu0 %518, %v465
        %v520 = vpop.permute.xlu0 %519
        %523 = vset.pattern.permute.xlu0 0
        %524 = vperm.xlu0 %523, %v466
        %v525 = vpop.permute.xlu0 %524
        %528 = vset.pattern.permute.xlu0 0
        %529 = vperm.xlu0 %528, %v467
        %v530 = vpop.permute.xlu0 %529
        %v532 = vmul.f32 %v483, %v515
        %v533 = vmul.f32 %v483, %v520
        %v534 = vmul.f32 %v483, %v525
        %v535 = vmul.f32 %v483, %v530
        %v536 = vmul.f32 %v487, %v515
        %v537 = vmul.f32 %v487, %v520
        %v538 = vmul.f32 %v487, %v525
        %v539 = vmul.f32 %v487, %v530
        %v540 = vmul.f32 %v491, %v515
        %v541 = vmul.f32 %v491, %v520
        %v542 = vmul.f32 %v491, %v525
        %v543 = vmul.f32 %v491, %v530
        %v544 = vmul.f32 %v495, %v515
        %v545 = vmul.f32 %v495, %v520
        %v546 = vmul.f32 %v495, %v525
        %v547 = vmul.f32 %v495, %v530
        %v548 = vmul.f32 %v499, %v515
        %v549 = vmul.f32 %v499, %v520
        %v550 = vmul.f32 %v499, %v525
        %v551 = vmul.f32 %v499, %v530
        %v552 = vmul.f32 %v503, %v515
        %v553 = vmul.f32 %v503, %v520
        %v554 = vmul.f32 %v503, %v525
        %v555 = vmul.f32 %v503, %v530
        %v556 = vmul.f32 %v507, %v515
        %v557 = vmul.f32 %v507, %v520
        %v558 = vmul.f32 %v507, %v525
        %v559 = vmul.f32 %v507, %v530
        %v560 = vmul.f32 %v511, %v515
        %v561 = vmul.f32 %v511, %v520
        %v562 = vmul.f32 %v511, %v525
        %v563 = vmul.f32 %v511, %v530
        %v564 = vlaneseq
        %v565 = vshrl.u32 %v564, 7
        %v566 = vsub.s32 1, %v565
        %v567 = vrot.slane %v456, %v566
        %v568 = vlaneseq
        %v569 = vshrl.u32 %v568, 7
        %v570 = vsub.s32 1, %v569
        %v571 = vrot.slane %v457, %v570
        %v572 = vlaneseq
        %v573 = vshrl.u32 %v572, 7
        %v574 = vsub.s32 1, %v573
        %v575 = vrot.slane %v458, %v574
        %v576 = vlaneseq
        %v577 = vshrl.u32 %v576, 7
        %v578 = vsub.s32 1, %v577
        %v579 = vrot.slane %v459, %v578
        %v580 = vlaneseq
        %v581 = vshrl.u32 %v580, 7
        %v582 = vsub.s32 1, %v581
        %v583 = vrot.slane %v460, %v582
        %v584 = vlaneseq
        %v585 = vshrl.u32 %v584, 7
        %v586 = vsub.s32 1, %v585
        %v587 = vrot.slane %v461, %v586
        %v588 = vlaneseq
        %v589 = vshrl.u32 %v588, 7
        %v590 = vsub.s32 1, %v589
        %v591 = vrot.slane %v462, %v590
        %v592 = vlaneseq
        %v593 = vshrl.u32 %v592, 7
        %v594 = vsub.s32 1, %v593
        %v595 = vrot.slane %v463, %v594
        %597 = vset.pattern.permute.xlu0 0
        %598 = vperm.xlu0 %597, %v468
        %v599 = vpop.permute.xlu0 %598
        %602 = vset.pattern.permute.xlu0 0
        %603 = vperm.xlu0 %602, %v469
        %v604 = vpop.permute.xlu0 %603
        %607 = vset.pattern.permute.xlu0 0
        %608 = vperm.xlu0 %607, %v470
        %v609 = vpop.permute.xlu0 %608
        %612 = vset.pattern.permute.xlu0 0
        %613 = vperm.xlu0 %612, %v471
        %v614 = vpop.permute.xlu0 %613
        %v616 = vmul.f32 %v567, %v599
        %v617 = vmul.f32 %v567, %v604
        %v618 = vmul.f32 %v567, %v609
        %v619 = vmul.f32 %v567, %v614
        %v620 = vmul.f32 %v571, %v599
        %v621 = vmul.f32 %v571, %v604
        %v622 = vmul.f32 %v571, %v609
        %v623 = vmul.f32 %v571, %v614
        %v624 = vmul.f32 %v575, %v599
        %v625 = vmul.f32 %v575, %v604
        %v626 = vmul.f32 %v575, %v609
        %v627 = vmul.f32 %v575, %v614
        %v628 = vmul.f32 %v579, %v599
        %v629 = vmul.f32 %v579, %v604
        %v630 = vmul.f32 %v579, %v609
        %v631 = vmul.f32 %v579, %v614
        %v632 = vmul.f32 %v583, %v599
        %v633 = vmul.f32 %v583, %v604
        %v634 = vmul.f32 %v583, %v609
        %v635 = vmul.f32 %v583, %v614
        %v636 = vmul.f32 %v587, %v599
        %v637 = vmul.f32 %v587, %v604
        %v638 = vmul.f32 %v587, %v609
        %v639 = vmul.f32 %v587, %v614
        %v640 = vmul.f32 %v591, %v599
        %v641 = vmul.f32 %v591, %v604
        %v642 = vmul.f32 %v591, %v609
        %v643 = vmul.f32 %v591, %v614
        %v644 = vmul.f32 %v595, %v599
        %v645 = vmul.f32 %v595, %v604
        %v646 = vmul.f32 %v595, %v609
        %v647 = vmul.f32 %v595, %v614
        %v648 = vadd.f32 %v532, %v616
        %v649 = vadd.f32 %v533, %v617
        %v650 = vadd.f32 %v534, %v618
        %v651 = vadd.f32 %v535, %v619
        %v652 = vadd.f32 %v536, %v620
        %v653 = vadd.f32 %v537, %v621
        %v654 = vadd.f32 %v538, %v622
        %v655 = vadd.f32 %v539, %v623
        %v656 = vadd.f32 %v540, %v624
        %v657 = vadd.f32 %v541, %v625
        %v658 = vadd.f32 %v542, %v626
        %v659 = vadd.f32 %v543, %v627
        %v660 = vadd.f32 %v544, %v628
        %v661 = vadd.f32 %v545, %v629
        %v662 = vadd.f32 %v546, %v630
        %v663 = vadd.f32 %v547, %v631
        %v664 = vadd.f32 %v548, %v632
        %v665 = vadd.f32 %v549, %v633
        %v666 = vadd.f32 %v550, %v634
        %v667 = vadd.f32 %v551, %v635
        %v668 = vadd.f32 %v552, %v636
        %v669 = vadd.f32 %v553, %v637
        %v670 = vadd.f32 %v554, %v638
        %v671 = vadd.f32 %v555, %v639
        %v672 = vadd.f32 %v556, %v640
        %v673 = vadd.f32 %v557, %v641
        %v674 = vadd.f32 %v558, %v642
        %v675 = vadd.f32 %v559, %v643
        %v676 = vadd.f32 %v560, %v644
        %v677 = vadd.f32 %v561, %v645
        %v678 = vadd.f32 %v562, %v646
        %v679 = vadd.f32 %v563, %v647
        %v680 = vlaneseq
        %v681 = vshrl.u32 %v680, 7
        %v682 = vsub.s32 2, %v681
        %v683 = vrot.slane %v456, %v682
        %v684 = vlaneseq
        %v685 = vshrl.u32 %v684, 7
        %v686 = vsub.s32 2, %v685
        %v687 = vrot.slane %v457, %v686
        %v688 = vlaneseq
        %v689 = vshrl.u32 %v688, 7
        %v690 = vsub.s32 2, %v689
        %v691 = vrot.slane %v458, %v690
        %v692 = vlaneseq
        %v693 = vshrl.u32 %v692, 7
        %v694 = vsub.s32 2, %v693
        %v695 = vrot.slane %v459, %v694
        %v696 = vlaneseq
        %v697 = vshrl.u32 %v696, 7
        %v698 = vsub.s32 2, %v697
        %v699 = vrot.slane %v460, %v698
        %v700 = vlaneseq
        %v701 = vshrl.u32 %v700, 7
        %v702 = vsub.s32 2, %v701
        %v703 = vrot.slane %v461, %v702
        %v704 = vlaneseq
        %v705 = vshrl.u32 %v704, 7
        %v706 = vsub.s32 2, %v705
        %v707 = vrot.slane %v462, %v706
        %v708 = vlaneseq
        %v709 = vshrl.u32 %v708, 7
        %v710 = vsub.s32 2, %v709
        %v711 = vrot.slane %v463, %v710
        %713 = vset.pattern.permute.xlu0 0
        %714 = vperm.xlu0 %713, %v472
        %v715 = vpop.permute.xlu0 %714
        %718 = vset.pattern.permute.xlu0 0
        %719 = vperm.xlu0 %718, %v473
        %v720 = vpop.permute.xlu0 %719
        %723 = vset.pattern.permute.xlu0 0
        %724 = vperm.xlu0 %723, %v474
        %v725 = vpop.permute.xlu0 %724
        %728 = vset.pattern.permute.xlu0 0
        %729 = vperm.xlu0 %728, %v475
        %v730 = vpop.permute.xlu0 %729
        %v732 = vmul.f32 %v683, %v715
        %v733 = vmul.f32 %v683, %v720
        %v734 = vmul.f32 %v683, %v725
        %v735 = vmul.f32 %v683, %v730
        %v736 = vmul.f32 %v687, %v715
        %v737 = vmul.f32 %v687, %v720
        %v738 = vmul.f32 %v687, %v725
        %v739 = vmul.f32 %v687, %v730
        %v740 = vmul.f32 %v691, %v715
        %v741 = vmul.f32 %v691, %v720
        %v742 = vmul.f32 %v691, %v725
        %v743 = vmul.f32 %v691, %v730
        %v744 = vmul.f32 %v695, %v715
        %v745 = vmul.f32 %v695, %v720
        %v746 = vmul.f32 %v695, %v725
        %v747 = vmul.f32 %v695, %v730
        %v748 = vmul.f32 %v699, %v715
        %v749 = vmul.f32 %v699, %v720
        %v750 = vmul.f32 %v699, %v725
        %v751 = vmul.f32 %v699, %v730
        %v752 = vmul.f32 %v703, %v715
        %v753 = vmul.f32 %v703, %v720
        %v754 = vmul.f32 %v703, %v725
        %v755 = vmul.f32 %v703, %v730
        %v756 = vmul.f32 %v707, %v715
        %v757 = vmul.f32 %v707, %v720
        %v758 = vmul.f32 %v707, %v725
        %v759 = vmul.f32 %v707, %v730
        %v760 = vmul.f32 %v711, %v715
        %v761 = vmul.f32 %v711, %v720
        %v762 = vmul.f32 %v711, %v725
        %v763 = vmul.f32 %v711, %v730
        %v764 = vadd.f32 %v648, %v732
        %v765 = vadd.f32 %v649, %v733
        %v766 = vadd.f32 %v650, %v734
        %v767 = vadd.f32 %v651, %v735
        %v768 = vadd.f32 %v652, %v736
        %v769 = vadd.f32 %v653, %v737
        %v770 = vadd.f32 %v654, %v738
        %v771 = vadd.f32 %v655, %v739
        %v772 = vadd.f32 %v656, %v740
        %v773 = vadd.f32 %v657, %v741
        %v774 = vadd.f32 %v658, %v742
        %v775 = vadd.f32 %v659, %v743
        %v776 = vadd.f32 %v660, %v744
        %v777 = vadd.f32 %v661, %v745
        %v778 = vadd.f32 %v662, %v746
        %v779 = vadd.f32 %v663, %v747
        %v780 = vadd.f32 %v664, %v748
        %v781 = vadd.f32 %v665, %v749
        %v782 = vadd.f32 %v666, %v750
        %v783 = vadd.f32 %v667, %v751
        %v784 = vadd.f32 %v668, %v752
        %v785 = vadd.f32 %v669, %v753
        %v786 = vadd.f32 %v670, %v754
        %v787 = vadd.f32 %v671, %v755
        %v788 = vadd.f32 %v672, %v756
        %v789 = vadd.f32 %v673, %v757
        %v790 = vadd.f32 %v674, %v758
        %v791 = vadd.f32 %v675, %v759
        %v792 = vadd.f32 %v676, %v760
        %v793 = vadd.f32 %v677, %v761
        %v794 = vadd.f32 %v678, %v762
        %v795 = vadd.f32 %v679, %v763
        %v796 = vlaneseq
        %v797 = vshrl.u32 %v796, 7
        %v798 = vsub.s32 3, %v797
        %v799 = vrot.slane %v456, %v798
        %v800 = vlaneseq
        %v801 = vshrl.u32 %v800, 7
        %v802 = vsub.s32 3, %v801
        %v803 = vrot.slane %v457, %v802
        %v804 = vlaneseq
        %v805 = vshrl.u32 %v804, 7
        %v806 = vsub.s32 3, %v805
        %v807 = vrot.slane %v458, %v806
        %v808 = vlaneseq
        %v809 = vshrl.u32 %v808, 7
        %v810 = vsub.s32 3, %v809
        %v811 = vrot.slane %v459, %v810
        %v812 = vlaneseq
        %v813 = vshrl.u32 %v812, 7
        %v814 = vsub.s32 3, %v813
        %v815 = vrot.slane %v460, %v814
        %v816 = vlaneseq
        %v817 = vshrl.u32 %v816, 7
        %v818 = vsub.s32 3, %v817
        %v819 = vrot.slane %v461, %v818
        %v820 = vlaneseq
        %v821 = vshrl.u32 %v820, 7
        %v822 = vsub.s32 3, %v821
        %v823 = vrot.slane %v462, %v822
        %v824 = vlaneseq
        %v825 = vshrl.u32 %v824, 7
        %v826 = vsub.s32 3, %v825
        %v827 = vrot.slane %v463, %v826
        %829 = vset.pattern.permute.xlu0 0
        %830 = vperm.xlu0 %829, %v476
        %v831 = vpop.permute.xlu0 %830
        %834 = vset.pattern.permute.xlu0 0
        %835 = vperm.xlu0 %834, %v477
        %v836 = vpop.permute.xlu0 %835
        %839 = vset.pattern.permute.xlu0 0
        %840 = vperm.xlu0 %839, %v478
        %v841 = vpop.permute.xlu0 %840
        %844 = vset.pattern.permute.xlu0 0
        %845 = vperm.xlu0 %844, %v479
        %v846 = vpop.permute.xlu0 %845
        %v848 = vmul.f32 %v799, %v831
        %v849 = vmul.f32 %v799, %v836
        %v850 = vmul.f32 %v799, %v841
        %v851 = vmul.f32 %v799, %v846
        %v852 = vmul.f32 %v803, %v831
        %v853 = vmul.f32 %v803, %v836
        %v854 = vmul.f32 %v803, %v841
        %v855 = vmul.f32 %v803, %v846
        %v856 = vmul.f32 %v807, %v831
        %v857 = vmul.f32 %v807, %v836
        %v858 = vmul.f32 %v807, %v841
        %v859 = vmul.f32 %v807, %v846
        %v860 = vmul.f32 %v811, %v831
        %v861 = vmul.f32 %v811, %v836
        %v862 = vmul.f32 %v811, %v841
        %v863 = vmul.f32 %v811, %v846
        %v864 = vmul.f32 %v815, %v831
        %v865 = vmul.f32 %v815, %v836
        %v866 = vmul.f32 %v815, %v841
        %v867 = vmul.f32 %v815, %v846
        %v868 = vmul.f32 %v819, %v831
        %v869 = vmul.f32 %v819, %v836
        %v870 = vmul.f32 %v819, %v841
        %v871 = vmul.f32 %v819, %v846
        %v872 = vmul.f32 %v823, %v831
        %v873 = vmul.f32 %v823, %v836
        %v874 = vmul.f32 %v823, %v841
        %v875 = vmul.f32 %v823, %v846
        %v876 = vmul.f32 %v827, %v831
        %v877 = vmul.f32 %v827, %v836
        %v878 = vmul.f32 %v827, %v841
        %v879 = vmul.f32 %v827, %v846
        %v880 = vadd.f32 %v764, %v848
        %v881 = vadd.f32 %v765, %v849
        %v882 = vadd.f32 %v766, %v850
        %v883 = vadd.f32 %v767, %v851
        %v884 = vadd.f32 %v768, %v852
        %v885 = vadd.f32 %v769, %v853
        %v886 = vadd.f32 %v770, %v854
        %v887 = vadd.f32 %v771, %v855
        %v888 = vadd.f32 %v772, %v856
        %v889 = vadd.f32 %v773, %v857
        %v890 = vadd.f32 %v774, %v858
        %v891 = vadd.f32 %v775, %v859
        %v892 = vadd.f32 %v776, %v860
        %v893 = vadd.f32 %v777, %v861
        %v894 = vadd.f32 %v778, %v862
        %v895 = vadd.f32 %v779, %v863
        %v896 = vadd.f32 %v780, %v864
        %v897 = vadd.f32 %v781, %v865
        %v898 = vadd.f32 %v782, %v866
        %v899 = vadd.f32 %v783, %v867
        %v900 = vadd.f32 %v784, %v868
        %v901 = vadd.f32 %v785, %v869
        %v902 = vadd.f32 %v786, %v870
        %v903 = vadd.f32 %v787, %v871
        %v904 = vadd.f32 %v788, %v872
        %v905 = vadd.f32 %v789, %v873
        %v906 = vadd.f32 %v790, %v874
        %v907 = vadd.f32 %v791, %v875
        %v908 = vadd.f32 %v792, %v876
        %v909 = vadd.f32 %v793, %v877
        %v910 = vadd.f32 %v794, %v878
        %v911 = vadd.f32 %v795, %v879
        %v912 = vmul.f32 %v440, %v880
        %v913 = vmul.f32 %v440, %v881
        %v914 = vmul.f32 %v440, %v882
        %v915 = vmul.f32 %v440, %v883
        %v916 = vmul.f32 %v441, %v884
        %v917 = vmul.f32 %v441, %v885
        %v918 = vmul.f32 %v441, %v886
        %v919 = vmul.f32 %v441, %v887
        %v920 = vmul.f32 %v442, %v888
        %v921 = vmul.f32 %v442, %v889
        %v922 = vmul.f32 %v442, %v890
        %v923 = vmul.f32 %v442, %v891
        %v924 = vmul.f32 %v443, %v892
        %v925 = vmul.f32 %v443, %v893
        %v926 = vmul.f32 %v443, %v894
        %v927 = vmul.f32 %v443, %v895
        %v928 = vmul.f32 %v444, %v896
        %v929 = vmul.f32 %v444, %v897
        %v930 = vmul.f32 %v444, %v898
        %v931 = vmul.f32 %v444, %v899
        %v932 = vmul.f32 %v445, %v900
        %v933 = vmul.f32 %v445, %v901
        %v934 = vmul.f32 %v445, %v902
        %v935 = vmul.f32 %v445, %v903
        %v936 = vmul.f32 %v446, %v904
        %v937 = vmul.f32 %v446, %v905
        %v938 = vmul.f32 %v446, %v906
        %v939 = vmul.f32 %v446, %v907
        %v940 = vmul.f32 %v447, %v908
        %v941 = vmul.f32 %v447, %v909
        %v942 = vmul.f32 %v447, %v910
        %v943 = vmul.f32 %v447, %v911
        %v944 = vlaneseq
        %v945 = vshrl.u32 %v944, 7
        %v946 = vsub.s32 0, %v945
        %v947 = vrot.slane %v376, %v946
        %v948 = vlaneseq
        %v949 = vshrl.u32 %v948, 7
        %v950 = vsub.s32 0, %v949
        %v951 = vrot.slane %v377, %v950
        %v952 = vlaneseq
        %v953 = vshrl.u32 %v952, 7
        %v954 = vsub.s32 0, %v953
        %v955 = vrot.slane %v378, %v954
        %v956 = vlaneseq
        %v957 = vshrl.u32 %v956, 7
        %v958 = vsub.s32 0, %v957
        %v959 = vrot.slane %v379, %v958
        %v960 = vlaneseq
        %v961 = vshrl.u32 %v960, 7
        %v962 = vsub.s32 0, %v961
        %v963 = vrot.slane %v380, %v962
        %v964 = vlaneseq
        %v965 = vshrl.u32 %v964, 7
        %v966 = vsub.s32 0, %v965
        %v967 = vrot.slane %v381, %v966
        %v968 = vlaneseq
        %v969 = vshrl.u32 %v968, 7
        %v970 = vsub.s32 0, %v969
        %v971 = vrot.slane %v382, %v970
        %v972 = vlaneseq
        %v973 = vshrl.u32 %v972, 7
        %v974 = vsub.s32 0, %v973
        %v975 = vrot.slane %v383, %v974
        %v976 = vmul.f32 %v947, %v912
        %v977 = vmul.f32 %v947, %v913
        %v978 = vmul.f32 %v947, %v914
        %v979 = vmul.f32 %v947, %v915
        %v980 = vmul.f32 %v951, %v912
        %v981 = vmul.f32 %v951, %v913
        %v982 = vmul.f32 %v951, %v914
        %v983 = vmul.f32 %v951, %v915
        %v984 = vmul.f32 %v955, %v912
        %v985 = vmul.f32 %v955, %v913
        %v986 = vmul.f32 %v955, %v914
        %v987 = vmul.f32 %v955, %v915
        %v988 = vmul.f32 %v959, %v912
        %v989 = vmul.f32 %v959, %v913
        %v990 = vmul.f32 %v959, %v914
        %v991 = vmul.f32 %v959, %v915
        %v992 = vmul.f32 %v963, %v912
        %v993 = vmul.f32 %v963, %v913
        %v994 = vmul.f32 %v963, %v914
        %v995 = vmul.f32 %v963, %v915
        %v996 = vmul.f32 %v967, %v912
        %v997 = vmul.f32 %v967, %v913
        %v998 = vmul.f32 %v967, %v914
        %v999 = vmul.f32 %v967, %v915
        %v1000 = vmul.f32 %v971, %v912
        %v1001 = vmul.f32 %v971, %v913
        %v1002 = vmul.f32 %v971, %v914
        %v1003 = vmul.f32 %v971, %v915
        %v1004 = vmul.f32 %v975, %v912
        %v1005 = vmul.f32 %v975, %v913
        %v1006 = vmul.f32 %v975, %v914
        %v1007 = vmul.f32 %v975, %v915
        %v1008 = vlaneseq
        %v1009 = vshrl.u32 %v1008, 7
        %v1010 = vsub.s32 1, %v1009
        %v1011 = vrot.slane %v376, %v1010
        %v1012 = vlaneseq
        %v1013 = vshrl.u32 %v1012, 7
        %v1014 = vsub.s32 1, %v1013
        %v1015 = vrot.slane %v377, %v1014
        %v1016 = vlaneseq
        %v1017 = vshrl.u32 %v1016, 7
        %v1018 = vsub.s32 1, %v1017
        %v1019 = vrot.slane %v378, %v1018
        %v1020 = vlaneseq
        %v1021 = vshrl.u32 %v1020, 7
        %v1022 = vsub.s32 1, %v1021
        %v1023 = vrot.slane %v379, %v1022
        %v1024 = vlaneseq
        %v1025 = vshrl.u32 %v1024, 7
        %v1026 = vsub.s32 1, %v1025
        %v1027 = vrot.slane %v380, %v1026
        %v1028 = vlaneseq
        %v1029 = vshrl.u32 %v1028, 7
        %v1030 = vsub.s32 1, %v1029
        %v1031 = vrot.slane %v381, %v1030
        %v1032 = vlaneseq
        %v1033 = vshrl.u32 %v1032, 7
        %v1034 = vsub.s32 1, %v1033
        %v1035 = vrot.slane %v382, %v1034
        %v1036 = vlaneseq
        %v1037 = vshrl.u32 %v1036, 7
        %v1038 = vsub.s32 1, %v1037
        %v1039 = vrot.slane %v383, %v1038
        %v1040 = vmul.f32 %v1011, %v916
        %v1041 = vmul.f32 %v1011, %v917
        %v1042 = vmul.f32 %v1011, %v918
        %v1043 = vmul.f32 %v1011, %v919
        %v1044 = vmul.f32 %v1015, %v916
        %v1045 = vmul.f32 %v1015, %v917
        %v1046 = vmul.f32 %v1015, %v918
        %v1047 = vmul.f32 %v1015, %v919
        %v1048 = vmul.f32 %v1019, %v916
        %v1049 = vmul.f32 %v1019, %v917
        %v1050 = vmul.f32 %v1019, %v918
        %v1051 = vmul.f32 %v1019, %v919
        %v1052 = vmul.f32 %v1023, %v916
        %v1053 = vmul.f32 %v1023, %v917
        %v1054 = vmul.f32 %v1023, %v918
        %v1055 = vmul.f32 %v1023, %v919
        %v1056 = vmul.f32 %v1027, %v916
        %v1057 = vmul.f32 %v1027, %v917
        %v1058 = vmul.f32 %v1027, %v918
        %v1059 = vmul.f32 %v1027, %v919
        %v1060 = vmul.f32 %v1031, %v916
        %v1061 = vmul.f32 %v1031, %v917
        %v1062 = vmul.f32 %v1031, %v918
        %v1063 = vmul.f32 %v1031, %v919
        %v1064 = vmul.f32 %v1035, %v916
        %v1065 = vmul.f32 %v1035, %v917
        %v1066 = vmul.f32 %v1035, %v918
        %v1067 = vmul.f32 %v1035, %v919
        %v1068 = vmul.f32 %v1039, %v916
        %v1069 = vmul.f32 %v1039, %v917
        %v1070 = vmul.f32 %v1039, %v918
        %v1071 = vmul.f32 %v1039, %v919
        %v1072 = vadd.f32 %v976, %v1040
        %v1073 = vadd.f32 %v977, %v1041
        %v1074 = vadd.f32 %v978, %v1042
        %v1075 = vadd.f32 %v979, %v1043
        %v1076 = vadd.f32 %v980, %v1044
        %v1077 = vadd.f32 %v981, %v1045
        %v1078 = vadd.f32 %v982, %v1046
        %v1079 = vadd.f32 %v983, %v1047
        %v1080 = vadd.f32 %v984, %v1048
        %v1081 = vadd.f32 %v985, %v1049
        %v1082 = vadd.f32 %v986, %v1050
        %v1083 = vadd.f32 %v987, %v1051
        %v1084 = vadd.f32 %v988, %v1052
        %v1085 = vadd.f32 %v989, %v1053
        %v1086 = vadd.f32 %v990, %v1054
        %v1087 = vadd.f32 %v991, %v1055
        %v1088 = vadd.f32 %v992, %v1056
        %v1089 = vadd.f32 %v993, %v1057
        %v1090 = vadd.f32 %v994, %v1058
        %v1091 = vadd.f32 %v995, %v1059
        %v1092 = vadd.f32 %v996, %v1060
        %v1093 = vadd.f32 %v997, %v1061
        %v1094 = vadd.f32 %v998, %v1062
        %v1095 = vadd.f32 %v999, %v1063
        %v1096 = vadd.f32 %v1000, %v1064
        %v1097 = vadd.f32 %v1001, %v1065
        %v1098 = vadd.f32 %v1002, %v1066
        %v1099 = vadd.f32 %v1003, %v1067
        %v1100 = vadd.f32 %v1004, %v1068
        %v1101 = vadd.f32 %v1005, %v1069
        %v1102 = vadd.f32 %v1006, %v1070
        %v1103 = vadd.f32 %v1007, %v1071
        %v1104 = vlaneseq
        %v1105 = vshrl.u32 %v1104, 7
        %v1106 = vsub.s32 2, %v1105
        %v1107 = vrot.slane %v376, %v1106
        %v1108 = vlaneseq
        %v1109 = vshrl.u32 %v1108, 7
        %v1110 = vsub.s32 2, %v1109
        %v1111 = vrot.slane %v377, %v1110
        %v1112 = vlaneseq
        %v1113 = vshrl.u32 %v1112, 7
        %v1114 = vsub.s32 2, %v1113
        %v1115 = vrot.slane %v378, %v1114
        %v1116 = vlaneseq
        %v1117 = vshrl.u32 %v1116, 7
        %v1118 = vsub.s32 2, %v1117
        %v1119 = vrot.slane %v379, %v1118
        %v1120 = vlaneseq
        %v1121 = vshrl.u32 %v1120, 7
        %v1122 = vsub.s32 2, %v1121
        %v1123 = vrot.slane %v380, %v1122
        %v1124 = vlaneseq
        %v1125 = vshrl.u32 %v1124, 7
        %v1126 = vsub.s32 2, %v1125
        %v1127 = vrot.slane %v381, %v1126
        %v1128 = vlaneseq
        %v1129 = vshrl.u32 %v1128, 7
        %v1130 = vsub.s32 2, %v1129
        %v1131 = vrot.slane %v382, %v1130
        %v1132 = vlaneseq
        %v1133 = vshrl.u32 %v1132, 7
        %v1134 = vsub.s32 2, %v1133
        %v1135 = vrot.slane %v383, %v1134
        %v1136 = vmul.f32 %v1107, %v920
        %v1137 = vmul.f32 %v1107, %v921
        %v1138 = vmul.f32 %v1107, %v922
        %v1139 = vmul.f32 %v1107, %v923
        %v1140 = vmul.f32 %v1111, %v920
        %v1141 = vmul.f32 %v1111, %v921
        %v1142 = vmul.f32 %v1111, %v922
        %v1143 = vmul.f32 %v1111, %v923
        %v1144 = vmul.f32 %v1115, %v920
        %v1145 = vmul.f32 %v1115, %v921
        %v1146 = vmul.f32 %v1115, %v922
        %v1147 = vmul.f32 %v1115, %v923
        %v1148 = vmul.f32 %v1119, %v920
        %v1149 = vmul.f32 %v1119, %v921
        %v1150 = vmul.f32 %v1119, %v922
        %v1151 = vmul.f32 %v1119, %v923
        %v1152 = vmul.f32 %v1123, %v920
        %v1153 = vmul.f32 %v1123, %v921
        %v1154 = vmul.f32 %v1123, %v922
        %v1155 = vmul.f32 %v1123, %v923
        %v1156 = vmul.f32 %v1127, %v920
        %v1157 = vmul.f32 %v1127, %v921
        %v1158 = vmul.f32 %v1127, %v922
        %v1159 = vmul.f32 %v1127, %v923
        %v1160 = vmul.f32 %v1131, %v920
        %v1161 = vmul.f32 %v1131, %v921
        %v1162 = vmul.f32 %v1131, %v922
        %v1163 = vmul.f32 %v1131, %v923
        %v1164 = vmul.f32 %v1135, %v920
        %v1165 = vmul.f32 %v1135, %v921
        %v1166 = vmul.f32 %v1135, %v922
        %v1167 = vmul.f32 %v1135, %v923
        %v1168 = vadd.f32 %v1072, %v1136
        %v1169 = vadd.f32 %v1073, %v1137
        %v1170 = vadd.f32 %v1074, %v1138
        %v1171 = vadd.f32 %v1075, %v1139
        %v1172 = vadd.f32 %v1076, %v1140
        %v1173 = vadd.f32 %v1077, %v1141
        %v1174 = vadd.f32 %v1078, %v1142
        %v1175 = vadd.f32 %v1079, %v1143
        %v1176 = vadd.f32 %v1080, %v1144
        %v1177 = vadd.f32 %v1081, %v1145
        %v1178 = vadd.f32 %v1082, %v1146
        %v1179 = vadd.f32 %v1083, %v1147
        %v1180 = vadd.f32 %v1084, %v1148
        %v1181 = vadd.f32 %v1085, %v1149
        %v1182 = vadd.f32 %v1086, %v1150
        %v1183 = vadd.f32 %v1087, %v1151
        %v1184 = vadd.f32 %v1088, %v1152
        %v1185 = vadd.f32 %v1089, %v1153
        %v1186 = vadd.f32 %v1090, %v1154
        %v1187 = vadd.f32 %v1091, %v1155
        %v1188 = vadd.f32 %v1092, %v1156
        %v1189 = vadd.f32 %v1093, %v1157
        %v1190 = vadd.f32 %v1094, %v1158
        %v1191 = vadd.f32 %v1095, %v1159
        %v1192 = vadd.f32 %v1096, %v1160
        %v1193 = vadd.f32 %v1097, %v1161
        %v1194 = vadd.f32 %v1098, %v1162
        %v1195 = vadd.f32 %v1099, %v1163
        %v1196 = vadd.f32 %v1100, %v1164
        %v1197 = vadd.f32 %v1101, %v1165
        %v1198 = vadd.f32 %v1102, %v1166
        %v1199 = vadd.f32 %v1103, %v1167
        %v1200 = vlaneseq
        %v1201 = vshrl.u32 %v1200, 7
        %v1202 = vsub.s32 3, %v1201
        %v1203 = vrot.slane %v376, %v1202
        %v1204 = vlaneseq
        %v1205 = vshrl.u32 %v1204, 7
        %v1206 = vsub.s32 3, %v1205
        %v1207 = vrot.slane %v377, %v1206
        %v1208 = vlaneseq
        %v1209 = vshrl.u32 %v1208, 7
        %v1210 = vsub.s32 3, %v1209
        %v1211 = vrot.slane %v378, %v1210
        %v1212 = vlaneseq
        %v1213 = vshrl.u32 %v1212, 7
        %v1214 = vsub.s32 3, %v1213
        %v1215 = vrot.slane %v379, %v1214
        %v1216 = vlaneseq
        %v1217 = vshrl.u32 %v1216, 7
        %v1218 = vsub.s32 3, %v1217
        %v1219 = vrot.slane %v380, %v1218
        %v1220 = vlaneseq
        %v1221 = vshrl.u32 %v1220, 7
        %v1222 = vsub.s32 3, %v1221
        %v1223 = vrot.slane %v381, %v1222
        %v1224 = vlaneseq
        %v1225 = vshrl.u32 %v1224, 7
        %v1226 = vsub.s32 3, %v1225
        %v1227 = vrot.slane %v382, %v1226
        %v1228 = vlaneseq
        %v1229 = vshrl.u32 %v1228, 7
        %v1230 = vsub.s32 3, %v1229
        %v1231 = vrot.slane %v383, %v1230
        %v1232 = vmul.f32 %v1203, %v924
        %v1233 = vmul.f32 %v1203, %v925
        %v1234 = vmul.f32 %v1203, %v926
        %v1235 = vmul.f32 %v1203, %v927
        %v1236 = vmul.f32 %v1207, %v924
        %v1237 = vmul.f32 %v1207, %v925
        %v1238 = vmul.f32 %v1207, %v926
        %v1239 = vmul.f32 %v1207, %v927
        %v1240 = vmul.f32 %v1211, %v924
        %v1241 = vmul.f32 %v1211, %v925
        %v1242 = vmul.f32 %v1211, %v926
        %v1243 = vmul.f32 %v1211, %v927
        %v1244 = vmul.f32 %v1215, %v924
        %v1245 = vmul.f32 %v1215, %v925
        %v1246 = vmul.f32 %v1215, %v926
        %v1247 = vmul.f32 %v1215, %v927
        %v1248 = vmul.f32 %v1219, %v924
        %v1249 = vmul.f32 %v1219, %v925
        %v1250 = vmul.f32 %v1219, %v926
        %v1251 = vmul.f32 %v1219, %v927
        %v1252 = vmul.f32 %v1223, %v924
        %v1253 = vmul.f32 %v1223, %v925
        %v1254 = vmul.f32 %v1223, %v926
        %v1255 = vmul.f32 %v1223, %v927
        %v1256 = vmul.f32 %v1227, %v924
        %v1257 = vmul.f32 %v1227, %v925
        %v1258 = vmul.f32 %v1227, %v926
        %v1259 = vmul.f32 %v1227, %v927
        %v1260 = vmul.f32 %v1231, %v924
        %v1261 = vmul.f32 %v1231, %v925
        %v1262 = vmul.f32 %v1231, %v926
        %v1263 = vmul.f32 %v1231, %v927
        %v1264 = vadd.f32 %v1168, %v1232
        %v1265 = vadd.f32 %v1169, %v1233
        %v1266 = vadd.f32 %v1170, %v1234
        %v1267 = vadd.f32 %v1171, %v1235
        %v1268 = vadd.f32 %v1172, %v1236
        %v1269 = vadd.f32 %v1173, %v1237
        %v1270 = vadd.f32 %v1174, %v1238
        %v1271 = vadd.f32 %v1175, %v1239
        %v1272 = vadd.f32 %v1176, %v1240
        %v1273 = vadd.f32 %v1177, %v1241
        %v1274 = vadd.f32 %v1178, %v1242
        %v1275 = vadd.f32 %v1179, %v1243
        %v1276 = vadd.f32 %v1180, %v1244
        %v1277 = vadd.f32 %v1181, %v1245
        %v1278 = vadd.f32 %v1182, %v1246
        %v1279 = vadd.f32 %v1183, %v1247
        %v1280 = vadd.f32 %v1184, %v1248
        %v1281 = vadd.f32 %v1185, %v1249
        %v1282 = vadd.f32 %v1186, %v1250
        %v1283 = vadd.f32 %v1187, %v1251
        %v1284 = vadd.f32 %v1188, %v1252
        %v1285 = vadd.f32 %v1189, %v1253
        %v1286 = vadd.f32 %v1190, %v1254
        %v1287 = vadd.f32 %v1191, %v1255
        %v1288 = vadd.f32 %v1192, %v1256
        %v1289 = vadd.f32 %v1193, %v1257
        %v1290 = vadd.f32 %v1194, %v1258
        %v1291 = vadd.f32 %v1195, %v1259
        %v1292 = vadd.f32 %v1196, %v1260
        %v1293 = vadd.f32 %v1197, %v1261
        %v1294 = vadd.f32 %v1198, %v1262
        %v1295 = vadd.f32 %v1199, %v1263
        %v1296 = vlaneseq
        %v1297 = vshrl.u32 %v1296, 7
        %v1298 = vsub.s32 4, %v1297
        %v1299 = vrot.slane %v376, %v1298
        %v1300 = vlaneseq
        %v1301 = vshrl.u32 %v1300, 7
        %v1302 = vsub.s32 4, %v1301
        %v1303 = vrot.slane %v377, %v1302
        %v1304 = vlaneseq
        %v1305 = vshrl.u32 %v1304, 7
        %v1306 = vsub.s32 4, %v1305
        %v1307 = vrot.slane %v378, %v1306
        %v1308 = vlaneseq
        %v1309 = vshrl.u32 %v1308, 7
        %v1310 = vsub.s32 4, %v1309
        %v1311 = vrot.slane %v379, %v1310
        %v1312 = vlaneseq
        %v1313 = vshrl.u32 %v1312, 7
        %v1314 = vsub.s32 4, %v1313
        %v1315 = vrot.slane %v380, %v1314
        %v1316 = vlaneseq
        %v1317 = vshrl.u32 %v1316, 7
        %v1318 = vsub.s32 4, %v1317
        %v1319 = vrot.slane %v381, %v1318
        %v1320 = vlaneseq
        %v1321 = vshrl.u32 %v1320, 7
        %v1322 = vsub.s32 4, %v1321
        %v1323 = vrot.slane %v382, %v1322
        %v1324 = vlaneseq
        %v1325 = vshrl.u32 %v1324, 7
        %v1326 = vsub.s32 4, %v1325
        %v1327 = vrot.slane %v383, %v1326
        %v1328 = vmul.f32 %v1299, %v928
        %v1329 = vmul.f32 %v1299, %v929
        %v1330 = vmul.f32 %v1299, %v930
        %v1331 = vmul.f32 %v1299, %v931
        %v1332 = vmul.f32 %v1303, %v928
        %v1333 = vmul.f32 %v1303, %v929
        %v1334 = vmul.f32 %v1303, %v930
        %v1335 = vmul.f32 %v1303, %v931
        %v1336 = vmul.f32 %v1307, %v928
        %v1337 = vmul.f32 %v1307, %v929
        %v1338 = vmul.f32 %v1307, %v930
        %v1339 = vmul.f32 %v1307, %v931
        %v1340 = vmul.f32 %v1311, %v928
        %v1341 = vmul.f32 %v1311, %v929
        %v1342 = vmul.f32 %v1311, %v930
        %v1343 = vmul.f32 %v1311, %v931
        %v1344 = vmul.f32 %v1315, %v928
        %v1345 = vmul.f32 %v1315, %v929
        %v1346 = vmul.f32 %v1315, %v930
        %v1347 = vmul.f32 %v1315, %v931
        %v1348 = vmul.f32 %v1319, %v928
        %v1349 = vmul.f32 %v1319, %v929
        %v1350 = vmul.f32 %v1319, %v930
        %v1351 = vmul.f32 %v1319, %v931
        %v1352 = vmul.f32 %v1323, %v928
        %v1353 = vmul.f32 %v1323, %v929
        %v1354 = vmul.f32 %v1323, %v930
        %v1355 = vmul.f32 %v1323, %v931
        %v1356 = vmul.f32 %v1327, %v928
        %v1357 = vmul.f32 %v1327, %v929
        %v1358 = vmul.f32 %v1327, %v930
        %v1359 = vmul.f32 %v1327, %v931
        %v1360 = vadd.f32 %v1264, %v1328
        %v1361 = vadd.f32 %v1265, %v1329
        %v1362 = vadd.f32 %v1266, %v1330
        %v1363 = vadd.f32 %v1267, %v1331
        %v1364 = vadd.f32 %v1268, %v1332
        %v1365 = vadd.f32 %v1269, %v1333
        %v1366 = vadd.f32 %v1270, %v1334
        %v1367 = vadd.f32 %v1271, %v1335
        %v1368 = vadd.f32 %v1272, %v1336
        %v1369 = vadd.f32 %v1273, %v1337
        %v1370 = vadd.f32 %v1274, %v1338
        %v1371 = vadd.f32 %v1275, %v1339
        %v1372 = vadd.f32 %v1276, %v1340
        %v1373 = vadd.f32 %v1277, %v1341
        %v1374 = vadd.f32 %v1278, %v1342
        %v1375 = vadd.f32 %v1279, %v1343
        %v1376 = vadd.f32 %v1280, %v1344
        %v1377 = vadd.f32 %v1281, %v1345
        %v1378 = vadd.f32 %v1282, %v1346
        %v1379 = vadd.f32 %v1283, %v1347
        %v1380 = vadd.f32 %v1284, %v1348
        %v1381 = vadd.f32 %v1285, %v1349
        %v1382 = vadd.f32 %v1286, %v1350
        %v1383 = vadd.f32 %v1287, %v1351
        %v1384 = vadd.f32 %v1288, %v1352
        %v1385 = vadd.f32 %v1289, %v1353
        %v1386 = vadd.f32 %v1290, %v1354
        %v1387 = vadd.f32 %v1291, %v1355
        %v1388 = vadd.f32 %v1292, %v1356
        %v1389 = vadd.f32 %v1293, %v1357
        %v1390 = vadd.f32 %v1294, %v1358
        %v1391 = vadd.f32 %v1295, %v1359
        %v1392 = vlaneseq
        %v1393 = vshrl.u32 %v1392, 7
        %v1394 = vsub.s32 5, %v1393
        %v1395 = vrot.slane %v376, %v1394
        %v1396 = vlaneseq
        %v1397 = vshrl.u32 %v1396, 7
        %v1398 = vsub.s32 5, %v1397
        %v1399 = vrot.slane %v377, %v1398
        %v1400 = vlaneseq
        %v1401 = vshrl.u32 %v1400, 7
        %v1402 = vsub.s32 5, %v1401
        %v1403 = vrot.slane %v378, %v1402
        %v1404 = vlaneseq
        %v1405 = vshrl.u32 %v1404, 7
        %v1406 = vsub.s32 5, %v1405
        %v1407 = vrot.slane %v379, %v1406
        %v1408 = vlaneseq
        %v1409 = vshrl.u32 %v1408, 7
        %v1410 = vsub.s32 5, %v1409
        %v1411 = vrot.slane %v380, %v1410
        %v1412 = vlaneseq
        %v1413 = vshrl.u32 %v1412, 7
        %v1414 = vsub.s32 5, %v1413
        %v1415 = vrot.slane %v381, %v1414
        %v1416 = vlaneseq
        %v1417 = vshrl.u32 %v1416, 7
        %v1418 = vsub.s32 5, %v1417
        %v1419 = vrot.slane %v382, %v1418
        %v1420 = vlaneseq
        %v1421 = vshrl.u32 %v1420, 7
        %v1422 = vsub.s32 5, %v1421
        %v1423 = vrot.slane %v383, %v1422
        %v1424 = vmul.f32 %v1395, %v932
        %v1425 = vmul.f32 %v1395, %v933
        %v1426 = vmul.f32 %v1395, %v934
        %v1427 = vmul.f32 %v1395, %v935
        %v1428 = vmul.f32 %v1399, %v932
        %v1429 = vmul.f32 %v1399, %v933
        %v1430 = vmul.f32 %v1399, %v934
        %v1431 = vmul.f32 %v1399, %v935
        %v1432 = vmul.f32 %v1403, %v932
        %v1433 = vmul.f32 %v1403, %v933
        %v1434 = vmul.f32 %v1403, %v934
        %v1435 = vmul.f32 %v1403, %v935
        %v1436 = vmul.f32 %v1407, %v932
        %v1437 = vmul.f32 %v1407, %v933
        %v1438 = vmul.f32 %v1407, %v934
        %v1439 = vmul.f32 %v1407, %v935
        %v1440 = vmul.f32 %v1411, %v932
        %v1441 = vmul.f32 %v1411, %v933
        %v1442 = vmul.f32 %v1411, %v934
        %v1443 = vmul.f32 %v1411, %v935
        %v1444 = vmul.f32 %v1415, %v932
        %v1445 = vmul.f32 %v1415, %v933
        %v1446 = vmul.f32 %v1415, %v934
        %v1447 = vmul.f32 %v1415, %v935
        %v1448 = vmul.f32 %v1419, %v932
        %v1449 = vmul.f32 %v1419, %v933
        %v1450 = vmul.f32 %v1419, %v934
        %v1451 = vmul.f32 %v1419, %v935
        %v1452 = vmul.f32 %v1423, %v932
        %v1453 = vmul.f32 %v1423, %v933
        %v1454 = vmul.f32 %v1423, %v934
        %v1455 = vmul.f32 %v1423, %v935
        %v1456 = vadd.f32 %v1360, %v1424
        %v1457 = vadd.f32 %v1361, %v1425
        %v1458 = vadd.f32 %v1362, %v1426
        %v1459 = vadd.f32 %v1363, %v1427
        %v1460 = vadd.f32 %v1364, %v1428
        %v1461 = vadd.f32 %v1365, %v1429
        %v1462 = vadd.f32 %v1366, %v1430
        %v1463 = vadd.f32 %v1367, %v1431
        %v1464 = vadd.f32 %v1368, %v1432
        %v1465 = vadd.f32 %v1369, %v1433
        %v1466 = vadd.f32 %v1370, %v1434
        %v1467 = vadd.f32 %v1371, %v1435
        %v1468 = vadd.f32 %v1372, %v1436
        %v1469 = vadd.f32 %v1373, %v1437
        %v1470 = vadd.f32 %v1374, %v1438
        %v1471 = vadd.f32 %v1375, %v1439
        %v1472 = vadd.f32 %v1376, %v1440
        %v1473 = vadd.f32 %v1377, %v1441
        %v1474 = vadd.f32 %v1378, %v1442
        %v1475 = vadd.f32 %v1379, %v1443
        %v1476 = vadd.f32 %v1380, %v1444
        %v1477 = vadd.f32 %v1381, %v1445
        %v1478 = vadd.f32 %v1382, %v1446
        %v1479 = vadd.f32 %v1383, %v1447
        %v1480 = vadd.f32 %v1384, %v1448
        %v1481 = vadd.f32 %v1385, %v1449
        %v1482 = vadd.f32 %v1386, %v1450
        %v1483 = vadd.f32 %v1387, %v1451
        %v1484 = vadd.f32 %v1388, %v1452
        %v1485 = vadd.f32 %v1389, %v1453
        %v1486 = vadd.f32 %v1390, %v1454
        %v1487 = vadd.f32 %v1391, %v1455
        %v1488 = vlaneseq
        %v1489 = vshrl.u32 %v1488, 7
        %v1490 = vsub.s32 6, %v1489
        %v1491 = vrot.slane %v376, %v1490
        %v1492 = vlaneseq
        %v1493 = vshrl.u32 %v1492, 7
        %v1494 = vsub.s32 6, %v1493
        %v1495 = vrot.slane %v377, %v1494
        %v1496 = vlaneseq
        %v1497 = vshrl.u32 %v1496, 7
        %v1498 = vsub.s32 6, %v1497
        %v1499 = vrot.slane %v378, %v1498
        %v1500 = vlaneseq
        %v1501 = vshrl.u32 %v1500, 7
        %v1502 = vsub.s32 6, %v1501
        %v1503 = vrot.slane %v379, %v1502
        %v1504 = vlaneseq
        %v1505 = vshrl.u32 %v1504, 7
        %v1506 = vsub.s32 6, %v1505
        %v1507 = vrot.slane %v380, %v1506
        %v1508 = vlaneseq
        %v1509 = vshrl.u32 %v1508, 7
        %v1510 = vsub.s32 6, %v1509
        %v1511 = vrot.slane %v381, %v1510
        %v1512 = vlaneseq
        %v1513 = vshrl.u32 %v1512, 7
        %v1514 = vsub.s32 6, %v1513
        %v1515 = vrot.slane %v382, %v1514
        %v1516 = vlaneseq
        %v1517 = vshrl.u32 %v1516, 7
        %v1518 = vsub.s32 6, %v1517
        %v1519 = vrot.slane %v383, %v1518
        %v1520 = vmul.f32 %v1491, %v936
        %v1521 = vmul.f32 %v1491, %v937
        %v1522 = vmul.f32 %v1491, %v938
        %v1523 = vmul.f32 %v1491, %v939
        %v1524 = vmul.f32 %v1495, %v936
        %v1525 = vmul.f32 %v1495, %v937
        %v1526 = vmul.f32 %v1495, %v938
        %v1527 = vmul.f32 %v1495, %v939
        %v1528 = vmul.f32 %v1499, %v936
        %v1529 = vmul.f32 %v1499, %v937
        %v1530 = vmul.f32 %v1499, %v938
        %v1531 = vmul.f32 %v1499, %v939
        %v1532 = vmul.f32 %v1503, %v936
        %v1533 = vmul.f32 %v1503, %v937
        %v1534 = vmul.f32 %v1503, %v938
        %v1535 = vmul.f32 %v1503, %v939
        %v1536 = vmul.f32 %v1507, %v936
        %v1537 = vmul.f32 %v1507, %v937
        %v1538 = vmul.f32 %v1507, %v938
        %v1539 = vmul.f32 %v1507, %v939
        %v1540 = vmul.f32 %v1511, %v936
        %v1541 = vmul.f32 %v1511, %v937
        %v1542 = vmul.f32 %v1511, %v938
        %v1543 = vmul.f32 %v1511, %v939
        %v1544 = vmul.f32 %v1515, %v936
        %v1545 = vmul.f32 %v1515, %v937
        %v1546 = vmul.f32 %v1515, %v938
        %v1547 = vmul.f32 %v1515, %v939
        %v1548 = vmul.f32 %v1519, %v936
        %v1549 = vmul.f32 %v1519, %v937
        %v1550 = vmul.f32 %v1519, %v938
        %v1551 = vmul.f32 %v1519, %v939
        %v1552 = vadd.f32 %v1456, %v1520
        %v1553 = vadd.f32 %v1457, %v1521
        %v1554 = vadd.f32 %v1458, %v1522
        %v1555 = vadd.f32 %v1459, %v1523
        %v1556 = vadd.f32 %v1460, %v1524
        %v1557 = vadd.f32 %v1461, %v1525
        %v1558 = vadd.f32 %v1462, %v1526
        %v1559 = vadd.f32 %v1463, %v1527
        %v1560 = vadd.f32 %v1464, %v1528
        %v1561 = vadd.f32 %v1465, %v1529
        %v1562 = vadd.f32 %v1466, %v1530
        %v1563 = vadd.f32 %v1467, %v1531
        %v1564 = vadd.f32 %v1468, %v1532
        %v1565 = vadd.f32 %v1469, %v1533
        %v1566 = vadd.f32 %v1470, %v1534
        %v1567 = vadd.f32 %v1471, %v1535
        %v1568 = vadd.f32 %v1472, %v1536
        %v1569 = vadd.f32 %v1473, %v1537
        %v1570 = vadd.f32 %v1474, %v1538
        %v1571 = vadd.f32 %v1475, %v1539
        %v1572 = vadd.f32 %v1476, %v1540
        %v1573 = vadd.f32 %v1477, %v1541
        %v1574 = vadd.f32 %v1478, %v1542
        %v1575 = vadd.f32 %v1479, %v1543
        %v1576 = vadd.f32 %v1480, %v1544
        %v1577 = vadd.f32 %v1481, %v1545
        %v1578 = vadd.f32 %v1482, %v1546
        %v1579 = vadd.f32 %v1483, %v1547
        %v1580 = vadd.f32 %v1484, %v1548
        %v1581 = vadd.f32 %v1485, %v1549
        %v1582 = vadd.f32 %v1486, %v1550
        %v1583 = vadd.f32 %v1487, %v1551
        %v1584 = vlaneseq
        %v1585 = vshrl.u32 %v1584, 7
        %v1586 = vsub.s32 7, %v1585
        %v1587 = vrot.slane %v376, %v1586
        %v1588 = vlaneseq
        %v1589 = vshrl.u32 %v1588, 7
        %v1590 = vsub.s32 7, %v1589
        %v1591 = vrot.slane %v377, %v1590
        %v1592 = vlaneseq
        %v1593 = vshrl.u32 %v1592, 7
        %v1594 = vsub.s32 7, %v1593
        %v1595 = vrot.slane %v378, %v1594
        %v1596 = vlaneseq
        %v1597 = vshrl.u32 %v1596, 7
        %v1598 = vsub.s32 7, %v1597
        %v1599 = vrot.slane %v379, %v1598
        %v1600 = vlaneseq
        %v1601 = vshrl.u32 %v1600, 7
        %v1602 = vsub.s32 7, %v1601
        %v1603 = vrot.slane %v380, %v1602
        %v1604 = vlaneseq
        %v1605 = vshrl.u32 %v1604, 7
        %v1606 = vsub.s32 7, %v1605
        %v1607 = vrot.slane %v381, %v1606
        %v1608 = vlaneseq
        %v1609 = vshrl.u32 %v1608, 7
        %v1610 = vsub.s32 7, %v1609
        %v1611 = vrot.slane %v382, %v1610
        %v1612 = vlaneseq
        %v1613 = vshrl.u32 %v1612, 7
        %v1614 = vsub.s32 7, %v1613
        %v1615 = vrot.slane %v383, %v1614
        %v1616 = vmul.f32 %v1587, %v940
        %v1617 = vmul.f32 %v1587, %v941
        %v1618 = vmul.f32 %v1587, %v942
        %v1619 = vmul.f32 %v1587, %v943
        %v1620 = vmul.f32 %v1591, %v940
        %v1621 = vmul.f32 %v1591, %v941
        %v1622 = vmul.f32 %v1591, %v942
        %v1623 = vmul.f32 %v1591, %v943
        %v1624 = vmul.f32 %v1595, %v940
        %v1625 = vmul.f32 %v1595, %v941
        %v1626 = vmul.f32 %v1595, %v942
        %v1627 = vmul.f32 %v1595, %v943
        %v1628 = vmul.f32 %v1599, %v940
        %v1629 = vmul.f32 %v1599, %v941
        %v1630 = vmul.f32 %v1599, %v942
        %v1631 = vmul.f32 %v1599, %v943
        %v1632 = vmul.f32 %v1603, %v940
        %v1633 = vmul.f32 %v1603, %v941
        %v1634 = vmul.f32 %v1603, %v942
        %v1635 = vmul.f32 %v1603, %v943
        %v1636 = vmul.f32 %v1607, %v940
        %v1637 = vmul.f32 %v1607, %v941
        %v1638 = vmul.f32 %v1607, %v942
        %v1639 = vmul.f32 %v1607, %v943
        %v1640 = vmul.f32 %v1611, %v940
        %v1641 = vmul.f32 %v1611, %v941
        %v1642 = vmul.f32 %v1611, %v942
        %v1643 = vmul.f32 %v1611, %v943
        %v1644 = vmul.f32 %v1615, %v940
        %v1645 = vmul.f32 %v1615, %v941
        %v1646 = vmul.f32 %v1615, %v942
        %v1647 = vmul.f32 %v1615, %v943
        %v1648 = vadd.f32 %v1552, %v1616
        %v1649 = vadd.f32 %v1553, %v1617
        %v1650 = vadd.f32 %v1554, %v1618
        %v1651 = vadd.f32 %v1555, %v1619
        %v1652 = vadd.f32 %v1556, %v1620
        %v1653 = vadd.f32 %v1557, %v1621
        %v1654 = vadd.f32 %v1558, %v1622
        %v1655 = vadd.f32 %v1559, %v1623
        %v1656 = vadd.f32 %v1560, %v1624
        %v1657 = vadd.f32 %v1561, %v1625
        %v1658 = vadd.f32 %v1562, %v1626
        %v1659 = vadd.f32 %v1563, %v1627
        %v1660 = vadd.f32 %v1564, %v1628
        %v1661 = vadd.f32 %v1565, %v1629
        %v1662 = vadd.f32 %v1566, %v1630
        %v1663 = vadd.f32 %v1567, %v1631
        %v1664 = vadd.f32 %v1568, %v1632
        %v1665 = vadd.f32 %v1569, %v1633
        %v1666 = vadd.f32 %v1570, %v1634
        %v1667 = vadd.f32 %v1571, %v1635
        %v1668 = vadd.f32 %v1572, %v1636
        %v1669 = vadd.f32 %v1573, %v1637
        %v1670 = vadd.f32 %v1574, %v1638
        %v1671 = vadd.f32 %v1575, %v1639
        %v1672 = vadd.f32 %v1576, %v1640
        %v1673 = vadd.f32 %v1577, %v1641
        %v1674 = vadd.f32 %v1578, %v1642
        %v1675 = vadd.f32 %v1579, %v1643
        %v1676 = vadd.f32 %v1580, %v1644
        %v1677 = vadd.f32 %v1581, %v1645
        %v1678 = vadd.f32 %v1582, %v1646
        %v1679 = vadd.f32 %v1583, %v1647
        %v1680 = vmul.f32 %v440, %v1648
        %v1681 = vmul.f32 %v440, %v1649
        %v1682 = vmul.f32 %v440, %v1650
        %v1683 = vmul.f32 %v440, %v1651
        %v1684 = vmul.f32 %v441, %v1652
        %v1685 = vmul.f32 %v441, %v1653
        %v1686 = vmul.f32 %v441, %v1654
        %v1687 = vmul.f32 %v441, %v1655
        %v1688 = vmul.f32 %v442, %v1656
        %v1689 = vmul.f32 %v442, %v1657
        %v1690 = vmul.f32 %v442, %v1658
        %v1691 = vmul.f32 %v442, %v1659
        %v1692 = vmul.f32 %v443, %v1660
        %v1693 = vmul.f32 %v443, %v1661
        %v1694 = vmul.f32 %v443, %v1662
        %v1695 = vmul.f32 %v443, %v1663
        %v1696 = vmul.f32 %v444, %v1664
        %v1697 = vmul.f32 %v444, %v1665
        %v1698 = vmul.f32 %v444, %v1666
        %v1699 = vmul.f32 %v444, %v1667
        %v1700 = vmul.f32 %v445, %v1668
        %v1701 = vmul.f32 %v445, %v1669
        %v1702 = vmul.f32 %v445, %v1670
        %v1703 = vmul.f32 %v445, %v1671
        %v1704 = vmul.f32 %v446, %v1672
        %v1705 = vmul.f32 %v446, %v1673
        %v1706 = vmul.f32 %v446, %v1674
        %v1707 = vmul.f32 %v446, %v1675
        %v1708 = vmul.f32 %v447, %v1676
        %v1709 = vmul.f32 %v447, %v1677
        %v1710 = vmul.f32 %v447, %v1678
        %v1711 = vmul.f32 %v447, %v1679
        %v1712 = vmul.f32 %v448, %v880
        %v1713 = vmul.f32 %v448, %v881
        %v1714 = vmul.f32 %v448, %v882
        %v1715 = vmul.f32 %v448, %v883
        %v1716 = vmul.f32 %v449, %v884
        %v1717 = vmul.f32 %v449, %v885
        %v1718 = vmul.f32 %v449, %v886
        %v1719 = vmul.f32 %v449, %v887
        %v1720 = vmul.f32 %v450, %v888
        %v1721 = vmul.f32 %v450, %v889
        %v1722 = vmul.f32 %v450, %v890
        %v1723 = vmul.f32 %v450, %v891
        %v1724 = vmul.f32 %v451, %v892
        %v1725 = vmul.f32 %v451, %v893
        %v1726 = vmul.f32 %v451, %v894
        %v1727 = vmul.f32 %v451, %v895
        %v1728 = vmul.f32 %v452, %v896
        %v1729 = vmul.f32 %v452, %v897
        %v1730 = vmul.f32 %v452, %v898
        %v1731 = vmul.f32 %v452, %v899
        %v1732 = vmul.f32 %v453, %v900
        %v1733 = vmul.f32 %v453, %v901
        %v1734 = vmul.f32 %v453, %v902
        %v1735 = vmul.f32 %v453, %v903
        %v1736 = vmul.f32 %v454, %v904
        %v1737 = vmul.f32 %v454, %v905
        %v1738 = vmul.f32 %v454, %v906
        %v1739 = vmul.f32 %v454, %v907
        %v1740 = vmul.f32 %v455, %v908
        %v1741 = vmul.f32 %v455, %v909
        %v1742 = vmul.f32 %v455, %v910
        %v1743 = vmul.f32 %v455, %v911
        %v1744 = vadd.f32 %v1680, %v1712
        %v1745 = vadd.f32 %v1681, %v1713
        %v1746 = vadd.f32 %v1682, %v1714
        %v1747 = vadd.f32 %v1683, %v1715
        %v1748 = vadd.f32 %v1684, %v1716
        %v1749 = vadd.f32 %v1685, %v1717
        %v1750 = vadd.f32 %v1686, %v1718
        %v1751 = vadd.f32 %v1687, %v1719
        %v1752 = vadd.f32 %v1688, %v1720
        %v1753 = vadd.f32 %v1689, %v1721
        %v1754 = vadd.f32 %v1690, %v1722
        %v1755 = vadd.f32 %v1691, %v1723
        %v1756 = vadd.f32 %v1692, %v1724
        %v1757 = vadd.f32 %v1693, %v1725
        %v1758 = vadd.f32 %v1694, %v1726
        %v1759 = vadd.f32 %v1695, %v1727
        %v1760 = vadd.f32 %v1696, %v1728
        %v1761 = vadd.f32 %v1697, %v1729
        %v1762 = vadd.f32 %v1698, %v1730
        %v1763 = vadd.f32 %v1699, %v1731
        %v1764 = vadd.f32 %v1700, %v1732
        %v1765 = vadd.f32 %v1701, %v1733
        %v1766 = vadd.f32 %v1702, %v1734
        %v1767 = vadd.f32 %v1703, %v1735
        %v1768 = vadd.f32 %v1704, %v1736
        %v1769 = vadd.f32 %v1705, %v1737
        %v1770 = vadd.f32 %v1706, %v1738
        %v1771 = vadd.f32 %v1707, %v1739
        %v1772 = vadd.f32 %v1708, %v1740
        %v1773 = vadd.f32 %v1709, %v1741
        %v1774 = vadd.f32 %v1710, %v1742
        %v1775 = vadd.f32 %v1711, %v1743
        %v1776 = vmax.f32 %v1744, 0.0
        %v1777 = vmax.f32 %v1745, 0.0
        %v1778 = vmax.f32 %v1746, 0.0
        %v1779 = vmax.f32 %v1747, 0.0
        %v1780 = vmax.f32 %v1748, 0.0
        %v1781 = vmax.f32 %v1749, 0.0
        %v1782 = vmax.f32 %v1750, 0.0
        %v1783 = vmax.f32 %v1751, 0.0
        %v1784 = vmax.f32 %v1752, 0.0
        %v1785 = vmax.f32 %v1753, 0.0
        %v1786 = vmax.f32 %v1754, 0.0
        %v1787 = vmax.f32 %v1755, 0.0
        %v1788 = vmax.f32 %v1756, 0.0
        %v1789 = vmax.f32 %v1757, 0.0
        %v1790 = vmax.f32 %v1758, 0.0
        %v1791 = vmax.f32 %v1759, 0.0
        %v1792 = vmax.f32 %v1760, 0.0
        %v1793 = vmax.f32 %v1761, 0.0
        %v1794 = vmax.f32 %v1762, 0.0
        %v1795 = vmax.f32 %v1763, 0.0
        %v1796 = vmax.f32 %v1764, 0.0
        %v1797 = vmax.f32 %v1765, 0.0
        %v1798 = vmax.f32 %v1766, 0.0
        %v1799 = vmax.f32 %v1767, 0.0
        %v1800 = vmax.f32 %v1768, 0.0
        %v1801 = vmax.f32 %v1769, 0.0
        %v1802 = vmax.f32 %v1770, 0.0
        %v1803 = vmax.f32 %v1771, 0.0
        %v1804 = vmax.f32 %v1772, 0.0
        %v1805 = vmax.f32 %v1773, 0.0
        %v1806 = vmax.f32 %v1774, 0.0
        %v1807 = vmax.f32 %v1775, 0.0
        %v1808 = vld [vmem:[%s3] sm:$0xff]
        %v1809 = vld [vmem:[%s3 + $0x8] sm:$0xff]
        %v1810 = vld [vmem:[%s3 + $0x10] sm:$0xff]
        %v1811 = vld [vmem:[%s3 + $0x18] sm:$0xff]
        %v1812 = vld [vmem:[%s3 + $0x20] sm:$0xff]
        %v1813 = vld [vmem:[%s3 + $0x28] sm:$0xff]
        %v1814 = vld [vmem:[%s3 + $0x30] sm:$0xff]
        %v1815 = vld [vmem:[%s3 + $0x38] sm:$0xff]
        %v1816 = vld [vmem:[%s3 + $0x40] sm:$0xff]
        %v1817 = vld [vmem:[%s3 + $0x48] sm:$0xff]
        %v1818 = vld [vmem:[%s3 + $0x50] sm:$0xff]
        %v1819 = vld [vmem:[%s3 + $0x58] sm:$0xff]
        %v1820 = vld [vmem:[%s3 + $0x60] sm:$0xff]
        %v1821 = vld [vmem:[%s3 + $0x68] sm:$0xff]
        %v1822 = vld [vmem:[%s3 + $0x70] sm:$0xff]
        %v1823 = vld [vmem:[%s3 + $0x78] sm:$0xff]
        %v1824 = vld [vmem:[%s3 + $0x80] sm:$0xff]
        %v1825 = vld [vmem:[%s3 + $0x88] sm:$0xff]
        %v1826 = vld [vmem:[%s3 + $0x90] sm:$0xff]
        %v1827 = vld [vmem:[%s3 + $0x98] sm:$0xff]
        %v1828 = vld [vmem:[%s3 + $0xa0] sm:$0xff]
        %v1829 = vld [vmem:[%s3 + $0xa8] sm:$0xff]
        %v1830 = vld [vmem:[%s3 + $0xb0] sm:$0xff]
        %v1831 = vld [vmem:[%s3 + $0xb8] sm:$0xff]
        %v1832 = vld [vmem:[%s3 + $0xc0] sm:$0xff]
        %v1833 = vld [vmem:[%s3 + $0xc8] sm:$0xff]
        %v1834 = vld [vmem:[%s3 + $0xd0] sm:$0xff]
        %v1835 = vld [vmem:[%s3 + $0xd8] sm:$0xff]
        %v1836 = vld [vmem:[%s3 + $0xe0] sm:$0xff]
        %v1837 = vld [vmem:[%s3 + $0xe8] sm:$0xff]
        %v1838 = vld [vmem:[%s3 + $0xf0] sm:$0xff]
        %v1839 = vld [vmem:[%s3 + $0xf8] sm:$0xff]
        %v1840 = vld [vmem:[%s3 + $0x100] sm:$0xff]
        %v1841 = vld [vmem:[%s3 + $0x108] sm:$0xff]
        %v1842 = vld [vmem:[%s3 + $0x110] sm:$0xff]
        %v1843 = vld [vmem:[%s3 + $0x118] sm:$0xff]
        %v1844 = vld [vmem:[%s3 + $0x120] sm:$0xff]
        %v1845 = vld [vmem:[%s3 + $0x128] sm:$0xff]
        %v1846 = vld [vmem:[%s3 + $0x130] sm:$0xff]
        %v1847 = vld [vmem:[%s3 + $0x138] sm:$0xff]
        %v1848 = vld [vmem:[%s3 + $0x140] sm:$0xff]
        %v1849 = vld [vmem:[%s3 + $0x148] sm:$0xff]
        %v1850 = vld [vmem:[%s3 + $0x150] sm:$0xff]
        %v1851 = vld [vmem:[%s3 + $0x158] sm:$0xff]
        %v1852 = vld [vmem:[%s3 + $0x160] sm:$0xff]
        %v1853 = vld [vmem:[%s3 + $0x168] sm:$0xff]
        %v1854 = vld [vmem:[%s3 + $0x170] sm:$0xff]
        %v1855 = vld [vmem:[%s3 + $0x178] sm:$0xff]
        %v1856 = vld [vmem:[%s3 + $0x180] sm:$0xff]
        %v1857 = vld [vmem:[%s3 + $0x188] sm:$0xff]
        %v1858 = vld [vmem:[%s3 + $0x190] sm:$0xff]
        %v1859 = vld [vmem:[%s3 + $0x198] sm:$0xff]
        %v1860 = vld [vmem:[%s3 + $0x1a0] sm:$0xff]
        %v1861 = vld [vmem:[%s3 + $0x1a8] sm:$0xff]
        %v1862 = vld [vmem:[%s3 + $0x1b0] sm:$0xff]
        %v1863 = vld [vmem:[%s3 + $0x1b8] sm:$0xff]
        %v1864 = vld [vmem:[%s3 + $0x1c0] sm:$0xff]
        %v1865 = vld [vmem:[%s3 + $0x1c8] sm:$0xff]
        %v1866 = vld [vmem:[%s3 + $0x1d0] sm:$0xff]
        %v1867 = vld [vmem:[%s3 + $0x1d8] sm:$0xff]
        %v1868 = vld [vmem:[%s3 + $0x1e0] sm:$0xff]
        %v1869 = vld [vmem:[%s3 + $0x1e8] sm:$0xff]
        %v1870 = vld [vmem:[%s3 + $0x1f0] sm:$0xff]
        %v1871 = vld [vmem:[%s3 + $0x1f8] sm:$0xff]
        %v1872 = vld [vmem:[%s3 + $0x200] sm:$0xff]
        %v1873 = vld [vmem:[%s3 + $0x208] sm:$0xff]
        %v1874 = vld [vmem:[%s3 + $0x210] sm:$0xff]
        %v1875 = vld [vmem:[%s3 + $0x218] sm:$0xff]
        %v1876 = vld [vmem:[%s3 + $0x220] sm:$0xff]
        %v1877 = vld [vmem:[%s3 + $0x228] sm:$0xff]
        %v1878 = vld [vmem:[%s3 + $0x230] sm:$0xff]
        %v1879 = vld [vmem:[%s3 + $0x238] sm:$0xff]
        %v1880 = vld [vmem:[%s3 + $0x240] sm:$0xff]
        %v1881 = vld [vmem:[%s3 + $0x248] sm:$0xff]
        %v1882 = vld [vmem:[%s3 + $0x250] sm:$0xff]
        %v1883 = vld [vmem:[%s3 + $0x258] sm:$0xff]
        %v1884 = vld [vmem:[%s3 + $0x260] sm:$0xff]
        %v1885 = vld [vmem:[%s3 + $0x268] sm:$0xff]
        %v1886 = vld [vmem:[%s3 + $0x270] sm:$0xff]
        %v1887 = vld [vmem:[%s3 + $0x278] sm:$0xff]
        %v1888 = vld [vmem:[%s3 + $0x280] sm:$0xff]
        %v1889 = vld [vmem:[%s3 + $0x288] sm:$0xff]
        %v1890 = vld [vmem:[%s3 + $0x290] sm:$0xff]
        %v1891 = vld [vmem:[%s3 + $0x298] sm:$0xff]
        %v1892 = vld [vmem:[%s3 + $0x2a0] sm:$0xff]
        %v1893 = vld [vmem:[%s3 + $0x2a8] sm:$0xff]
        %v1894 = vld [vmem:[%s3 + $0x2b0] sm:$0xff]
        %v1895 = vld [vmem:[%s3 + $0x2b8] sm:$0xff]
        %v1896 = vld [vmem:[%s3 + $0x2c0] sm:$0xff]
        %v1897 = vld [vmem:[%s3 + $0x2c8] sm:$0xff]
        %v1898 = vld [vmem:[%s3 + $0x2d0] sm:$0xff]
        %v1899 = vld [vmem:[%s3 + $0x2d8] sm:$0xff]
        %v1900 = vld [vmem:[%s3 + $0x2e0] sm:$0xff]
        %v1901 = vld [vmem:[%s3 + $0x2e8] sm:$0xff]
        %v1902 = vld [vmem:[%s3 + $0x2f0] sm:$0xff]
        %v1903 = vld [vmem:[%s3 + $0x2f8] sm:$0xff]
        %v1904 = vld [vmem:[%s3 + $0x300] sm:$0xff]
        %v1905 = vld [vmem:[%s3 + $0x308] sm:$0xff]
        %v1906 = vld [vmem:[%s3 + $0x310] sm:$0xff]
        %v1907 = vld [vmem:[%s3 + $0x318] sm:$0xff]
        %v1908 = vld [vmem:[%s3 + $0x320] sm:$0xff]
        %v1909 = vld [vmem:[%s3 + $0x328] sm:$0xff]
        %v1910 = vld [vmem:[%s3 + $0x330] sm:$0xff]
        %v1911 = vld [vmem:[%s3 + $0x338] sm:$0xff]
        %v1912 = vld [vmem:[%s3 + $0x340] sm:$0xff]
        %v1913 = vld [vmem:[%s3 + $0x348] sm:$0xff]
        %v1914 = vld [vmem:[%s3 + $0x350] sm:$0xff]
        %v1915 = vld [vmem:[%s3 + $0x358] sm:$0xff]
        %v1916 = vld [vmem:[%s3 + $0x360] sm:$0xff]
        %v1917 = vld [vmem:[%s3 + $0x368] sm:$0xff]
        %v1918 = vld [vmem:[%s3 + $0x370] sm:$0xff]
        %v1919 = vld [vmem:[%s3 + $0x378] sm:$0xff]
        %v1920 = vld [vmem:[%s3 + $0x380] sm:$0xff]
        %v1921 = vld [vmem:[%s3 + $0x388] sm:$0xff]
        %v1922 = vld [vmem:[%s3 + $0x390] sm:$0xff]
        %v1923 = vld [vmem:[%s3 + $0x398] sm:$0xff]
        %v1924 = vld [vmem:[%s3 + $0x3a0] sm:$0xff]
        %v1925 = vld [vmem:[%s3 + $0x3a8] sm:$0xff]
        %v1926 = vld [vmem:[%s3 + $0x3b0] sm:$0xff]
        %v1927 = vld [vmem:[%s3 + $0x3b8] sm:$0xff]
        %v1928 = vld [vmem:[%s3 + $0x3c0] sm:$0xff]
        %v1929 = vld [vmem:[%s3 + $0x3c8] sm:$0xff]
        %v1930 = vld [vmem:[%s3 + $0x3d0] sm:$0xff]
        %v1931 = vld [vmem:[%s3 + $0x3d8] sm:$0xff]
        %v1932 = vld [vmem:[%s3 + $0x3e0] sm:$0xff]
        %v1933 = vld [vmem:[%s3 + $0x3e8] sm:$0xff]
        %v1934 = vld [vmem:[%s3 + $0x3f0] sm:$0xff]
        %v1935 = vld [vmem:[%s3 + $0x3f8] sm:$0xff]
        %v1936 = vlaneseq
        %v1937 = vshrl.u32 %v1936, 7
        %v1938 = vsub.s32 0, %v1937
        %v1939 = vrot.slane %v1776, %v1938
        %v1940 = vlaneseq
        %v1941 = vshrl.u32 %v1940, 7
        %v1942 = vsub.s32 0, %v1941
        %v1943 = vrot.slane %v1780, %v1942
        %v1944 = vlaneseq
        %v1945 = vshrl.u32 %v1944, 7
        %v1946 = vsub.s32 0, %v1945
        %v1947 = vrot.slane %v1784, %v1946
        %v1948 = vlaneseq
        %v1949 = vshrl.u32 %v1948, 7
        %v1950 = vsub.s32 0, %v1949
        %v1951 = vrot.slane %v1788, %v1950
        %v1952 = vlaneseq
        %v1953 = vshrl.u32 %v1952, 7
        %v1954 = vsub.s32 0, %v1953
        %v1955 = vrot.slane %v1792, %v1954
        %v1956 = vlaneseq
        %v1957 = vshrl.u32 %v1956, 7
        %v1958 = vsub.s32 0, %v1957
        %v1959 = vrot.slane %v1796, %v1958
        %v1960 = vlaneseq
        %v1961 = vshrl.u32 %v1960, 7
        %v1962 = vsub.s32 0, %v1961
        %v1963 = vrot.slane %v1800, %v1962
        %v1964 = vlaneseq
        %v1965 = vshrl.u32 %v1964, 7
        %v1966 = vsub.s32 0, %v1965
        %v1967 = vrot.slane %v1804, %v1966
        %1969 = vset.pattern.permute.xlu0 0
        %1970 = vperm.xlu0 %1969, %v1808
        %v1971 = vpop.permute.xlu0 %1970
        %1974 = vset.pattern.permute.xlu0 0
        %1975 = vperm.xlu0 %1974, %v1809
        %v1976 = vpop.permute.xlu0 %1975
        %1979 = vset.pattern.permute.xlu0 0
        %1980 = vperm.xlu0 %1979, %v1810
        %v1981 = vpop.permute.xlu0 %1980
        %1984 = vset.pattern.permute.xlu0 0
        %1985 = vperm.xlu0 %1984, %v1811
        %v1986 = vpop.permute.xlu0 %1985
        %v1988 = vmul.f32 %v1939, %v1971
        %v1989 = vmul.f32 %v1939, %v1976
        %v1990 = vmul.f32 %v1939, %v1981
        %v1991 = vmul.f32 %v1939, %v1986
        %v1992 = vmul.f32 %v1943, %v1971
        %v1993 = vmul.f32 %v1943, %v1976
        %v1994 = vmul.f32 %v1943, %v1981
        %v1995 = vmul.f32 %v1943, %v1986
        %v1996 = vmul.f32 %v1947, %v1971
        %v1997 = vmul.f32 %v1947, %v1976
        %v1998 = vmul.f32 %v1947, %v1981
        %v1999 = vmul.f32 %v1947, %v1986
        %v2000 = vmul.f32 %v1951, %v1971
        %v2001 = vmul.f32 %v1951, %v1976
        %v2002 = vmul.f32 %v1951, %v1981
        %v2003 = vmul.f32 %v1951, %v1986
        %v2004 = vmul.f32 %v1955, %v1971
        %v2005 = vmul.f32 %v1955, %v1976
        %v2006 = vmul.f32 %v1955, %v1981
        %v2007 = vmul.f32 %v1955, %v1986
        %v2008 = vmul.f32 %v1959, %v1971
        %v2009 = vmul.f32 %v1959, %v1976
        %v2010 = vmul.f32 %v1959, %v1981
        %v2011 = vmul.f32 %v1959, %v1986
        %v2012 = vmul.f32 %v1963, %v1971
        %v2013 = vmul.f32 %v1963, %v1976
        %v2014 = vmul.f32 %v1963, %v1981
        %v2015 = vmul.f32 %v1963, %v1986
        %v2016 = vmul.f32 %v1967, %v1971
        %v2017 = vmul.f32 %v1967, %v1976
        %v2018 = vmul.f32 %v1967, %v1981
        %v2019 = vmul.f32 %v1967, %v1986
        %v2020 = vlaneseq
        %v2021 = vshrl.u32 %v2020, 7
        %v2022 = vsub.s32 1, %v2021
        %v2023 = vrot.slane %v1776, %v2022
        %v2024 = vlaneseq
        %v2025 = vshrl.u32 %v2024, 7
        %v2026 = vsub.s32 1, %v2025
        %v2027 = vrot.slane %v1780, %v2026
        %v2028 = vlaneseq
        %v2029 = vshrl.u32 %v2028, 7
        %v2030 = vsub.s32 1, %v2029
        %v2031 = vrot.slane %v1784, %v2030
        %v2032 = vlaneseq
        %v2033 = vshrl.u32 %v2032, 7
        %v2034 = vsub.s32 1, %v2033
        %v2035 = vrot.slane %v1788, %v2034
        %v2036 = vlaneseq
        %v2037 = vshrl.u32 %v2036, 7
        %v2038 = vsub.s32 1, %v2037
        %v2039 = vrot.slane %v1792, %v2038
        %v2040 = vlaneseq
        %v2041 = vshrl.u32 %v2040, 7
        %v2042 = vsub.s32 1, %v2041
        %v2043 = vrot.slane %v1796, %v2042
        %v2044 = vlaneseq
        %v2045 = vshrl.u32 %v2044, 7
        %v2046 = vsub.s32 1, %v2045
        %v2047 = vrot.slane %v1800, %v2046
        %v2048 = vlaneseq
        %v2049 = vshrl.u32 %v2048, 7
        %v2050 = vsub.s32 1, %v2049
        %v2051 = vrot.slane %v1804, %v2050
        %2053 = vset.pattern.permute.xlu0 0
        %2054 = vperm.xlu0 %2053, %v1812
        %v2055 = vpop.permute.xlu0 %2054
        %2058 = vset.pattern.permute.xlu0 0
        %2059 = vperm.xlu0 %2058, %v1813
        %v2060 = vpop.permute.xlu0 %2059
        %2063 = vset.pattern.permute.xlu0 0
        %2064 = vperm.xlu0 %2063, %v1814
        %v2065 = vpop.permute.xlu0 %2064
        %2068 = vset.pattern.permute.xlu0 0
        %2069 = vperm.xlu0 %2068, %v1815
        %v2070 = vpop.permute.xlu0 %2069
        %v2072 = vmul.f32 %v2023, %v2055
        %v2073 = vmul.f32 %v2023, %v2060
        %v2074 = vmul.f32 %v2023, %v2065
        %v2075 = vmul.f32 %v2023, %v2070
        %v2076 = vmul.f32 %v2027, %v2055
        %v2077 = vmul.f32 %v2027, %v2060
        %v2078 = vmul.f32 %v2027, %v2065
        %v2079 = vmul.f32 %v2027, %v2070
        %v2080 = vmul.f32 %v2031, %v2055
        %v2081 = vmul.f32 %v2031, %v2060
        %v2082 = vmul.f32 %v2031, %v2065
        %v2083 = vmul.f32 %v2031, %v2070
        %v2084 = vmul.f32 %v2035, %v2055
        %v2085 = vmul.f32 %v2035, %v2060
        %v2086 = vmul.f32 %v2035, %v2065
        %v2087 = vmul.f32 %v2035, %v2070
        %v2088 = vmul.f32 %v2039, %v2055
        %v2089 = vmul.f32 %v2039, %v2060
        %v2090 = vmul.f32 %v2039, %v2065
        %v2091 = vmul.f32 %v2039, %v2070
        %v2092 = vmul.f32 %v2043, %v2055
        %v2093 = vmul.f32 %v2043, %v2060
        %v2094 = vmul.f32 %v2043, %v2065
        %v2095 = vmul.f32 %v2043, %v2070
        %v2096 = vmul.f32 %v2047, %v2055
        %v2097 = vmul.f32 %v2047, %v2060
        %v2098 = vmul.f32 %v2047, %v2065
        %v2099 = vmul.f32 %v2047, %v2070
        %v2100 = vmul.f32 %v2051, %v2055
        %v2101 = vmul.f32 %v2051, %v2060
        %v2102 = vmul.f32 %v2051, %v2065
        %v2103 = vmul.f32 %v2051, %v2070
        %v2104 = vadd.f32 %v1988, %v2072
        %v2105 = vadd.f32 %v1989, %v2073
        %v2106 = vadd.f32 %v1990, %v2074
        %v2107 = vadd.f32 %v1991, %v2075
        %v2108 = vadd.f32 %v1992, %v2076
        %v2109 = vadd.f32 %v1993, %v2077
        %v2110 = vadd.f32 %v1994, %v2078
        %v2111 = vadd.f32 %v1995, %v2079
        %v2112 = vadd.f32 %v1996, %v2080
        %v2113 = vadd.f32 %v1997, %v2081
        %v2114 = vadd.f32 %v1998, %v2082
        %v2115 = vadd.f32 %v1999, %v2083
        %v2116 = vadd.f32 %v2000, %v2084
        %v2117 = vadd.f32 %v2001, %v2085
        %v2118 = vadd.f32 %v2002, %v2086
        %v2119 = vadd.f32 %v2003, %v2087
        %v2120 = vadd.f32 %v2004, %v2088
        %v2121 = vadd.f32 %v2005, %v2089
        %v2122 = vadd.f32 %v2006, %v2090
        %v2123 = vadd.f32 %v2007, %v2091
        %v2124 = vadd.f32 %v2008, %v2092
        %v2125 = vadd.f32 %v2009, %v2093
        %v2126 = vadd.f32 %v2010, %v2094
        %v2127 = vadd.f32 %v2011, %v2095
        %v2128 = vadd.f32 %v2012, %v2096
        %v2129 = vadd.f32 %v2013, %v2097
        %v2130 = vadd.f32 %v2014, %v2098
        %v2131 = vadd.f32 %v2015, %v2099
        %v2132 = vadd.f32 %v2016, %v2100
        %v2133 = vadd.f32 %v2017, %v2101
        %v2134 = vadd.f32 %v2018, %v2102
        %v2135 = vadd.f32 %v2019, %v2103
        %v2136 = vlaneseq
        %v2137 = vshrl.u32 %v2136, 7
        %v2138 = vsub.s32 2, %v2137
        %v2139 = vrot.slane %v1776, %v2138
        %v2140 = vlaneseq
        %v2141 = vshrl.u32 %v2140, 7
        %v2142 = vsub.s32 2, %v2141
        %v2143 = vrot.slane %v1780, %v2142
        %v2144 = vlaneseq
        %v2145 = vshrl.u32 %v2144, 7
        %v2146 = vsub.s32 2, %v2145
        %v2147 = vrot.slane %v1784, %v2146
        %v2148 = vlaneseq
        %v2149 = vshrl.u32 %v2148, 7
        %v2150 = vsub.s32 2, %v2149
        %v2151 = vrot.slane %v1788, %v2150
        %v2152 = vlaneseq
        %v2153 = vshrl.u32 %v2152, 7
        %v2154 = vsub.s32 2, %v2153
        %v2155 = vrot.slane %v1792, %v2154
        %v2156 = vlaneseq
        %v2157 = vshrl.u32 %v2156, 7
        %v2158 = vsub.s32 2, %v2157
        %v2159 = vrot.slane %v1796, %v2158
        %v2160 = vlaneseq
        %v2161 = vshrl.u32 %v2160, 7
        %v2162 = vsub.s32 2, %v2161
        %v2163 = vrot.slane %v1800, %v2162
        %v2164 = vlaneseq
        %v2165 = vshrl.u32 %v2164, 7
        %v2166 = vsub.s32 2, %v2165
        %v2167 = vrot.slane %v1804, %v2166
        %2169 = vset.pattern.permute.xlu0 0
        %2170 = vperm.xlu0 %2169, %v1816
        %v2171 = vpop.permute.xlu0 %2170
        %2174 = vset.pattern.permute.xlu0 0
        %2175 = vperm.xlu0 %2174, %v1817
        %v2176 = vpop.permute.xlu0 %2175
        %2179 = vset.pattern.permute.xlu0 0
        %2180 = vperm.xlu0 %2179, %v1818
        %v2181 = vpop.permute.xlu0 %2180
        %2184 = vset.pattern.permute.xlu0 0
        %2185 = vperm.xlu0 %2184, %v1819
        %v2186 = vpop.permute.xlu0 %2185
        %v2188 = vmul.f32 %v2139, %v2171
        %v2189 = vmul.f32 %v2139, %v2176
        %v2190 = vmul.f32 %v2139, %v2181
        %v2191 = vmul.f32 %v2139, %v2186
        %v2192 = vmul.f32 %v2143, %v2171
        %v2193 = vmul.f32 %v2143, %v2176
        %v2194 = vmul.f32 %v2143, %v2181
        %v2195 = vmul.f32 %v2143, %v2186
        %v2196 = vmul.f32 %v2147, %v2171
        %v2197 = vmul.f32 %v2147, %v2176
        %v2198 = vmul.f32 %v2147, %v2181
        %v2199 = vmul.f32 %v2147, %v2186
        %v2200 = vmul.f32 %v2151, %v2171
        %v2201 = vmul.f32 %v2151, %v2176
        %v2202 = vmul.f32 %v2151, %v2181
        %v2203 = vmul.f32 %v2151, %v2186
        %v2204 = vmul.f32 %v2155, %v2171
        %v2205 = vmul.f32 %v2155, %v2176
        %v2206 = vmul.f32 %v2155, %v2181
        %v2207 = vmul.f32 %v2155, %v2186
        %v2208 = vmul.f32 %v2159, %v2171
        %v2209 = vmul.f32 %v2159, %v2176
        %v2210 = vmul.f32 %v2159, %v2181
        %v2211 = vmul.f32 %v2159, %v2186
        %v2212 = vmul.f32 %v2163, %v2171
        %v2213 = vmul.f32 %v2163, %v2176
        %v2214 = vmul.f32 %v2163, %v2181
        %v2215 = vmul.f32 %v2163, %v2186
        %v2216 = vmul.f32 %v2167, %v2171
        %v2217 = vmul.f32 %v2167, %v2176
        %v2218 = vmul.f32 %v2167, %v2181
        %v2219 = vmul.f32 %v2167, %v2186
        %v2220 = vadd.f32 %v2104, %v2188
        %v2221 = vadd.f32 %v2105, %v2189
        %v2222 = vadd.f32 %v2106, %v2190
        %v2223 = vadd.f32 %v2107, %v2191
        %v2224 = vadd.f32 %v2108, %v2192
        %v2225 = vadd.f32 %v2109, %v2193
        %v2226 = vadd.f32 %v2110, %v2194
        %v2227 = vadd.f32 %v2111, %v2195
        %v2228 = vadd.f32 %v2112, %v2196
        %v2229 = vadd.f32 %v2113, %v2197
        %v2230 = vadd.f32 %v2114, %v2198
        %v2231 = vadd.f32 %v2115, %v2199
        %v2232 = vadd.f32 %v2116, %v2200
        %v2233 = vadd.f32 %v2117, %v2201
        %v2234 = vadd.f32 %v2118, %v2202
        %v2235 = vadd.f32 %v2119, %v2203
        %v2236 = vadd.f32 %v2120, %v2204
        %v2237 = vadd.f32 %v2121, %v2205
        %v2238 = vadd.f32 %v2122, %v2206
        %v2239 = vadd.f32 %v2123, %v2207
        %v2240 = vadd.f32 %v2124, %v2208
        %v2241 = vadd.f32 %v2125, %v2209
        %v2242 = vadd.f32 %v2126, %v2210
        %v2243 = vadd.f32 %v2127, %v2211
        %v2244 = vadd.f32 %v2128, %v2212
        %v2245 = vadd.f32 %v2129, %v2213
        %v2246 = vadd.f32 %v2130, %v2214
        %v2247 = vadd.f32 %v2131, %v2215
        %v2248 = vadd.f32 %v2132, %v2216
        %v2249 = vadd.f32 %v2133, %v2217
        %v2250 = vadd.f32 %v2134, %v2218
        %v2251 = vadd.f32 %v2135, %v2219
        %v2252 = vlaneseq
        %v2253 = vshrl.u32 %v2252, 7
        %v2254 = vsub.s32 3, %v2253
        %v2255 = vrot.slane %v1776, %v2254
        %v2256 = vlaneseq
        %v2257 = vshrl.u32 %v2256, 7
        %v2258 = vsub.s32 3, %v2257
        %v2259 = vrot.slane %v1780, %v2258
        %v2260 = vlaneseq
        %v2261 = vshrl.u32 %v2260, 7
        %v2262 = vsub.s32 3, %v2261
        %v2263 = vrot.slane %v1784, %v2262
        %v2264 = vlaneseq
        %v2265 = vshrl.u32 %v2264, 7
        %v2266 = vsub.s32 3, %v2265
        %v2267 = vrot.slane %v1788, %v2266
        %v2268 = vlaneseq
        %v2269 = vshrl.u32 %v2268, 7
        %v2270 = vsub.s32 3, %v2269
        %v2271 = vrot.slane %v1792, %v2270
        %v2272 = vlaneseq
        %v2273 = vshrl.u32 %v2272, 7
        %v2274 = vsub.s32 3, %v2273
        %v2275 = vrot.slane %v1796, %v2274
        %v2276 = vlaneseq
        %v2277 = vshrl.u32 %v2276, 7
        %v2278 = vsub.s32 3, %v2277
        %v2279 = vrot.slane %v1800, %v2278
        %v2280 = vlaneseq
        %v2281 = vshrl.u32 %v2280, 7
        %v2282 = vsub.s32 3, %v2281
        %v2283 = vrot.slane %v1804, %v2282
        %2285 = vset.pattern.permute.xlu0 0
        %2286 = vperm.xlu0 %2285, %v1820
        %v2287 = vpop.permute.xlu0 %2286
        %2290 = vset.pattern.permute.xlu0 0
        %2291 = vperm.xlu0 %2290, %v1821
        %v2292 = vpop.permute.xlu0 %2291
        %2295 = vset.pattern.permute.xlu0 0
        %2296 = vperm.xlu0 %2295, %v1822
        %v2297 = vpop.permute.xlu0 %2296
        %2300 = vset.pattern.permute.xlu0 0
        %2301 = vperm.xlu0 %2300, %v1823
        %v2302 = vpop.permute.xlu0 %2301
        %v2304 = vmul.f32 %v2255, %v2287
        %v2305 = vmul.f32 %v2255, %v2292
        %v2306 = vmul.f32 %v2255, %v2297
        %v2307 = vmul.f32 %v2255, %v2302
        %v2308 = vmul.f32 %v2259, %v2287
        %v2309 = vmul.f32 %v2259, %v2292
        %v2310 = vmul.f32 %v2259, %v2297
        %v2311 = vmul.f32 %v2259, %v2302
        %v2312 = vmul.f32 %v2263, %v2287
        %v2313 = vmul.f32 %v2263, %v2292
        %v2314 = vmul.f32 %v2263, %v2297
        %v2315 = vmul.f32 %v2263, %v2302
        %v2316 = vmul.f32 %v2267, %v2287
        %v2317 = vmul.f32 %v2267, %v2292
        %v2318 = vmul.f32 %v2267, %v2297
        %v2319 = vmul.f32 %v2267, %v2302
        %v2320 = vmul.f32 %v2271, %v2287
        %v2321 = vmul.f32 %v2271, %v2292
        %v2322 = vmul.f32 %v2271, %v2297
        %v2323 = vmul.f32 %v2271, %v2302
        %v2324 = vmul.f32 %v2275, %v2287
        %v2325 = vmul.f32 %v2275, %v2292
        %v2326 = vmul.f32 %v2275, %v2297
        %v2327 = vmul.f32 %v2275, %v2302
        %v2328 = vmul.f32 %v2279, %v2287
        %v2329 = vmul.f32 %v2279, %v2292
        %v2330 = vmul.f32 %v2279, %v2297
        %v2331 = vmul.f32 %v2279, %v2302
        %v2332 = vmul.f32 %v2283, %v2287
        %v2333 = vmul.f32 %v2283, %v2292
        %v2334 = vmul.f32 %v2283, %v2297
        %v2335 = vmul.f32 %v2283, %v2302
        %v2336 = vadd.f32 %v2220, %v2304
        %v2337 = vadd.f32 %v2221, %v2305
        %v2338 = vadd.f32 %v2222, %v2306
        %v2339 = vadd.f32 %v2223, %v2307
        %v2340 = vadd.f32 %v2224, %v2308
        %v2341 = vadd.f32 %v2225, %v2309
        %v2342 = vadd.f32 %v2226, %v2310
        %v2343 = vadd.f32 %v2227, %v2311
        %v2344 = vadd.f32 %v2228, %v2312
        %v2345 = vadd.f32 %v2229, %v2313
        %v2346 = vadd.f32 %v2230, %v2314
        %v2347 = vadd.f32 %v2231, %v2315
        %v2348 = vadd.f32 %v2232, %v2316
        %v2349 = vadd.f32 %v2233, %v2317
        %v2350 = vadd.f32 %v2234, %v2318
        %v2351 = vadd.f32 %v2235, %v2319
        %v2352 = vadd.f32 %v2236, %v2320
        %v2353 = vadd.f32 %v2237, %v2321
        %v2354 = vadd.f32 %v2238, %v2322
        %v2355 = vadd.f32 %v2239, %v2323
        %v2356 = vadd.f32 %v2240, %v2324
        %v2357 = vadd.f32 %v2241, %v2325
        %v2358 = vadd.f32 %v2242, %v2326
        %v2359 = vadd.f32 %v2243, %v2327
        %v2360 = vadd.f32 %v2244, %v2328
        %v2361 = vadd.f32 %v2245, %v2329
        %v2362 = vadd.f32 %v2246, %v2330
        %v2363 = vadd.f32 %v2247, %v2331
        %v2364 = vadd.f32 %v2248, %v2332
        %v2365 = vadd.f32 %v2249, %v2333
        %v2366 = vadd.f32 %v2250, %v2334
        %v2367 = vadd.f32 %v2251, %v2335
        %v2368 = vlaneseq
        %v2369 = vshrl.u32 %v2368, 7
        %v2370 = vsub.s32 4, %v2369
        %v2371 = vrot.slane %v1776, %v2370
        %v2372 = vlaneseq
        %v2373 = vshrl.u32 %v2372, 7
        %v2374 = vsub.s32 4, %v2373
        %v2375 = vrot.slane %v1780, %v2374
        %v2376 = vlaneseq
        %v2377 = vshrl.u32 %v2376, 7
        %v2378 = vsub.s32 4, %v2377
        %v2379 = vrot.slane %v1784, %v2378
        %v2380 = vlaneseq
        %v2381 = vshrl.u32 %v2380, 7
        %v2382 = vsub.s32 4, %v2381
        %v2383 = vrot.slane %v1788, %v2382
        %v2384 = vlaneseq
        %v2385 = vshrl.u32 %v2384, 7
        %v2386 = vsub.s32 4, %v2385
        %v2387 = vrot.slane %v1792, %v2386
        %v2388 = vlaneseq
        %v2389 = vshrl.u32 %v2388, 7
        %v2390 = vsub.s32 4, %v2389
        %v2391 = vrot.slane %v1796, %v2390
        %v2392 = vlaneseq
        %v2393 = vshrl.u32 %v2392, 7
        %v2394 = vsub.s32 4, %v2393
        %v2395 = vrot.slane %v1800, %v2394
        %v2396 = vlaneseq
        %v2397 = vshrl.u32 %v2396, 7
        %v2398 = vsub.s32 4, %v2397
        %v2399 = vrot.slane %v1804, %v2398
        %2401 = vset.pattern.permute.xlu0 0
        %2402 = vperm.xlu0 %2401, %v1824
        %v2403 = vpop.permute.xlu0 %2402
        %2406 = vset.pattern.permute.xlu0 0
        %2407 = vperm.xlu0 %2406, %v1825
        %v2408 = vpop.permute.xlu0 %2407
        %2411 = vset.pattern.permute.xlu0 0
        %2412 = vperm.xlu0 %2411, %v1826
        %v2413 = vpop.permute.xlu0 %2412
        %2416 = vset.pattern.permute.xlu0 0
        %2417 = vperm.xlu0 %2416, %v1827
        %v2418 = vpop.permute.xlu0 %2417
        %v2420 = vmul.f32 %v2371, %v2403
        %v2421 = vmul.f32 %v2371, %v2408
        %v2422 = vmul.f32 %v2371, %v2413
        %v2423 = vmul.f32 %v2371, %v2418
        %v2424 = vmul.f32 %v2375, %v2403
        %v2425 = vmul.f32 %v2375, %v2408
        %v2426 = vmul.f32 %v2375, %v2413
        %v2427 = vmul.f32 %v2375, %v2418
        %v2428 = vmul.f32 %v2379, %v2403
        %v2429 = vmul.f32 %v2379, %v2408
        %v2430 = vmul.f32 %v2379, %v2413
        %v2431 = vmul.f32 %v2379, %v2418
        %v2432 = vmul.f32 %v2383, %v2403
        %v2433 = vmul.f32 %v2383, %v2408
        %v2434 = vmul.f32 %v2383, %v2413
        %v2435 = vmul.f32 %v2383, %v2418
        %v2436 = vmul.f32 %v2387, %v2403
        %v2437 = vmul.f32 %v2387, %v2408
        %v2438 = vmul.f32 %v2387, %v2413
        %v2439 = vmul.f32 %v2387, %v2418
        %v2440 = vmul.f32 %v2391, %v2403
        %v2441 = vmul.f32 %v2391, %v2408
        %v2442 = vmul.f32 %v2391, %v2413
        %v2443 = vmul.f32 %v2391, %v2418
        %v2444 = vmul.f32 %v2395, %v2403
        %v2445 = vmul.f32 %v2395, %v2408
        %v2446 = vmul.f32 %v2395, %v2413
        %v2447 = vmul.f32 %v2395, %v2418
        %v2448 = vmul.f32 %v2399, %v2403
        %v2449 = vmul.f32 %v2399, %v2408
        %v2450 = vmul.f32 %v2399, %v2413
        %v2451 = vmul.f32 %v2399, %v2418
        %v2452 = vadd.f32 %v2336, %v2420
        %v2453 = vadd.f32 %v2337, %v2421
        %v2454 = vadd.f32 %v2338, %v2422
        %v2455 = vadd.f32 %v2339, %v2423
        %v2456 = vadd.f32 %v2340, %v2424
        %v2457 = vadd.f32 %v2341, %v2425
        %v2458 = vadd.f32 %v2342, %v2426
        %v2459 = vadd.f32 %v2343, %v2427
        %v2460 = vadd.f32 %v2344, %v2428
        %v2461 = vadd.f32 %v2345, %v2429
        %v2462 = vadd.f32 %v2346, %v2430
        %v2463 = vadd.f32 %v2347, %v2431
        %v2464 = vadd.f32 %v2348, %v2432
        %v2465 = vadd.f32 %v2349, %v2433
        %v2466 = vadd.f32 %v2350, %v2434
        %v2467 = vadd.f32 %v2351, %v2435
        %v2468 = vadd.f32 %v2352, %v2436
        %v2469 = vadd.f32 %v2353, %v2437
        %v2470 = vadd.f32 %v2354, %v2438
        %v2471 = vadd.f32 %v2355, %v2439
        %v2472 = vadd.f32 %v2356, %v2440
        %v2473 = vadd.f32 %v2357, %v2441
        %v2474 = vadd.f32 %v2358, %v2442
        %v2475 = vadd.f32 %v2359, %v2443
        %v2476 = vadd.f32 %v2360, %v2444
        %v2477 = vadd.f32 %v2361, %v2445
        %v2478 = vadd.f32 %v2362, %v2446
        %v2479 = vadd.f32 %v2363, %v2447
        %v2480 = vadd.f32 %v2364, %v2448
        %v2481 = vadd.f32 %v2365, %v2449
        %v2482 = vadd.f32 %v2366, %v2450
        %v2483 = vadd.f32 %v2367, %v2451
        %v2484 = vlaneseq
        %v2485 = vshrl.u32 %v2484, 7
        %v2486 = vsub.s32 5, %v2485
        %v2487 = vrot.slane %v1776, %v2486
        %v2488 = vlaneseq
        %v2489 = vshrl.u32 %v2488, 7
        %v2490 = vsub.s32 5, %v2489
        %v2491 = vrot.slane %v1780, %v2490
        %v2492 = vlaneseq
        %v2493 = vshrl.u32 %v2492, 7
        %v2494 = vsub.s32 5, %v2493
        %v2495 = vrot.slane %v1784, %v2494
        %v2496 = vlaneseq
        %v2497 = vshrl.u32 %v2496, 7
        %v2498 = vsub.s32 5, %v2497
        %v2499 = vrot.slane %v1788, %v2498
        %v2500 = vlaneseq
        %v2501 = vshrl.u32 %v2500, 7
        %v2502 = vsub.s32 5, %v2501
        %v2503 = vrot.slane %v1792, %v2502
        %v2504 = vlaneseq
        %v2505 = vshrl.u32 %v2504, 7
        %v2506 = vsub.s32 5, %v2505
        %v2507 = vrot.slane %v1796, %v2506
        %v2508 = vlaneseq
        %v2509 = vshrl.u32 %v2508, 7
        %v2510 = vsub.s32 5, %v2509
        %v2511 = vrot.slane %v1800, %v2510
        %v2512 = vlaneseq
        %v2513 = vshrl.u32 %v2512, 7
        %v2514 = vsub.s32 5, %v2513
        %v2515 = vrot.slane %v1804, %v2514
        %2517 = vset.pattern.permute.xlu0 0
        %2518 = vperm.xlu0 %2517, %v1828
        %v2519 = vpop.permute.xlu0 %2518
        %2522 = vset.pattern.permute.xlu0 0
        %2523 = vperm.xlu0 %2522, %v1829
        %v2524 = vpop.permute.xlu0 %2523
        %2527 = vset.pattern.permute.xlu0 0
        %2528 = vperm.xlu0 %2527, %v1830
        %v2529 = vpop.permute.xlu0 %2528
        %2532 = vset.pattern.permute.xlu0 0
        %2533 = vperm.xlu0 %2532, %v1831
        %v2534 = vpop.permute.xlu0 %2533
        %v2536 = vmul.f32 %v2487, %v2519
        %v2537 = vmul.f32 %v2487, %v2524
        %v2538 = vmul.f32 %v2487, %v2529
        %v2539 = vmul.f32 %v2487, %v2534
        %v2540 = vmul.f32 %v2491, %v2519
        %v2541 = vmul.f32 %v2491, %v2524
        %v2542 = vmul.f32 %v2491, %v2529
        %v2543 = vmul.f32 %v2491, %v2534
        %v2544 = vmul.f32 %v2495, %v2519
        %v2545 = vmul.f32 %v2495, %v2524
        %v2546 = vmul.f32 %v2495, %v2529
        %v2547 = vmul.f32 %v2495, %v2534
        %v2548 = vmul.f32 %v2499, %v2519
        %v2549 = vmul.f32 %v2499, %v2524
        %v2550 = vmul.f32 %v2499, %v2529
        %v2551 = vmul.f32 %v2499, %v2534
        %v2552 = vmul.f32 %v2503, %v2519
        %v2553 = vmul.f32 %v2503, %v2524
        %v2554 = vmul.f32 %v2503, %v2529
        %v2555 = vmul.f32 %v2503, %v2534
        %v2556 = vmul.f32 %v2507, %v2519
        %v2557 = vmul.f32 %v2507, %v2524
        %v2558 = vmul.f32 %v2507, %v2529
        %v2559 = vmul.f32 %v2507, %v2534
        %v2560 = vmul.f32 %v2511, %v2519
        %v2561 = vmul.f32 %v2511, %v2524
        %v2562 = vmul.f32 %v2511, %v2529
        %v2563 = vmul.f32 %v2511, %v2534
        %v2564 = vmul.f32 %v2515, %v2519
        %v2565 = vmul.f32 %v2515, %v2524
        %v2566 = vmul.f32 %v2515, %v2529
        %v2567 = vmul.f32 %v2515, %v2534
        %v2568 = vadd.f32 %v2452, %v2536
        %v2569 = vadd.f32 %v2453, %v2537
        %v2570 = vadd.f32 %v2454, %v2538
        %v2571 = vadd.f32 %v2455, %v2539
        %v2572 = vadd.f32 %v2456, %v2540
        %v2573 = vadd.f32 %v2457, %v2541
        %v2574 = vadd.f32 %v2458, %v2542
        %v2575 = vadd.f32 %v2459, %v2543
        %v2576 = vadd.f32 %v2460, %v2544
        %v2577 = vadd.f32 %v2461, %v2545
        %v2578 = vadd.f32 %v2462, %v2546
        %v2579 = vadd.f32 %v2463, %v2547
        %v2580 = vadd.f32 %v2464, %v2548
        %v2581 = vadd.f32 %v2465, %v2549
        %v2582 = vadd.f32 %v2466, %v2550
        %v2583 = vadd.f32 %v2467, %v2551
        %v2584 = vadd.f32 %v2468, %v2552
        %v2585 = vadd.f32 %v2469, %v2553
        %v2586 = vadd.f32 %v2470, %v2554
        %v2587 = vadd.f32 %v2471, %v2555
        %v2588 = vadd.f32 %v2472, %v2556
        %v2589 = vadd.f32 %v2473, %v2557
        %v2590 = vadd.f32 %v2474, %v2558
        %v2591 = vadd.f32 %v2475, %v2559
        %v2592 = vadd.f32 %v2476, %v2560
        %v2593 = vadd.f32 %v2477, %v2561
        %v2594 = vadd.f32 %v2478, %v2562
        %v2595 = vadd.f32 %v2479, %v2563
        %v2596 = vadd.f32 %v2480, %v2564
        %v2597 = vadd.f32 %v2481, %v2565
        %v2598 = vadd.f32 %v2482, %v2566
        %v2599 = vadd.f32 %v2483, %v2567
        %v2600 = vlaneseq
        %v2601 = vshrl.u32 %v2600, 7
        %v2602 = vsub.s32 6, %v2601
        %v2603 = vrot.slane %v1776, %v2602
        %v2604 = vlaneseq
        %v2605 = vshrl.u32 %v2604, 7
        %v2606 = vsub.s32 6, %v2605
        %v2607 = vrot.slane %v1780, %v2606
        %v2608 = vlaneseq
        %v2609 = vshrl.u32 %v2608, 7
        %v2610 = vsub.s32 6, %v2609
        %v2611 = vrot.slane %v1784, %v2610
        %v2612 = vlaneseq
        %v2613 = vshrl.u32 %v2612, 7
        %v2614 = vsub.s32 6, %v2613
        %v2615 = vrot.slane %v1788, %v2614
        %v2616 = vlaneseq
        %v2617 = vshrl.u32 %v2616, 7
        %v2618 = vsub.s32 6, %v2617
        %v2619 = vrot.slane %v1792, %v2618
        %v2620 = vlaneseq
        %v2621 = vshrl.u32 %v2620, 7
        %v2622 = vsub.s32 6, %v2621
        %v2623 = vrot.slane %v1796, %v2622
        %v2624 = vlaneseq
        %v2625 = vshrl.u32 %v2624, 7
        %v2626 = vsub.s32 6, %v2625
        %v2627 = vrot.slane %v1800, %v2626
        %v2628 = vlaneseq
        %v2629 = vshrl.u32 %v2628, 7
        %v2630 = vsub.s32 6, %v2629
        %v2631 = vrot.slane %v1804, %v2630
        %2633 = vset.pattern.permute.xlu0 0
        %2634 = vperm.xlu0 %2633, %v1832
        %v2635 = vpop.permute.xlu0 %2634
        %2638 = vset.pattern.permute.xlu0 0
        %2639 = vperm.xlu0 %2638, %v1833
        %v2640 = vpop.permute.xlu0 %2639
        %2643 = vset.pattern.permute.xlu0 0
        %2644 = vperm.xlu0 %2643, %v1834
        %v2645 = vpop.permute.xlu0 %2644
        %2648 = vset.pattern.permute.xlu0 0
        %2649 = vperm.xlu0 %2648, %v1835
        %v2650 = vpop.permute.xlu0 %2649
        %v2652 = vmul.f32 %v2603, %v2635
        %v2653 = vmul.f32 %v2603, %v2640
        %v2654 = vmul.f32 %v2603, %v2645
        %v2655 = vmul.f32 %v2603, %v2650
        %v2656 = vmul.f32 %v2607, %v2635
        %v2657 = vmul.f32 %v2607, %v2640
        %v2658 = vmul.f32 %v2607, %v2645
        %v2659 = vmul.f32 %v2607, %v2650
        %v2660 = vmul.f32 %v2611, %v2635
        %v2661 = vmul.f32 %v2611, %v2640
        %v2662 = vmul.f32 %v2611, %v2645
        %v2663 = vmul.f32 %v2611, %v2650
        %v2664 = vmul.f32 %v2615, %v2635
        %v2665 = vmul.f32 %v2615, %v2640
        %v2666 = vmul.f32 %v2615, %v2645
        %v2667 = vmul.f32 %v2615, %v2650
        %v2668 = vmul.f32 %v2619, %v2635
        %v2669 = vmul.f32 %v2619, %v2640
        %v2670 = vmul.f32 %v2619, %v2645
        %v2671 = vmul.f32 %v2619, %v2650
        %v2672 = vmul.f32 %v2623, %v2635
        %v2673 = vmul.f32 %v2623, %v2640
        %v2674 = vmul.f32 %v2623, %v2645
        %v2675 = vmul.f32 %v2623, %v2650
        %v2676 = vmul.f32 %v2627, %v2635
        %v2677 = vmul.f32 %v2627, %v2640
        %v2678 = vmul.f32 %v2627, %v2645
        %v2679 = vmul.f32 %v2627, %v2650
        %v2680 = vmul.f32 %v2631, %v2635
        %v2681 = vmul.f32 %v2631, %v2640
        %v2682 = vmul.f32 %v2631, %v2645
        %v2683 = vmul.f32 %v2631, %v2650
        %v2684 = vadd.f32 %v2568, %v2652
        %v2685 = vadd.f32 %v2569, %v2653
        %v2686 = vadd.f32 %v2570, %v2654
        %v2687 = vadd.f32 %v2571, %v2655
        %v2688 = vadd.f32 %v2572, %v2656
        %v2689 = vadd.f32 %v2573, %v2657
        %v2690 = vadd.f32 %v2574, %v2658
        %v2691 = vadd.f32 %v2575, %v2659
        %v2692 = vadd.f32 %v2576, %v2660
        %v2693 = vadd.f32 %v2577, %v2661
        %v2694 = vadd.f32 %v2578, %v2662
        %v2695 = vadd.f32 %v2579, %v2663
        %v2696 = vadd.f32 %v2580, %v2664
        %v2697 = vadd.f32 %v2581, %v2665
        %v2698 = vadd.f32 %v2582, %v2666
        %v2699 = vadd.f32 %v2583, %v2667
        %v2700 = vadd.f32 %v2584, %v2668
        %v2701 = vadd.f32 %v2585, %v2669
        %v2702 = vadd.f32 %v2586, %v2670
        %v2703 = vadd.f32 %v2587, %v2671
        %v2704 = vadd.f32 %v2588, %v2672
        %v2705 = vadd.f32 %v2589, %v2673
        %v2706 = vadd.f32 %v2590, %v2674
        %v2707 = vadd.f32 %v2591, %v2675
        %v2708 = vadd.f32 %v2592, %v2676
        %v2709 = vadd.f32 %v2593, %v2677
        %v2710 = vadd.f32 %v2594, %v2678
        %v2711 = vadd.f32 %v2595, %v2679
        %v2712 = vadd.f32 %v2596, %v2680
        %v2713 = vadd.f32 %v2597, %v2681
        %v2714 = vadd.f32 %v2598, %v2682
        %v2715 = vadd.f32 %v2599, %v2683
        %v2716 = vlaneseq
        %v2717 = vshrl.u32 %v2716, 7
        %v2718 = vsub.s32 7, %v2717
        %v2719 = vrot.slane %v1776, %v2718
        %v2720 = vlaneseq
        %v2721 = vshrl.u32 %v2720, 7
        %v2722 = vsub.s32 7, %v2721
        %v2723 = vrot.slane %v1780, %v2722
        %v2724 = vlaneseq
        %v2725 = vshrl.u32 %v2724, 7
        %v2726 = vsub.s32 7, %v2725
        %v2727 = vrot.slane %v1784, %v2726
        %v2728 = vlaneseq
        %v2729 = vshrl.u32 %v2728, 7
        %v2730 = vsub.s32 7, %v2729
        %v2731 = vrot.slane %v1788, %v2730
        %v2732 = vlaneseq
        %v2733 = vshrl.u32 %v2732, 7
        %v2734 = vsub.s32 7, %v2733
        %v2735 = vrot.slane %v1792, %v2734
        %v2736 = vlaneseq
        %v2737 = vshrl.u32 %v2736, 7
        %v2738 = vsub.s32 7, %v2737
        %v2739 = vrot.slane %v1796, %v2738
        %v2740 = vlaneseq
        %v2741 = vshrl.u32 %v2740, 7
        %v2742 = vsub.s32 7, %v2741
        %v2743 = vrot.slane %v1800, %v2742
        %v2744 = vlaneseq
        %v2745 = vshrl.u32 %v2744, 7
        %v2746 = vsub.s32 7, %v2745
        %v2747 = vrot.slane %v1804, %v2746
        %2749 = vset.pattern.permute.xlu0 0
        %2750 = vperm.xlu0 %2749, %v1836
        %v2751 = vpop.permute.xlu0 %2750
        %2754 = vset.pattern.permute.xlu0 0
        %2755 = vperm.xlu0 %2754, %v1837
        %v2756 = vpop.permute.xlu0 %2755
        %2759 = vset.pattern.permute.xlu0 0
        %2760 = vperm.xlu0 %2759, %v1838
        %v2761 = vpop.permute.xlu0 %2760
        %2764 = vset.pattern.permute.xlu0 0
        %2765 = vperm.xlu0 %2764, %v1839
        %v2766 = vpop.permute.xlu0 %2765
        %v2768 = vmul.f32 %v2719, %v2751
        %v2769 = vmul.f32 %v2719, %v2756
        %v2770 = vmul.f32 %v2719, %v2761
        %v2771 = vmul.f32 %v2719, %v2766
        %v2772 = vmul.f32 %v2723, %v2751
        %v2773 = vmul.f32 %v2723, %v2756
        %v2774 = vmul.f32 %v2723, %v2761
        %v2775 = vmul.f32 %v2723, %v2766
        %v2776 = vmul.f32 %v2727, %v2751
        %v2777 = vmul.f32 %v2727, %v2756
        %v2778 = vmul.f32 %v2727, %v2761
        %v2779 = vmul.f32 %v2727, %v2766
        %v2780 = vmul.f32 %v2731, %v2751
        %v2781 = vmul.f32 %v2731, %v2756
        %v2782 = vmul.f32 %v2731, %v2761
        %v2783 = vmul.f32 %v2731, %v2766
        %v2784 = vmul.f32 %v2735, %v2751
        %v2785 = vmul.f32 %v2735, %v2756
        %v2786 = vmul.f32 %v2735, %v2761
        %v2787 = vmul.f32 %v2735, %v2766
        %v2788 = vmul.f32 %v2739, %v2751
        %v2789 = vmul.f32 %v2739, %v2756
        %v2790 = vmul.f32 %v2739, %v2761
        %v2791 = vmul.f32 %v2739, %v2766
        %v2792 = vmul.f32 %v2743, %v2751
        %v2793 = vmul.f32 %v2743, %v2756
        %v2794 = vmul.f32 %v2743, %v2761
        %v2795 = vmul.f32 %v2743, %v2766
        %v2796 = vmul.f32 %v2747, %v2751
        %v2797 = vmul.f32 %v2747, %v2756
        %v2798 = vmul.f32 %v2747, %v2761
        %v2799 = vmul.f32 %v2747, %v2766
        %v2800 = vadd.f32 %v2684, %v2768
        %v2801 = vadd.f32 %v2685, %v2769
        %v2802 = vadd.f32 %v2686, %v2770
        %v2803 = vadd.f32 %v2687, %v2771
        %v2804 = vadd.f32 %v2688, %v2772
        %v2805 = vadd.f32 %v2689, %v2773
        %v2806 = vadd.f32 %v2690, %v2774
        %v2807 = vadd.f32 %v2691, %v2775
        %v2808 = vadd.f32 %v2692, %v2776
        %v2809 = vadd.f32 %v2693, %v2777
        %v2810 = vadd.f32 %v2694, %v2778
        %v2811 = vadd.f32 %v2695, %v2779
        %v2812 = vadd.f32 %v2696, %v2780
        %v2813 = vadd.f32 %v2697, %v2781
        %v2814 = vadd.f32 %v2698, %v2782
        %v2815 = vadd.f32 %v2699, %v2783
        %v2816 = vadd.f32 %v2700, %v2784
        %v2817 = vadd.f32 %v2701, %v2785
        %v2818 = vadd.f32 %v2702, %v2786
        %v2819 = vadd.f32 %v2703, %v2787
        %v2820 = vadd.f32 %v2704, %v2788
        %v2821 = vadd.f32 %v2705, %v2789
        %v2822 = vadd.f32 %v2706, %v2790
        %v2823 = vadd.f32 %v2707, %v2791
        %v2824 = vadd.f32 %v2708, %v2792
        %v2825 = vadd.f32 %v2709, %v2793
        %v2826 = vadd.f32 %v2710, %v2794
        %v2827 = vadd.f32 %v2711, %v2795
        %v2828 = vadd.f32 %v2712, %v2796
        %v2829 = vadd.f32 %v2713, %v2797
        %v2830 = vadd.f32 %v2714, %v2798
        %v2831 = vadd.f32 %v2715, %v2799
        %v2832 = vlaneseq
        %v2833 = vshrl.u32 %v2832, 7
        %v2834 = vsub.s32 0, %v2833
        %v2835 = vrot.slane %v1777, %v2834
        %v2836 = vlaneseq
        %v2837 = vshrl.u32 %v2836, 7
        %v2838 = vsub.s32 0, %v2837
        %v2839 = vrot.slane %v1781, %v2838
        %v2840 = vlaneseq
        %v2841 = vshrl.u32 %v2840, 7
        %v2842 = vsub.s32 0, %v2841
        %v2843 = vrot.slane %v1785, %v2842
        %v2844 = vlaneseq
        %v2845 = vshrl.u32 %v2844, 7
        %v2846 = vsub.s32 0, %v2845
        %v2847 = vrot.slane %v1789, %v2846
        %v2848 = vlaneseq
        %v2849 = vshrl.u32 %v2848, 7
        %v2850 = vsub.s32 0, %v2849
        %v2851 = vrot.slane %v1793, %v2850
        %v2852 = vlaneseq
        %v2853 = vshrl.u32 %v2852, 7
        %v2854 = vsub.s32 0, %v2853
        %v2855 = vrot.slane %v1797, %v2854
        %v2856 = vlaneseq
        %v2857 = vshrl.u32 %v2856, 7
        %v2858 = vsub.s32 0, %v2857
        %v2859 = vrot.slane %v1801, %v2858
        %v2860 = vlaneseq
        %v2861 = vshrl.u32 %v2860, 7
        %v2862 = vsub.s32 0, %v2861
        %v2863 = vrot.slane %v1805, %v2862
        %2865 = vset.pattern.permute.xlu0 0
        %2866 = vperm.xlu0 %2865, %v1840
        %v2867 = vpop.permute.xlu0 %2866
        %2870 = vset.pattern.permute.xlu0 0
        %2871 = vperm.xlu0 %2870, %v1841
        %v2872 = vpop.permute.xlu0 %2871
        %2875 = vset.pattern.permute.xlu0 0
        %2876 = vperm.xlu0 %2875, %v1842
        %v2877 = vpop.permute.xlu0 %2876
        %2880 = vset.pattern.permute.xlu0 0
        %2881 = vperm.xlu0 %2880, %v1843
        %v2882 = vpop.permute.xlu0 %2881
        %v2884 = vmul.f32 %v2835, %v2867
        %v2885 = vmul.f32 %v2835, %v2872
        %v2886 = vmul.f32 %v2835, %v2877
        %v2887 = vmul.f32 %v2835, %v2882
        %v2888 = vmul.f32 %v2839, %v2867
        %v2889 = vmul.f32 %v2839, %v2872
        %v2890 = vmul.f32 %v2839, %v2877
        %v2891 = vmul.f32 %v2839, %v2882
        %v2892 = vmul.f32 %v2843, %v2867
        %v2893 = vmul.f32 %v2843, %v2872
        %v2894 = vmul.f32 %v2843, %v2877
        %v2895 = vmul.f32 %v2843, %v2882
        %v2896 = vmul.f32 %v2847, %v2867
        %v2897 = vmul.f32 %v2847, %v2872
        %v2898 = vmul.f32 %v2847, %v2877
        %v2899 = vmul.f32 %v2847, %v2882
        %v2900 = vmul.f32 %v2851, %v2867
        %v2901 = vmul.f32 %v2851, %v2872
        %v2902 = vmul.f32 %v2851, %v2877
        %v2903 = vmul.f32 %v2851, %v2882
        %v2904 = vmul.f32 %v2855, %v2867
        %v2905 = vmul.f32 %v2855, %v2872
        %v2906 = vmul.f32 %v2855, %v2877
        %v2907 = vmul.f32 %v2855, %v2882
        %v2908 = vmul.f32 %v2859, %v2867
        %v2909 = vmul.f32 %v2859, %v2872
        %v2910 = vmul.f32 %v2859, %v2877
        %v2911 = vmul.f32 %v2859, %v2882
        %v2912 = vmul.f32 %v2863, %v2867
        %v2913 = vmul.f32 %v2863, %v2872
        %v2914 = vmul.f32 %v2863, %v2877
        %v2915 = vmul.f32 %v2863, %v2882
        %v2916 = vadd.f32 %v2800, %v2884
        %v2917 = vadd.f32 %v2801, %v2885
        %v2918 = vadd.f32 %v2802, %v2886
        %v2919 = vadd.f32 %v2803, %v2887
        %v2920 = vadd.f32 %v2804, %v2888
        %v2921 = vadd.f32 %v2805, %v2889
        %v2922 = vadd.f32 %v2806, %v2890
        %v2923 = vadd.f32 %v2807, %v2891
        %v2924 = vadd.f32 %v2808, %v2892
        %v2925 = vadd.f32 %v2809, %v2893
        %v2926 = vadd.f32 %v2810, %v2894
        %v2927 = vadd.f32 %v2811, %v2895
        %v2928 = vadd.f32 %v2812, %v2896
        %v2929 = vadd.f32 %v2813, %v2897
        %v2930 = vadd.f32 %v2814, %v2898
        %v2931 = vadd.f32 %v2815, %v2899
        %v2932 = vadd.f32 %v2816, %v2900
        %v2933 = vadd.f32 %v2817, %v2901
        %v2934 = vadd.f32 %v2818, %v2902
        %v2935 = vadd.f32 %v2819, %v2903
        %v2936 = vadd.f32 %v2820, %v2904
        %v2937 = vadd.f32 %v2821, %v2905
        %v2938 = vadd.f32 %v2822, %v2906
        %v2939 = vadd.f32 %v2823, %v2907
        %v2940 = vadd.f32 %v2824, %v2908
        %v2941 = vadd.f32 %v2825, %v2909
        %v2942 = vadd.f32 %v2826, %v2910
        %v2943 = vadd.f32 %v2827, %v2911
        %v2944 = vadd.f32 %v2828, %v2912
        %v2945 = vadd.f32 %v2829, %v2913
        %v2946 = vadd.f32 %v2830, %v2914
        %v2947 = vadd.f32 %v2831, %v2915
        %v2948 = vlaneseq
        %v2949 = vshrl.u32 %v2948, 7
        %v2950 = vsub.s32 1, %v2949
        %v2951 = vrot.slane %v1777, %v2950
        %v2952 = vlaneseq
        %v2953 = vshrl.u32 %v2952, 7
        %v2954 = vsub.s32 1, %v2953
        %v2955 = vrot.slane %v1781, %v2954
        %v2956 = vlaneseq
        %v2957 = vshrl.u32 %v2956, 7
        %v2958 = vsub.s32 1, %v2957
        %v2959 = vrot.slane %v1785, %v2958
        %v2960 = vlaneseq
        %v2961 = vshrl.u32 %v2960, 7
        %v2962 = vsub.s32 1, %v2961
        %v2963 = vrot.slane %v1789, %v2962
        %v2964 = vlaneseq
        %v2965 = vshrl.u32 %v2964, 7
        %v2966 = vsub.s32 1, %v2965
        %v2967 = vrot.slane %v1793, %v2966
        %v2968 = vlaneseq
        %v2969 = vshrl.u32 %v2968, 7
        %v2970 = vsub.s32 1, %v2969
        %v2971 = vrot.slane %v1797, %v2970
        %v2972 = vlaneseq
        %v2973 = vshrl.u32 %v2972, 7
        %v2974 = vsub.s32 1, %v2973
        %v2975 = vrot.slane %v1801, %v2974
        %v2976 = vlaneseq
        %v2977 = vshrl.u32 %v2976, 7
        %v2978 = vsub.s32 1, %v2977
        %v2979 = vrot.slane %v1805, %v2978
        %2981 = vset.pattern.permute.xlu0 0
        %2982 = vperm.xlu0 %2981, %v1844
        %v2983 = vpop.permute.xlu0 %2982
        %2986 = vset.pattern.permute.xlu0 0
        %2987 = vperm.xlu0 %2986, %v1845
        %v2988 = vpop.permute.xlu0 %2987
        %2991 = vset.pattern.permute.xlu0 0
        %2992 = vperm.xlu0 %2991, %v1846
        %v2993 = vpop.permute.xlu0 %2992
        %2996 = vset.pattern.permute.xlu0 0
        %2997 = vperm.xlu0 %2996, %v1847
        %v2998 = vpop.permute.xlu0 %2997
        %v3000 = vmul.f32 %v2951, %v2983
        %v3001 = vmul.f32 %v2951, %v2988
        %v3002 = vmul.f32 %v2951, %v2993
        %v3003 = vmul.f32 %v2951, %v2998
        %v3004 = vmul.f32 %v2955, %v2983
        %v3005 = vmul.f32 %v2955, %v2988
        %v3006 = vmul.f32 %v2955, %v2993
        %v3007 = vmul.f32 %v2955, %v2998
        %v3008 = vmul.f32 %v2959, %v2983
        %v3009 = vmul.f32 %v2959, %v2988
        %v3010 = vmul.f32 %v2959, %v2993
        %v3011 = vmul.f32 %v2959, %v2998
        %v3012 = vmul.f32 %v2963, %v2983
        %v3013 = vmul.f32 %v2963, %v2988
        %v3014 = vmul.f32 %v2963, %v2993
        %v3015 = vmul.f32 %v2963, %v2998
        %v3016 = vmul.f32 %v2967, %v2983
        %v3017 = vmul.f32 %v2967, %v2988
        %v3018 = vmul.f32 %v2967, %v2993
        %v3019 = vmul.f32 %v2967, %v2998
        %v3020 = vmul.f32 %v2971, %v2983
        %v3021 = vmul.f32 %v2971, %v2988
        %v3022 = vmul.f32 %v2971, %v2993
        %v3023 = vmul.f32 %v2971, %v2998
        %v3024 = vmul.f32 %v2975, %v2983
        %v3025 = vmul.f32 %v2975, %v2988
        %v3026 = vmul.f32 %v2975, %v2993
        %v3027 = vmul.f32 %v2975, %v2998
        %v3028 = vmul.f32 %v2979, %v2983
        %v3029 = vmul.f32 %v2979, %v2988
        %v3030 = vmul.f32 %v2979, %v2993
        %v3031 = vmul.f32 %v2979, %v2998
        %v3032 = vadd.f32 %v2916, %v3000
        %v3033 = vadd.f32 %v2917, %v3001
        %v3034 = vadd.f32 %v2918, %v3002
        %v3035 = vadd.f32 %v2919, %v3003
        %v3036 = vadd.f32 %v2920, %v3004
        %v3037 = vadd.f32 %v2921, %v3005
        %v3038 = vadd.f32 %v2922, %v3006
        %v3039 = vadd.f32 %v2923, %v3007
        %v3040 = vadd.f32 %v2924, %v3008
        %v3041 = vadd.f32 %v2925, %v3009
        %v3042 = vadd.f32 %v2926, %v3010
        %v3043 = vadd.f32 %v2927, %v3011
        %v3044 = vadd.f32 %v2928, %v3012
        %v3045 = vadd.f32 %v2929, %v3013
        %v3046 = vadd.f32 %v2930, %v3014
        %v3047 = vadd.f32 %v2931, %v3015
        %v3048 = vadd.f32 %v2932, %v3016
        %v3049 = vadd.f32 %v2933, %v3017
        %v3050 = vadd.f32 %v2934, %v3018
        %v3051 = vadd.f32 %v2935, %v3019
        %v3052 = vadd.f32 %v2936, %v3020
        %v3053 = vadd.f32 %v2937, %v3021
        %v3054 = vadd.f32 %v2938, %v3022
        %v3055 = vadd.f32 %v2939, %v3023
        %v3056 = vadd.f32 %v2940, %v3024
        %v3057 = vadd.f32 %v2941, %v3025
        %v3058 = vadd.f32 %v2942, %v3026
        %v3059 = vadd.f32 %v2943, %v3027
        %v3060 = vadd.f32 %v2944, %v3028
        %v3061 = vadd.f32 %v2945, %v3029
        %v3062 = vadd.f32 %v2946, %v3030
        %v3063 = vadd.f32 %v2947, %v3031
        %v3064 = vlaneseq
        %v3065 = vshrl.u32 %v3064, 7
        %v3066 = vsub.s32 2, %v3065
        %v3067 = vrot.slane %v1777, %v3066
        %v3068 = vlaneseq
        %v3069 = vshrl.u32 %v3068, 7
        %v3070 = vsub.s32 2, %v3069
        %v3071 = vrot.slane %v1781, %v3070
        %v3072 = vlaneseq
        %v3073 = vshrl.u32 %v3072, 7
        %v3074 = vsub.s32 2, %v3073
        %v3075 = vrot.slane %v1785, %v3074
        %v3076 = vlaneseq
        %v3077 = vshrl.u32 %v3076, 7
        %v3078 = vsub.s32 2, %v3077
        %v3079 = vrot.slane %v1789, %v3078
        %v3080 = vlaneseq
        %v3081 = vshrl.u32 %v3080, 7
        %v3082 = vsub.s32 2, %v3081
        %v3083 = vrot.slane %v1793, %v3082
        %v3084 = vlaneseq
        %v3085 = vshrl.u32 %v3084, 7
        %v3086 = vsub.s32 2, %v3085
        %v3087 = vrot.slane %v1797, %v3086
        %v3088 = vlaneseq
        %v3089 = vshrl.u32 %v3088, 7
        %v3090 = vsub.s32 2, %v3089
        %v3091 = vrot.slane %v1801, %v3090
        %v3092 = vlaneseq
        %v3093 = vshrl.u32 %v3092, 7
        %v3094 = vsub.s32 2, %v3093
        %v3095 = vrot.slane %v1805, %v3094
        %3097 = vset.pattern.permute.xlu0 0
        %3098 = vperm.xlu0 %3097, %v1848
        %v3099 = vpop.permute.xlu0 %3098
        %3102 = vset.pattern.permute.xlu0 0
        %3103 = vperm.xlu0 %3102, %v1849
        %v3104 = vpop.permute.xlu0 %3103
        %3107 = vset.pattern.permute.xlu0 0
        %3108 = vperm.xlu0 %3107, %v1850
        %v3109 = vpop.permute.xlu0 %3108
        %3112 = vset.pattern.permute.xlu0 0
        %3113 = vperm.xlu0 %3112, %v1851
        %v3114 = vpop.permute.xlu0 %3113
        %v3116 = vmul.f32 %v3067, %v3099
        %v3117 = vmul.f32 %v3067, %v3104
        %v3118 = vmul.f32 %v3067, %v3109
        %v3119 = vmul.f32 %v3067, %v3114
        %v3120 = vmul.f32 %v3071, %v3099
        %v3121 = vmul.f32 %v3071, %v3104
        %v3122 = vmul.f32 %v3071, %v3109
        %v3123 = vmul.f32 %v3071, %v3114
        %v3124 = vmul.f32 %v3075, %v3099
        %v3125 = vmul.f32 %v3075, %v3104
        %v3126 = vmul.f32 %v3075, %v3109
        %v3127 = vmul.f32 %v3075, %v3114
        %v3128 = vmul.f32 %v3079, %v3099
        %v3129 = vmul.f32 %v3079, %v3104
        %v3130 = vmul.f32 %v3079, %v3109
        %v3131 = vmul.f32 %v3079, %v3114
        %v3132 = vmul.f32 %v3083, %v3099
        %v3133 = vmul.f32 %v3083, %v3104
        %v3134 = vmul.f32 %v3083, %v3109
        %v3135 = vmul.f32 %v3083, %v3114
        %v3136 = vmul.f32 %v3087, %v3099
        %v3137 = vmul.f32 %v3087, %v3104
        %v3138 = vmul.f32 %v3087, %v3109
        %v3139 = vmul.f32 %v3087, %v3114
        %v3140 = vmul.f32 %v3091, %v3099
        %v3141 = vmul.f32 %v3091, %v3104
        %v3142 = vmul.f32 %v3091, %v3109
        %v3143 = vmul.f32 %v3091, %v3114
        %v3144 = vmul.f32 %v3095, %v3099
        %v3145 = vmul.f32 %v3095, %v3104
        %v3146 = vmul.f32 %v3095, %v3109
        %v3147 = vmul.f32 %v3095, %v3114
        %v3148 = vadd.f32 %v3032, %v3116
        %v3149 = vadd.f32 %v3033, %v3117
        %v3150 = vadd.f32 %v3034, %v3118
        %v3151 = vadd.f32 %v3035, %v3119
        %v3152 = vadd.f32 %v3036, %v3120
        %v3153 = vadd.f32 %v3037, %v3121
        %v3154 = vadd.f32 %v3038, %v3122
        %v3155 = vadd.f32 %v3039, %v3123
        %v3156 = vadd.f32 %v3040, %v3124
        %v3157 = vadd.f32 %v3041, %v3125
        %v3158 = vadd.f32 %v3042, %v3126
        %v3159 = vadd.f32 %v3043, %v3127
        %v3160 = vadd.f32 %v3044, %v3128
        %v3161 = vadd.f32 %v3045, %v3129
        %v3162 = vadd.f32 %v3046, %v3130
        %v3163 = vadd.f32 %v3047, %v3131
        %v3164 = vadd.f32 %v3048, %v3132
        %v3165 = vadd.f32 %v3049, %v3133
        %v3166 = vadd.f32 %v3050, %v3134
        %v3167 = vadd.f32 %v3051, %v3135
        %v3168 = vadd.f32 %v3052, %v3136
        %v3169 = vadd.f32 %v3053, %v3137
        %v3170 = vadd.f32 %v3054, %v3138
        %v3171 = vadd.f32 %v3055, %v3139
        %v3172 = vadd.f32 %v3056, %v3140
        %v3173 = vadd.f32 %v3057, %v3141
        %v3174 = vadd.f32 %v3058, %v3142
        %v3175 = vadd.f32 %v3059, %v3143
        %v3176 = vadd.f32 %v3060, %v3144
        %v3177 = vadd.f32 %v3061, %v3145
        %v3178 = vadd.f32 %v3062, %v3146
        %v3179 = vadd.f32 %v3063, %v3147
        %v3180 = vlaneseq
        %v3181 = vshrl.u32 %v3180, 7
        %v3182 = vsub.s32 3, %v3181
        %v3183 = vrot.slane %v1777, %v3182
        %v3184 = vlaneseq
        %v3185 = vshrl.u32 %v3184, 7
        %v3186 = vsub.s32 3, %v3185
        %v3187 = vrot.slane %v1781, %v3186
        %v3188 = vlaneseq
        %v3189 = vshrl.u32 %v3188, 7
        %v3190 = vsub.s32 3, %v3189
        %v3191 = vrot.slane %v1785, %v3190
        %v3192 = vlaneseq
        %v3193 = vshrl.u32 %v3192, 7
        %v3194 = vsub.s32 3, %v3193
        %v3195 = vrot.slane %v1789, %v3194
        %v3196 = vlaneseq
        %v3197 = vshrl.u32 %v3196, 7
        %v3198 = vsub.s32 3, %v3197
        %v3199 = vrot.slane %v1793, %v3198
        %v3200 = vlaneseq
        %v3201 = vshrl.u32 %v3200, 7
        %v3202 = vsub.s32 3, %v3201
        %v3203 = vrot.slane %v1797, %v3202
        %v3204 = vlaneseq
        %v3205 = vshrl.u32 %v3204, 7
        %v3206 = vsub.s32 3, %v3205
        %v3207 = vrot.slane %v1801, %v3206
        %v3208 = vlaneseq
        %v3209 = vshrl.u32 %v3208, 7
        %v3210 = vsub.s32 3, %v3209
        %v3211 = vrot.slane %v1805, %v3210
        %3213 = vset.pattern.permute.xlu0 0
        %3214 = vperm.xlu0 %3213, %v1852
        %v3215 = vpop.permute.xlu0 %3214
        %3218 = vset.pattern.permute.xlu0 0
        %3219 = vperm.xlu0 %3218, %v1853
        %v3220 = vpop.permute.xlu0 %3219
        %3223 = vset.pattern.permute.xlu0 0
        %3224 = vperm.xlu0 %3223, %v1854
        %v3225 = vpop.permute.xlu0 %3224
        %3228 = vset.pattern.permute.xlu0 0
        %3229 = vperm.xlu0 %3228, %v1855
        %v3230 = vpop.permute.xlu0 %3229
        %v3232 = vmul.f32 %v3183, %v3215
        %v3233 = vmul.f32 %v3183, %v3220
        %v3234 = vmul.f32 %v3183, %v3225
        %v3235 = vmul.f32 %v3183, %v3230
        %v3236 = vmul.f32 %v3187, %v3215
        %v3237 = vmul.f32 %v3187, %v3220
        %v3238 = vmul.f32 %v3187, %v3225
        %v3239 = vmul.f32 %v3187, %v3230
        %v3240 = vmul.f32 %v3191, %v3215
        %v3241 = vmul.f32 %v3191, %v3220
        %v3242 = vmul.f32 %v3191, %v3225
        %v3243 = vmul.f32 %v3191, %v3230
        %v3244 = vmul.f32 %v3195, %v3215
        %v3245 = vmul.f32 %v3195, %v3220
        %v3246 = vmul.f32 %v3195, %v3225
        %v3247 = vmul.f32 %v3195, %v3230
        %v3248 = vmul.f32 %v3199, %v3215
        %v3249 = vmul.f32 %v3199, %v3220
        %v3250 = vmul.f32 %v3199, %v3225
        %v3251 = vmul.f32 %v3199, %v3230
        %v3252 = vmul.f32 %v3203, %v3215
        %v3253 = vmul.f32 %v3203, %v3220
        %v3254 = vmul.f32 %v3203, %v3225
        %v3255 = vmul.f32 %v3203, %v3230
        %v3256 = vmul.f32 %v3207, %v3215
        %v3257 = vmul.f32 %v3207, %v3220
        %v3258 = vmul.f32 %v3207, %v3225
        %v3259 = vmul.f32 %v3207, %v3230
        %v3260 = vmul.f32 %v3211, %v3215
        %v3261 = vmul.f32 %v3211, %v3220
        %v3262 = vmul.f32 %v3211, %v3225
        %v3263 = vmul.f32 %v3211, %v3230
        %v3264 = vadd.f32 %v3148, %v3232
        %v3265 = vadd.f32 %v3149, %v3233
        %v3266 = vadd.f32 %v3150, %v3234
        %v3267 = vadd.f32 %v3151, %v3235
        %v3268 = vadd.f32 %v3152, %v3236
        %v3269 = vadd.f32 %v3153, %v3237
        %v3270 = vadd.f32 %v3154, %v3238
        %v3271 = vadd.f32 %v3155, %v3239
        %v3272 = vadd.f32 %v3156, %v3240
        %v3273 = vadd.f32 %v3157, %v3241
        %v3274 = vadd.f32 %v3158, %v3242
        %v3275 = vadd.f32 %v3159, %v3243
        %v3276 = vadd.f32 %v3160, %v3244
        %v3277 = vadd.f32 %v3161, %v3245
        %v3278 = vadd.f32 %v3162, %v3246
        %v3279 = vadd.f32 %v3163, %v3247
        %v3280 = vadd.f32 %v3164, %v3248
        %v3281 = vadd.f32 %v3165, %v3249
        %v3282 = vadd.f32 %v3166, %v3250
        %v3283 = vadd.f32 %v3167, %v3251
        %v3284 = vadd.f32 %v3168, %v3252
        %v3285 = vadd.f32 %v3169, %v3253
        %v3286 = vadd.f32 %v3170, %v3254
        %v3287 = vadd.f32 %v3171, %v3255
        %v3288 = vadd.f32 %v3172, %v3256
        %v3289 = vadd.f32 %v3173, %v3257
        %v3290 = vadd.f32 %v3174, %v3258
        %v3291 = vadd.f32 %v3175, %v3259
        %v3292 = vadd.f32 %v3176, %v3260
        %v3293 = vadd.f32 %v3177, %v3261
        %v3294 = vadd.f32 %v3178, %v3262
        %v3295 = vadd.f32 %v3179, %v3263
        %v3296 = vlaneseq
        %v3297 = vshrl.u32 %v3296, 7
        %v3298 = vsub.s32 4, %v3297
        %v3299 = vrot.slane %v1777, %v3298
        %v3300 = vlaneseq
        %v3301 = vshrl.u32 %v3300, 7
        %v3302 = vsub.s32 4, %v3301
        %v3303 = vrot.slane %v1781, %v3302
        %v3304 = vlaneseq
        %v3305 = vshrl.u32 %v3304, 7
        %v3306 = vsub.s32 4, %v3305
        %v3307 = vrot.slane %v1785, %v3306
        %v3308 = vlaneseq
        %v3309 = vshrl.u32 %v3308, 7
        %v3310 = vsub.s32 4, %v3309
        %v3311 = vrot.slane %v1789, %v3310
        %v3312 = vlaneseq
        %v3313 = vshrl.u32 %v3312, 7
        %v3314 = vsub.s32 4, %v3313
        %v3315 = vrot.slane %v1793, %v3314
        %v3316 = vlaneseq
        %v3317 = vshrl.u32 %v3316, 7
        %v3318 = vsub.s32 4, %v3317
        %v3319 = vrot.slane %v1797, %v3318
        %v3320 = vlaneseq
        %v3321 = vshrl.u32 %v3320, 7
        %v3322 = vsub.s32 4, %v3321
        %v3323 = vrot.slane %v1801, %v3322
        %v3324 = vlaneseq
        %v3325 = vshrl.u32 %v3324, 7
        %v3326 = vsub.s32 4, %v3325
        %v3327 = vrot.slane %v1805, %v3326
        %3329 = vset.pattern.permute.xlu0 0
        %3330 = vperm.xlu0 %3329, %v1856
        %v3331 = vpop.permute.xlu0 %3330
        %3334 = vset.pattern.permute.xlu0 0
        %3335 = vperm.xlu0 %3334, %v1857
        %v3336 = vpop.permute.xlu0 %3335
        %3339 = vset.pattern.permute.xlu0 0
        %3340 = vperm.xlu0 %3339, %v1858
        %v3341 = vpop.permute.xlu0 %3340
        %3344 = vset.pattern.permute.xlu0 0
        %3345 = vperm.xlu0 %3344, %v1859
        %v3346 = vpop.permute.xlu0 %3345
        %v3348 = vmul.f32 %v3299, %v3331
        %v3349 = vmul.f32 %v3299, %v3336
        %v3350 = vmul.f32 %v3299, %v3341
        %v3351 = vmul.f32 %v3299, %v3346
        %v3352 = vmul.f32 %v3303, %v3331
        %v3353 = vmul.f32 %v3303, %v3336
        %v3354 = vmul.f32 %v3303, %v3341
        %v3355 = vmul.f32 %v3303, %v3346
        %v3356 = vmul.f32 %v3307, %v3331
        %v3357 = vmul.f32 %v3307, %v3336
        %v3358 = vmul.f32 %v3307, %v3341
        %v3359 = vmul.f32 %v3307, %v3346
        %v3360 = vmul.f32 %v3311, %v3331
        %v3361 = vmul.f32 %v3311, %v3336
        %v3362 = vmul.f32 %v3311, %v3341
        %v3363 = vmul.f32 %v3311, %v3346
        %v3364 = vmul.f32 %v3315, %v3331
        %v3365 = vmul.f32 %v3315, %v3336
        %v3366 = vmul.f32 %v3315, %v3341
        %v3367 = vmul.f32 %v3315, %v3346
        %v3368 = vmul.f32 %v3319, %v3331
        %v3369 = vmul.f32 %v3319, %v3336
        %v3370 = vmul.f32 %v3319, %v3341
        %v3371 = vmul.f32 %v3319, %v3346
        %v3372 = vmul.f32 %v3323, %v3331
        %v3373 = vmul.f32 %v3323, %v3336
        %v3374 = vmul.f32 %v3323, %v3341
        %v3375 = vmul.f32 %v3323, %v3346
        %v3376 = vmul.f32 %v3327, %v3331
        %v3377 = vmul.f32 %v3327, %v3336
        %v3378 = vmul.f32 %v3327, %v3341
        %v3379 = vmul.f32 %v3327, %v3346
        %v3380 = vadd.f32 %v3264, %v3348
        %v3381 = vadd.f32 %v3265, %v3349
        %v3382 = vadd.f32 %v3266, %v3350
        %v3383 = vadd.f32 %v3267, %v3351
        %v3384 = vadd.f32 %v3268, %v3352
        %v3385 = vadd.f32 %v3269, %v3353
        %v3386 = vadd.f32 %v3270, %v3354
        %v3387 = vadd.f32 %v3271, %v3355
        %v3388 = vadd.f32 %v3272, %v3356
        %v3389 = vadd.f32 %v3273, %v3357
        %v3390 = vadd.f32 %v3274, %v3358
        %v3391 = vadd.f32 %v3275, %v3359
        %v3392 = vadd.f32 %v3276, %v3360
        %v3393 = vadd.f32 %v3277, %v3361
        %v3394 = vadd.f32 %v3278, %v3362
        %v3395 = vadd.f32 %v3279, %v3363
        %v3396 = vadd.f32 %v3280, %v3364
        %v3397 = vadd.f32 %v3281, %v3365
        %v3398 = vadd.f32 %v3282, %v3366
        %v3399 = vadd.f32 %v3283, %v3367
        %v3400 = vadd.f32 %v3284, %v3368
        %v3401 = vadd.f32 %v3285, %v3369
        %v3402 = vadd.f32 %v3286, %v3370
        %v3403 = vadd.f32 %v3287, %v3371
        %v3404 = vadd.f32 %v3288, %v3372
        %v3405 = vadd.f32 %v3289, %v3373
        %v3406 = vadd.f32 %v3290, %v3374
        %v3407 = vadd.f32 %v3291, %v3375
        %v3408 = vadd.f32 %v3292, %v3376
        %v3409 = vadd.f32 %v3293, %v3377
        %v3410 = vadd.f32 %v3294, %v3378
        %v3411 = vadd.f32 %v3295, %v3379
        %v3412 = vlaneseq
        %v3413 = vshrl.u32 %v3412, 7
        %v3414 = vsub.s32 5, %v3413
        %v3415 = vrot.slane %v1777, %v3414
        %v3416 = vlaneseq
        %v3417 = vshrl.u32 %v3416, 7
        %v3418 = vsub.s32 5, %v3417
        %v3419 = vrot.slane %v1781, %v3418
        %v3420 = vlaneseq
        %v3421 = vshrl.u32 %v3420, 7
        %v3422 = vsub.s32 5, %v3421
        %v3423 = vrot.slane %v1785, %v3422
        %v3424 = vlaneseq
        %v3425 = vshrl.u32 %v3424, 7
        %v3426 = vsub.s32 5, %v3425
        %v3427 = vrot.slane %v1789, %v3426
        %v3428 = vlaneseq
        %v3429 = vshrl.u32 %v3428, 7
        %v3430 = vsub.s32 5, %v3429
        %v3431 = vrot.slane %v1793, %v3430
        %v3432 = vlaneseq
        %v3433 = vshrl.u32 %v3432, 7
        %v3434 = vsub.s32 5, %v3433
        %v3435 = vrot.slane %v1797, %v3434
        %v3436 = vlaneseq
        %v3437 = vshrl.u32 %v3436, 7
        %v3438 = vsub.s32 5, %v3437
        %v3439 = vrot.slane %v1801, %v3438
        %v3440 = vlaneseq
        %v3441 = vshrl.u32 %v3440, 7
        %v3442 = vsub.s32 5, %v3441
        %v3443 = vrot.slane %v1805, %v3442
        %3445 = vset.pattern.permute.xlu0 0
        %3446 = vperm.xlu0 %3445, %v1860
        %v3447 = vpop.permute.xlu0 %3446
        %3450 = vset.pattern.permute.xlu0 0
        %3451 = vperm.xlu0 %3450, %v1861
        %v3452 = vpop.permute.xlu0 %3451
        %3455 = vset.pattern.permute.xlu0 0
        %3456 = vperm.xlu0 %3455, %v1862
        %v3457 = vpop.permute.xlu0 %3456
        %3460 = vset.pattern.permute.xlu0 0
        %3461 = vperm.xlu0 %3460, %v1863
        %v3462 = vpop.permute.xlu0 %3461
        %v3464 = vmul.f32 %v3415, %v3447
        %v3465 = vmul.f32 %v3415, %v3452
        %v3466 = vmul.f32 %v3415, %v3457
        %v3467 = vmul.f32 %v3415, %v3462
        %v3468 = vmul.f32 %v3419, %v3447
        %v3469 = vmul.f32 %v3419, %v3452
        %v3470 = vmul.f32 %v3419, %v3457
        %v3471 = vmul.f32 %v3419, %v3462
        %v3472 = vmul.f32 %v3423, %v3447
        %v3473 = vmul.f32 %v3423, %v3452
        %v3474 = vmul.f32 %v3423, %v3457
        %v3475 = vmul.f32 %v3423, %v3462
        %v3476 = vmul.f32 %v3427, %v3447
        %v3477 = vmul.f32 %v3427, %v3452
        %v3478 = vmul.f32 %v3427, %v3457
        %v3479 = vmul.f32 %v3427, %v3462
        %v3480 = vmul.f32 %v3431, %v3447
        %v3481 = vmul.f32 %v3431, %v3452
        %v3482 = vmul.f32 %v3431, %v3457
        %v3483 = vmul.f32 %v3431, %v3462
        %v3484 = vmul.f32 %v3435, %v3447
        %v3485 = vmul.f32 %v3435, %v3452
        %v3486 = vmul.f32 %v3435, %v3457
        %v3487 = vmul.f32 %v3435, %v3462
        %v3488 = vmul.f32 %v3439, %v3447
        %v3489 = vmul.f32 %v3439, %v3452
        %v3490 = vmul.f32 %v3439, %v3457
        %v3491 = vmul.f32 %v3439, %v3462
        %v3492 = vmul.f32 %v3443, %v3447
        %v3493 = vmul.f32 %v3443, %v3452
        %v3494 = vmul.f32 %v3443, %v3457
        %v3495 = vmul.f32 %v3443, %v3462
        %v3496 = vadd.f32 %v3380, %v3464
        %v3497 = vadd.f32 %v3381, %v3465
        %v3498 = vadd.f32 %v3382, %v3466
        %v3499 = vadd.f32 %v3383, %v3467
        %v3500 = vadd.f32 %v3384, %v3468
        %v3501 = vadd.f32 %v3385, %v3469
        %v3502 = vadd.f32 %v3386, %v3470
        %v3503 = vadd.f32 %v3387, %v3471
        %v3504 = vadd.f32 %v3388, %v3472
        %v3505 = vadd.f32 %v3389, %v3473
        %v3506 = vadd.f32 %v3390, %v3474
        %v3507 = vadd.f32 %v3391, %v3475
        %v3508 = vadd.f32 %v3392, %v3476
        %v3509 = vadd.f32 %v3393, %v3477
        %v3510 = vadd.f32 %v3394, %v3478
        %v3511 = vadd.f32 %v3395, %v3479
        %v3512 = vadd.f32 %v3396, %v3480
        %v3513 = vadd.f32 %v3397, %v3481
        %v3514 = vadd.f32 %v3398, %v3482
        %v3515 = vadd.f32 %v3399, %v3483
        %v3516 = vadd.f32 %v3400, %v3484
        %v3517 = vadd.f32 %v3401, %v3485
        %v3518 = vadd.f32 %v3402, %v3486
        %v3519 = vadd.f32 %v3403, %v3487
        %v3520 = vadd.f32 %v3404, %v3488
        %v3521 = vadd.f32 %v3405, %v3489
        %v3522 = vadd.f32 %v3406, %v3490
        %v3523 = vadd.f32 %v3407, %v3491
        %v3524 = vadd.f32 %v3408, %v3492
        %v3525 = vadd.f32 %v3409, %v3493
        %v3526 = vadd.f32 %v3410, %v3494
        %v3527 = vadd.f32 %v3411, %v3495
        %v3528 = vlaneseq
        %v3529 = vshrl.u32 %v3528, 7
        %v3530 = vsub.s32 6, %v3529
        %v3531 = vrot.slane %v1777, %v3530
        %v3532 = vlaneseq
        %v3533 = vshrl.u32 %v3532, 7
        %v3534 = vsub.s32 6, %v3533
        %v3535 = vrot.slane %v1781, %v3534
        %v3536 = vlaneseq
        %v3537 = vshrl.u32 %v3536, 7
        %v3538 = vsub.s32 6, %v3537
        %v3539 = vrot.slane %v1785, %v3538
        %v3540 = vlaneseq
        %v3541 = vshrl.u32 %v3540, 7
        %v3542 = vsub.s32 6, %v3541
        %v3543 = vrot.slane %v1789, %v3542
        %v3544 = vlaneseq
        %v3545 = vshrl.u32 %v3544, 7
        %v3546 = vsub.s32 6, %v3545
        %v3547 = vrot.slane %v1793, %v3546
        %v3548 = vlaneseq
        %v3549 = vshrl.u32 %v3548, 7
        %v3550 = vsub.s32 6, %v3549
        %v3551 = vrot.slane %v1797, %v3550
        %v3552 = vlaneseq
        %v3553 = vshrl.u32 %v3552, 7
        %v3554 = vsub.s32 6, %v3553
        %v3555 = vrot.slane %v1801, %v3554
        %v3556 = vlaneseq
        %v3557 = vshrl.u32 %v3556, 7
        %v3558 = vsub.s32 6, %v3557
        %v3559 = vrot.slane %v1805, %v3558
        %3561 = vset.pattern.permute.xlu0 0
        %3562 = vperm.xlu0 %3561, %v1864
        %v3563 = vpop.permute.xlu0 %3562
        %3566 = vset.pattern.permute.xlu0 0
        %3567 = vperm.xlu0 %3566, %v1865
        %v3568 = vpop.permute.xlu0 %3567
        %3571 = vset.pattern.permute.xlu0 0
        %3572 = vperm.xlu0 %3571, %v1866
        %v3573 = vpop.permute.xlu0 %3572
        %3576 = vset.pattern.permute.xlu0 0
        %3577 = vperm.xlu0 %3576, %v1867
        %v3578 = vpop.permute.xlu0 %3577
        %v3580 = vmul.f32 %v3531, %v3563
        %v3581 = vmul.f32 %v3531, %v3568
        %v3582 = vmul.f32 %v3531, %v3573
        %v3583 = vmul.f32 %v3531, %v3578
        %v3584 = vmul.f32 %v3535, %v3563
        %v3585 = vmul.f32 %v3535, %v3568
        %v3586 = vmul.f32 %v3535, %v3573
        %v3587 = vmul.f32 %v3535, %v3578
        %v3588 = vmul.f32 %v3539, %v3563
        %v3589 = vmul.f32 %v3539, %v3568
        %v3590 = vmul.f32 %v3539, %v3573
        %v3591 = vmul.f32 %v3539, %v3578
        %v3592 = vmul.f32 %v3543, %v3563
        %v3593 = vmul.f32 %v3543, %v3568
        %v3594 = vmul.f32 %v3543, %v3573
        %v3595 = vmul.f32 %v3543, %v3578
        %v3596 = vmul.f32 %v3547, %v3563
        %v3597 = vmul.f32 %v3547, %v3568
        %v3598 = vmul.f32 %v3547, %v3573
        %v3599 = vmul.f32 %v3547, %v3578
        %v3600 = vmul.f32 %v3551, %v3563
        %v3601 = vmul.f32 %v3551, %v3568
        %v3602 = vmul.f32 %v3551, %v3573
        %v3603 = vmul.f32 %v3551, %v3578
        %v3604 = vmul.f32 %v3555, %v3563
        %v3605 = vmul.f32 %v3555, %v3568
        %v3606 = vmul.f32 %v3555, %v3573
        %v3607 = vmul.f32 %v3555, %v3578
        %v3608 = vmul.f32 %v3559, %v3563
        %v3609 = vmul.f32 %v3559, %v3568
        %v3610 = vmul.f32 %v3559, %v3573
        %v3611 = vmul.f32 %v3559, %v3578
        %v3612 = vadd.f32 %v3496, %v3580
        %v3613 = vadd.f32 %v3497, %v3581
        %v3614 = vadd.f32 %v3498, %v3582
        %v3615 = vadd.f32 %v3499, %v3583
        %v3616 = vadd.f32 %v3500, %v3584
        %v3617 = vadd.f32 %v3501, %v3585
        %v3618 = vadd.f32 %v3502, %v3586
        %v3619 = vadd.f32 %v3503, %v3587
        %v3620 = vadd.f32 %v3504, %v3588
        %v3621 = vadd.f32 %v3505, %v3589
        %v3622 = vadd.f32 %v3506, %v3590
        %v3623 = vadd.f32 %v3507, %v3591
        %v3624 = vadd.f32 %v3508, %v3592
        %v3625 = vadd.f32 %v3509, %v3593
        %v3626 = vadd.f32 %v3510, %v3594
        %v3627 = vadd.f32 %v3511, %v3595
        %v3628 = vadd.f32 %v3512, %v3596
        %v3629 = vadd.f32 %v3513, %v3597
        %v3630 = vadd.f32 %v3514, %v3598
        %v3631 = vadd.f32 %v3515, %v3599
        %v3632 = vadd.f32 %v3516, %v3600
        %v3633 = vadd.f32 %v3517, %v3601
        %v3634 = vadd.f32 %v3518, %v3602
        %v3635 = vadd.f32 %v3519, %v3603
        %v3636 = vadd.f32 %v3520, %v3604
        %v3637 = vadd.f32 %v3521, %v3605
        %v3638 = vadd.f32 %v3522, %v3606
        %v3639 = vadd.f32 %v3523, %v3607
        %v3640 = vadd.f32 %v3524, %v3608
        %v3641 = vadd.f32 %v3525, %v3609
        %v3642 = vadd.f32 %v3526, %v3610
        %v3643 = vadd.f32 %v3527, %v3611
        %v3644 = vlaneseq
        %v3645 = vshrl.u32 %v3644, 7
        %v3646 = vsub.s32 7, %v3645
        %v3647 = vrot.slane %v1777, %v3646
        %v3648 = vlaneseq
        %v3649 = vshrl.u32 %v3648, 7
        %v3650 = vsub.s32 7, %v3649
        %v3651 = vrot.slane %v1781, %v3650
        %v3652 = vlaneseq
        %v3653 = vshrl.u32 %v3652, 7
        %v3654 = vsub.s32 7, %v3653
        %v3655 = vrot.slane %v1785, %v3654
        %v3656 = vlaneseq
        %v3657 = vshrl.u32 %v3656, 7
        %v3658 = vsub.s32 7, %v3657
        %v3659 = vrot.slane %v1789, %v3658
        %v3660 = vlaneseq
        %v3661 = vshrl.u32 %v3660, 7
        %v3662 = vsub.s32 7, %v3661
        %v3663 = vrot.slane %v1793, %v3662
        %v3664 = vlaneseq
        %v3665 = vshrl.u32 %v3664, 7
        %v3666 = vsub.s32 7, %v3665
        %v3667 = vrot.slane %v1797, %v3666
        %v3668 = vlaneseq
        %v3669 = vshrl.u32 %v3668, 7
        %v3670 = vsub.s32 7, %v3669
        %v3671 = vrot.slane %v1801, %v3670
        %v3672 = vlaneseq
        %v3673 = vshrl.u32 %v3672, 7
        %v3674 = vsub.s32 7, %v3673
        %v3675 = vrot.slane %v1805, %v3674
        %3677 = vset.pattern.permute.xlu0 0
        %3678 = vperm.xlu0 %3677, %v1868
        %v3679 = vpop.permute.xlu0 %3678
        %3682 = vset.pattern.permute.xlu0 0
        %3683 = vperm.xlu0 %3682, %v1869
        %v3684 = vpop.permute.xlu0 %3683
        %3687 = vset.pattern.permute.xlu0 0
        %3688 = vperm.xlu0 %3687, %v1870
        %v3689 = vpop.permute.xlu0 %3688
        %3692 = vset.pattern.permute.xlu0 0
        %3693 = vperm.xlu0 %3692, %v1871
        %v3694 = vpop.permute.xlu0 %3693
        %v3696 = vmul.f32 %v3647, %v3679
        %v3697 = vmul.f32 %v3647, %v3684
        %v3698 = vmul.f32 %v3647, %v3689
        %v3699 = vmul.f32 %v3647, %v3694
        %v3700 = vmul.f32 %v3651, %v3679
        %v3701 = vmul.f32 %v3651, %v3684
        %v3702 = vmul.f32 %v3651, %v3689
        %v3703 = vmul.f32 %v3651, %v3694
        %v3704 = vmul.f32 %v3655, %v3679
        %v3705 = vmul.f32 %v3655, %v3684
        %v3706 = vmul.f32 %v3655, %v3689
        %v3707 = vmul.f32 %v3655, %v3694
        %v3708 = vmul.f32 %v3659, %v3679
        %v3709 = vmul.f32 %v3659, %v3684
        %v3710 = vmul.f32 %v3659, %v3689
        %v3711 = vmul.f32 %v3659, %v3694
        %v3712 = vmul.f32 %v3663, %v3679
        %v3713 = vmul.f32 %v3663, %v3684
        %v3714 = vmul.f32 %v3663, %v3689
        %v3715 = vmul.f32 %v3663, %v3694
        %v3716 = vmul.f32 %v3667, %v3679
        %v3717 = vmul.f32 %v3667, %v3684
        %v3718 = vmul.f32 %v3667, %v3689
        %v3719 = vmul.f32 %v3667, %v3694
        %v3720 = vmul.f32 %v3671, %v3679
        %v3721 = vmul.f32 %v3671, %v3684
        %v3722 = vmul.f32 %v3671, %v3689
        %v3723 = vmul.f32 %v3671, %v3694
        %v3724 = vmul.f32 %v3675, %v3679
        %v3725 = vmul.f32 %v3675, %v3684
        %v3726 = vmul.f32 %v3675, %v3689
        %v3727 = vmul.f32 %v3675, %v3694
        %v3728 = vadd.f32 %v3612, %v3696
        %v3729 = vadd.f32 %v3613, %v3697
        %v3730 = vadd.f32 %v3614, %v3698
        %v3731 = vadd.f32 %v3615, %v3699
        %v3732 = vadd.f32 %v3616, %v3700
        %v3733 = vadd.f32 %v3617, %v3701
        %v3734 = vadd.f32 %v3618, %v3702
        %v3735 = vadd.f32 %v3619, %v3703
        %v3736 = vadd.f32 %v3620, %v3704
        %v3737 = vadd.f32 %v3621, %v3705
        %v3738 = vadd.f32 %v3622, %v3706
        %v3739 = vadd.f32 %v3623, %v3707
        %v3740 = vadd.f32 %v3624, %v3708
        %v3741 = vadd.f32 %v3625, %v3709
        %v3742 = vadd.f32 %v3626, %v3710
        %v3743 = vadd.f32 %v3627, %v3711
        %v3744 = vadd.f32 %v3628, %v3712
        %v3745 = vadd.f32 %v3629, %v3713
        %v3746 = vadd.f32 %v3630, %v3714
        %v3747 = vadd.f32 %v3631, %v3715
        %v3748 = vadd.f32 %v3632, %v3716
        %v3749 = vadd.f32 %v3633, %v3717
        %v3750 = vadd.f32 %v3634, %v3718
        %v3751 = vadd.f32 %v3635, %v3719
        %v3752 = vadd.f32 %v3636, %v3720
        %v3753 = vadd.f32 %v3637, %v3721
        %v3754 = vadd.f32 %v3638, %v3722
        %v3755 = vadd.f32 %v3639, %v3723
        %v3756 = vadd.f32 %v3640, %v3724
        %v3757 = vadd.f32 %v3641, %v3725
        %v3758 = vadd.f32 %v3642, %v3726
        %v3759 = vadd.f32 %v3643, %v3727
        %v3760 = vlaneseq
        %v3761 = vshrl.u32 %v3760, 7
        %v3762 = vsub.s32 0, %v3761
        %v3763 = vrot.slane %v1778, %v3762
        %v3764 = vlaneseq
        %v3765 = vshrl.u32 %v3764, 7
        %v3766 = vsub.s32 0, %v3765
        %v3767 = vrot.slane %v1782, %v3766
        %v3768 = vlaneseq
        %v3769 = vshrl.u32 %v3768, 7
        %v3770 = vsub.s32 0, %v3769
        %v3771 = vrot.slane %v1786, %v3770
        %v3772 = vlaneseq
        %v3773 = vshrl.u32 %v3772, 7
        %v3774 = vsub.s32 0, %v3773
        %v3775 = vrot.slane %v1790, %v3774
        %v3776 = vlaneseq
        %v3777 = vshrl.u32 %v3776, 7
        %v3778 = vsub.s32 0, %v3777
        %v3779 = vrot.slane %v1794, %v3778
        %v3780 = vlaneseq
        %v3781 = vshrl.u32 %v3780, 7
        %v3782 = vsub.s32 0, %v3781
        %v3783 = vrot.slane %v1798, %v3782
        %v3784 = vlaneseq
        %v3785 = vshrl.u32 %v3784, 7
        %v3786 = vsub.s32 0, %v3785
        %v3787 = vrot.slane %v1802, %v3786
        %v3788 = vlaneseq
        %v3789 = vshrl.u32 %v3788, 7
        %v3790 = vsub.s32 0, %v3789
        %v3791 = vrot.slane %v1806, %v3790
        %3793 = vset.pattern.permute.xlu0 0
        %3794 = vperm.xlu0 %3793, %v1872
        %v3795 = vpop.permute.xlu0 %3794
        %3798 = vset.pattern.permute.xlu0 0
        %3799 = vperm.xlu0 %3798, %v1873
        %v3800 = vpop.permute.xlu0 %3799
        %3803 = vset.pattern.permute.xlu0 0
        %3804 = vperm.xlu0 %3803, %v1874
        %v3805 = vpop.permute.xlu0 %3804
        %3808 = vset.pattern.permute.xlu0 0
        %3809 = vperm.xlu0 %3808, %v1875
        %v3810 = vpop.permute.xlu0 %3809
        %v3812 = vmul.f32 %v3763, %v3795
        %v3813 = vmul.f32 %v3763, %v3800
        %v3814 = vmul.f32 %v3763, %v3805
        %v3815 = vmul.f32 %v3763, %v3810
        %v3816 = vmul.f32 %v3767, %v3795
        %v3817 = vmul.f32 %v3767, %v3800
        %v3818 = vmul.f32 %v3767, %v3805
        %v3819 = vmul.f32 %v3767, %v3810
        %v3820 = vmul.f32 %v3771, %v3795
        %v3821 = vmul.f32 %v3771, %v3800
        %v3822 = vmul.f32 %v3771, %v3805
        %v3823 = vmul.f32 %v3771, %v3810
        %v3824 = vmul.f32 %v3775, %v3795
        %v3825 = vmul.f32 %v3775, %v3800
        %v3826 = vmul.f32 %v3775, %v3805
        %v3827 = vmul.f32 %v3775, %v3810
        %v3828 = vmul.f32 %v3779, %v3795
        %v3829 = vmul.f32 %v3779, %v3800
        %v3830 = vmul.f32 %v3779, %v3805
        %v3831 = vmul.f32 %v3779, %v3810
        %v3832 = vmul.f32 %v3783, %v3795
        %v3833 = vmul.f32 %v3783, %v3800
        %v3834 = vmul.f32 %v3783, %v3805
        %v3835 = vmul.f32 %v3783, %v3810
        %v3836 = vmul.f32 %v3787, %v3795
        %v3837 = vmul.f32 %v3787, %v3800
        %v3838 = vmul.f32 %v3787, %v3805
        %v3839 = vmul.f32 %v3787, %v3810
        %v3840 = vmul.f32 %v3791, %v3795
        %v3841 = vmul.f32 %v3791, %v3800
        %v3842 = vmul.f32 %v3791, %v3805
        %v3843 = vmul.f32 %v3791, %v3810
        %v3844 = vadd.f32 %v3728, %v3812
        %v3845 = vadd.f32 %v3729, %v3813
        %v3846 = vadd.f32 %v3730, %v3814
        %v3847 = vadd.f32 %v3731, %v3815
        %v3848 = vadd.f32 %v3732, %v3816
        %v3849 = vadd.f32 %v3733, %v3817
        %v3850 = vadd.f32 %v3734, %v3818
        %v3851 = vadd.f32 %v3735, %v3819
        %v3852 = vadd.f32 %v3736, %v3820
        %v3853 = vadd.f32 %v3737, %v3821
        %v3854 = vadd.f32 %v3738, %v3822
        %v3855 = vadd.f32 %v3739, %v3823
        %v3856 = vadd.f32 %v3740, %v3824
        %v3857 = vadd.f32 %v3741, %v3825
        %v3858 = vadd.f32 %v3742, %v3826
        %v3859 = vadd.f32 %v3743, %v3827
        %v3860 = vadd.f32 %v3744, %v3828
        %v3861 = vadd.f32 %v3745, %v3829
        %v3862 = vadd.f32 %v3746, %v3830
        %v3863 = vadd.f32 %v3747, %v3831
        %v3864 = vadd.f32 %v3748, %v3832
        %v3865 = vadd.f32 %v3749, %v3833
        %v3866 = vadd.f32 %v3750, %v3834
        %v3867 = vadd.f32 %v3751, %v3835
        %v3868 = vadd.f32 %v3752, %v3836
        %v3869 = vadd.f32 %v3753, %v3837
        %v3870 = vadd.f32 %v3754, %v3838
        %v3871 = vadd.f32 %v3755, %v3839
        %v3872 = vadd.f32 %v3756, %v3840
        %v3873 = vadd.f32 %v3757, %v3841
        %v3874 = vadd.f32 %v3758, %v3842
        %v3875 = vadd.f32 %v3759, %v3843
        %v3876 = vlaneseq
        %v3877 = vshrl.u32 %v3876, 7
        %v3878 = vsub.s32 1, %v3877
        %v3879 = vrot.slane %v1778, %v3878
        %v3880 = vlaneseq
        %v3881 = vshrl.u32 %v3880, 7
        %v3882 = vsub.s32 1, %v3881
        %v3883 = vrot.slane %v1782, %v3882
        %v3884 = vlaneseq
        %v3885 = vshrl.u32 %v3884, 7
        %v3886 = vsub.s32 1, %v3885
        %v3887 = vrot.slane %v1786, %v3886
        %v3888 = vlaneseq
        %v3889 = vshrl.u32 %v3888, 7
        %v3890 = vsub.s32 1, %v3889
        %v3891 = vrot.slane %v1790, %v3890
        %v3892 = vlaneseq
        %v3893 = vshrl.u32 %v3892, 7
        %v3894 = vsub.s32 1, %v3893
        %v3895 = vrot.slane %v1794, %v3894
        %v3896 = vlaneseq
        %v3897 = vshrl.u32 %v3896, 7
        %v3898 = vsub.s32 1, %v3897
        %v3899 = vrot.slane %v1798, %v3898
        %v3900 = vlaneseq
        %v3901 = vshrl.u32 %v3900, 7
        %v3902 = vsub.s32 1, %v3901
        %v3903 = vrot.slane %v1802, %v3902
        %v3904 = vlaneseq
        %v3905 = vshrl.u32 %v3904, 7
        %v3906 = vsub.s32 1, %v3905
        %v3907 = vrot.slane %v1806, %v3906
        %3909 = vset.pattern.permute.xlu0 0
        %3910 = vperm.xlu0 %3909, %v1876
        %v3911 = vpop.permute.xlu0 %3910
        %3914 = vset.pattern.permute.xlu0 0
        %3915 = vperm.xlu0 %3914, %v1877
        %v3916 = vpop.permute.xlu0 %3915
        %3919 = vset.pattern.permute.xlu0 0
        %3920 = vperm.xlu0 %3919, %v1878
        %v3921 = vpop.permute.xlu0 %3920
        %3924 = vset.pattern.permute.xlu0 0
        %3925 = vperm.xlu0 %3924, %v1879
        %v3926 = vpop.permute.xlu0 %3925
        %v3928 = vmul.f32 %v3879, %v3911
        %v3929 = vmul.f32 %v3879, %v3916
        %v3930 = vmul.f32 %v3879, %v3921
        %v3931 = vmul.f32 %v3879, %v3926
        %v3932 = vmul.f32 %v3883, %v3911
        %v3933 = vmul.f32 %v3883, %v3916
        %v3934 = vmul.f32 %v3883, %v3921
        %v3935 = vmul.f32 %v3883, %v3926
        %v3936 = vmul.f32 %v3887, %v3911
        %v3937 = vmul.f32 %v3887, %v3916
        %v3938 = vmul.f32 %v3887, %v3921
        %v3939 = vmul.f32 %v3887, %v3926
        %v3940 = vmul.f32 %v3891, %v3911
        %v3941 = vmul.f32 %v3891, %v3916
        %v3942 = vmul.f32 %v3891, %v3921
        %v3943 = vmul.f32 %v3891, %v3926
        %v3944 = vmul.f32 %v3895, %v3911
        %v3945 = vmul.f32 %v3895, %v3916
        %v3946 = vmul.f32 %v3895, %v3921
        %v3947 = vmul.f32 %v3895, %v3926
        %v3948 = vmul.f32 %v3899, %v3911
        %v3949 = vmul.f32 %v3899, %v3916
        %v3950 = vmul.f32 %v3899, %v3921
        %v3951 = vmul.f32 %v3899, %v3926
        %v3952 = vmul.f32 %v3903, %v3911
        %v3953 = vmul.f32 %v3903, %v3916
        %v3954 = vmul.f32 %v3903, %v3921
        %v3955 = vmul.f32 %v3903, %v3926
        %v3956 = vmul.f32 %v3907, %v3911
        %v3957 = vmul.f32 %v3907, %v3916
        %v3958 = vmul.f32 %v3907, %v3921
        %v3959 = vmul.f32 %v3907, %v3926
        %v3960 = vadd.f32 %v3844, %v3928
        %v3961 = vadd.f32 %v3845, %v3929
        %v3962 = vadd.f32 %v3846, %v3930
        %v3963 = vadd.f32 %v3847, %v3931
        %v3964 = vadd.f32 %v3848, %v3932
        %v3965 = vadd.f32 %v3849, %v3933
        %v3966 = vadd.f32 %v3850, %v3934
        %v3967 = vadd.f32 %v3851, %v3935
        %v3968 = vadd.f32 %v3852, %v3936
        %v3969 = vadd.f32 %v3853, %v3937
        %v3970 = vadd.f32 %v3854, %v3938
        %v3971 = vadd.f32 %v3855, %v3939
        %v3972 = vadd.f32 %v3856, %v3940
        %v3973 = vadd.f32 %v3857, %v3941
        %v3974 = vadd.f32 %v3858, %v3942
        %v3975 = vadd.f32 %v3859, %v3943
        %v3976 = vadd.f32 %v3860, %v3944
        %v3977 = vadd.f32 %v3861, %v3945
        %v3978 = vadd.f32 %v3862, %v3946
        %v3979 = vadd.f32 %v3863, %v3947
        %v3980 = vadd.f32 %v3864, %v3948
        %v3981 = vadd.f32 %v3865, %v3949
        %v3982 = vadd.f32 %v3866, %v3950
        %v3983 = vadd.f32 %v3867, %v3951
        %v3984 = vadd.f32 %v3868, %v3952
        %v3985 = vadd.f32 %v3869, %v3953
        %v3986 = vadd.f32 %v3870, %v3954
        %v3987 = vadd.f32 %v3871, %v3955
        %v3988 = vadd.f32 %v3872, %v3956
        %v3989 = vadd.f32 %v3873, %v3957
        %v3990 = vadd.f32 %v3874, %v3958
        %v3991 = vadd.f32 %v3875, %v3959
        %v3992 = vlaneseq
        %v3993 = vshrl.u32 %v3992, 7
        %v3994 = vsub.s32 2, %v3993
        %v3995 = vrot.slane %v1778, %v3994
        %v3996 = vlaneseq
        %v3997 = vshrl.u32 %v3996, 7
        %v3998 = vsub.s32 2, %v3997
        %v3999 = vrot.slane %v1782, %v3998
        %v4000 = vlaneseq
        %v4001 = vshrl.u32 %v4000, 7
        %v4002 = vsub.s32 2, %v4001
        %v4003 = vrot.slane %v1786, %v4002
        %v4004 = vlaneseq
        %v4005 = vshrl.u32 %v4004, 7
        %v4006 = vsub.s32 2, %v4005
        %v4007 = vrot.slane %v1790, %v4006
        %v4008 = vlaneseq
        %v4009 = vshrl.u32 %v4008, 7
        %v4010 = vsub.s32 2, %v4009
        %v4011 = vrot.slane %v1794, %v4010
        %v4012 = vlaneseq
        %v4013 = vshrl.u32 %v4012, 7
        %v4014 = vsub.s32 2, %v4013
        %v4015 = vrot.slane %v1798, %v4014
        %v4016 = vlaneseq
        %v4017 = vshrl.u32 %v4016, 7
        %v4018 = vsub.s32 2, %v4017
        %v4019 = vrot.slane %v1802, %v4018
        %v4020 = vlaneseq
        %v4021 = vshrl.u32 %v4020, 7
        %v4022 = vsub.s32 2, %v4021
        %v4023 = vrot.slane %v1806, %v4022
        %4025 = vset.pattern.permute.xlu0 0
        %4026 = vperm.xlu0 %4025, %v1880
        %v4027 = vpop.permute.xlu0 %4026
        %4030 = vset.pattern.permute.xlu0 0
        %4031 = vperm.xlu0 %4030, %v1881
        %v4032 = vpop.permute.xlu0 %4031
        %4035 = vset.pattern.permute.xlu0 0
        %4036 = vperm.xlu0 %4035, %v1882
        %v4037 = vpop.permute.xlu0 %4036
        %4040 = vset.pattern.permute.xlu0 0
        %4041 = vperm.xlu0 %4040, %v1883
        %v4042 = vpop.permute.xlu0 %4041
        %v4044 = vmul.f32 %v3995, %v4027
        %v4045 = vmul.f32 %v3995, %v4032
        %v4046 = vmul.f32 %v3995, %v4037
        %v4047 = vmul.f32 %v3995, %v4042
        %v4048 = vmul.f32 %v3999, %v4027
        %v4049 = vmul.f32 %v3999, %v4032
        %v4050 = vmul.f32 %v3999, %v4037
        %v4051 = vmul.f32 %v3999, %v4042
        %v4052 = vmul.f32 %v4003, %v4027
        %v4053 = vmul.f32 %v4003, %v4032
        %v4054 = vmul.f32 %v4003, %v4037
        %v4055 = vmul.f32 %v4003, %v4042
        %v4056 = vmul.f32 %v4007, %v4027
        %v4057 = vmul.f32 %v4007, %v4032
        %v4058 = vmul.f32 %v4007, %v4037
        %v4059 = vmul.f32 %v4007, %v4042
        %v4060 = vmul.f32 %v4011, %v4027
        %v4061 = vmul.f32 %v4011, %v4032
        %v4062 = vmul.f32 %v4011, %v4037
        %v4063 = vmul.f32 %v4011, %v4042
        %v4064 = vmul.f32 %v4015, %v4027
        %v4065 = vmul.f32 %v4015, %v4032
        %v4066 = vmul.f32 %v4015, %v4037
        %v4067 = vmul.f32 %v4015, %v4042
        %v4068 = vmul.f32 %v4019, %v4027
        %v4069 = vmul.f32 %v4019, %v4032
        %v4070 = vmul.f32 %v4019, %v4037
        %v4071 = vmul.f32 %v4019, %v4042
        %v4072 = vmul.f32 %v4023, %v4027
        %v4073 = vmul.f32 %v4023, %v4032
        %v4074 = vmul.f32 %v4023, %v4037
        %v4075 = vmul.f32 %v4023, %v4042
        %v4076 = vadd.f32 %v3960, %v4044
        %v4077 = vadd.f32 %v3961, %v4045
        %v4078 = vadd.f32 %v3962, %v4046
        %v4079 = vadd.f32 %v3963, %v4047
        %v4080 = vadd.f32 %v3964, %v4048
        %v4081 = vadd.f32 %v3965, %v4049
        %v4082 = vadd.f32 %v3966, %v4050
        %v4083 = vadd.f32 %v3967, %v4051
        %v4084 = vadd.f32 %v3968, %v4052
        %v4085 = vadd.f32 %v3969, %v4053
        %v4086 = vadd.f32 %v3970, %v4054
        %v4087 = vadd.f32 %v3971, %v4055
        %v4088 = vadd.f32 %v3972, %v4056
        %v4089 = vadd.f32 %v3973, %v4057
        %v4090 = vadd.f32 %v3974, %v4058
        %v4091 = vadd.f32 %v3975, %v4059
        %v4092 = vadd.f32 %v3976, %v4060
        %v4093 = vadd.f32 %v3977, %v4061
        %v4094 = vadd.f32 %v3978, %v4062
        %v4095 = vadd.f32 %v3979, %v4063
        %v4096 = vadd.f32 %v3980, %v4064
        %v4097 = vadd.f32 %v3981, %v4065
        %v4098 = vadd.f32 %v3982, %v4066
        %v4099 = vadd.f32 %v3983, %v4067
        %v4100 = vadd.f32 %v3984, %v4068
        %v4101 = vadd.f32 %v3985, %v4069
        %v4102 = vadd.f32 %v3986, %v4070
        %v4103 = vadd.f32 %v3987, %v4071
        %v4104 = vadd.f32 %v3988, %v4072
        %v4105 = vadd.f32 %v3989, %v4073
        %v4106 = vadd.f32 %v3990, %v4074
        %v4107 = vadd.f32 %v3991, %v4075
        %v4108 = vlaneseq
        %v4109 = vshrl.u32 %v4108, 7
        %v4110 = vsub.s32 3, %v4109
        %v4111 = vrot.slane %v1778, %v4110
        %v4112 = vlaneseq
        %v4113 = vshrl.u32 %v4112, 7
        %v4114 = vsub.s32 3, %v4113
        %v4115 = vrot.slane %v1782, %v4114
        %v4116 = vlaneseq
        %v4117 = vshrl.u32 %v4116, 7
        %v4118 = vsub.s32 3, %v4117
        %v4119 = vrot.slane %v1786, %v4118
        %v4120 = vlaneseq
        %v4121 = vshrl.u32 %v4120, 7
        %v4122 = vsub.s32 3, %v4121
        %v4123 = vrot.slane %v1790, %v4122
        %v4124 = vlaneseq
        %v4125 = vshrl.u32 %v4124, 7
        %v4126 = vsub.s32 3, %v4125
        %v4127 = vrot.slane %v1794, %v4126
        %v4128 = vlaneseq
        %v4129 = vshrl.u32 %v4128, 7
        %v4130 = vsub.s32 3, %v4129
        %v4131 = vrot.slane %v1798, %v4130
        %v4132 = vlaneseq
        %v4133 = vshrl.u32 %v4132, 7
        %v4134 = vsub.s32 3, %v4133
        %v4135 = vrot.slane %v1802, %v4134
        %v4136 = vlaneseq
        %v4137 = vshrl.u32 %v4136, 7
        %v4138 = vsub.s32 3, %v4137
        %v4139 = vrot.slane %v1806, %v4138
        %4141 = vset.pattern.permute.xlu0 0
        %4142 = vperm.xlu0 %4141, %v1884
        %v4143 = vpop.permute.xlu0 %4142
        %4146 = vset.pattern.permute.xlu0 0
        %4147 = vperm.xlu0 %4146, %v1885
        %v4148 = vpop.permute.xlu0 %4147
        %4151 = vset.pattern.permute.xlu0 0
        %4152 = vperm.xlu0 %4151, %v1886
        %v4153 = vpop.permute.xlu0 %4152
        %4156 = vset.pattern.permute.xlu0 0
        %4157 = vperm.xlu0 %4156, %v1887
        %v4158 = vpop.permute.xlu0 %4157
        %v4160 = vmul.f32 %v4111, %v4143
        %v4161 = vmul.f32 %v4111, %v4148
        %v4162 = vmul.f32 %v4111, %v4153
        %v4163 = vmul.f32 %v4111, %v4158
        %v4164 = vmul.f32 %v4115, %v4143
        %v4165 = vmul.f32 %v4115, %v4148
        %v4166 = vmul.f32 %v4115, %v4153
        %v4167 = vmul.f32 %v4115, %v4158
        %v4168 = vmul.f32 %v4119, %v4143
        %v4169 = vmul.f32 %v4119, %v4148
        %v4170 = vmul.f32 %v4119, %v4153
        %v4171 = vmul.f32 %v4119, %v4158
        %v4172 = vmul.f32 %v4123, %v4143
        %v4173 = vmul.f32 %v4123, %v4148
        %v4174 = vmul.f32 %v4123, %v4153
        %v4175 = vmul.f32 %v4123, %v4158
        %v4176 = vmul.f32 %v4127, %v4143
        %v4177 = vmul.f32 %v4127, %v4148
        %v4178 = vmul.f32 %v4127, %v4153
        %v4179 = vmul.f32 %v4127, %v4158
        %v4180 = vmul.f32 %v4131, %v4143
        %v4181 = vmul.f32 %v4131, %v4148
        %v4182 = vmul.f32 %v4131, %v4153
        %v4183 = vmul.f32 %v4131, %v4158
        %v4184 = vmul.f32 %v4135, %v4143
        %v4185 = vmul.f32 %v4135, %v4148
        %v4186 = vmul.f32 %v4135, %v4153
        %v4187 = vmul.f32 %v4135, %v4158
        %v4188 = vmul.f32 %v4139, %v4143
        %v4189 = vmul.f32 %v4139, %v4148
        %v4190 = vmul.f32 %v4139, %v4153
        %v4191 = vmul.f32 %v4139, %v4158
        %v4192 = vadd.f32 %v4076, %v4160
        %v4193 = vadd.f32 %v4077, %v4161
        %v4194 = vadd.f32 %v4078, %v4162
        %v4195 = vadd.f32 %v4079, %v4163
        %v4196 = vadd.f32 %v4080, %v4164
        %v4197 = vadd.f32 %v4081, %v4165
        %v4198 = vadd.f32 %v4082, %v4166
        %v4199 = vadd.f32 %v4083, %v4167
        %v4200 = vadd.f32 %v4084, %v4168
        %v4201 = vadd.f32 %v4085, %v4169
        %v4202 = vadd.f32 %v4086, %v4170
        %v4203 = vadd.f32 %v4087, %v4171
        %v4204 = vadd.f32 %v4088, %v4172
        %v4205 = vadd.f32 %v4089, %v4173
        %v4206 = vadd.f32 %v4090, %v4174
        %v4207 = vadd.f32 %v4091, %v4175
        %v4208 = vadd.f32 %v4092, %v4176
        %v4209 = vadd.f32 %v4093, %v4177
        %v4210 = vadd.f32 %v4094, %v4178
        %v4211 = vadd.f32 %v4095, %v4179
        %v4212 = vadd.f32 %v4096, %v4180
        %v4213 = vadd.f32 %v4097, %v4181
        %v4214 = vadd.f32 %v4098, %v4182
        %v4215 = vadd.f32 %v4099, %v4183
        %v4216 = vadd.f32 %v4100, %v4184
        %v4217 = vadd.f32 %v4101, %v4185
        %v4218 = vadd.f32 %v4102, %v4186
        %v4219 = vadd.f32 %v4103, %v4187
        %v4220 = vadd.f32 %v4104, %v4188
        %v4221 = vadd.f32 %v4105, %v4189
        %v4222 = vadd.f32 %v4106, %v4190
        %v4223 = vadd.f32 %v4107, %v4191
        %v4224 = vlaneseq
        %v4225 = vshrl.u32 %v4224, 7
        %v4226 = vsub.s32 4, %v4225
        %v4227 = vrot.slane %v1778, %v4226
        %v4228 = vlaneseq
        %v4229 = vshrl.u32 %v4228, 7
        %v4230 = vsub.s32 4, %v4229
        %v4231 = vrot.slane %v1782, %v4230
        %v4232 = vlaneseq
        %v4233 = vshrl.u32 %v4232, 7
        %v4234 = vsub.s32 4, %v4233
        %v4235 = vrot.slane %v1786, %v4234
        %v4236 = vlaneseq
        %v4237 = vshrl.u32 %v4236, 7
        %v4238 = vsub.s32 4, %v4237
        %v4239 = vrot.slane %v1790, %v4238
        %v4240 = vlaneseq
        %v4241 = vshrl.u32 %v4240, 7
        %v4242 = vsub.s32 4, %v4241
        %v4243 = vrot.slane %v1794, %v4242
        %v4244 = vlaneseq
        %v4245 = vshrl.u32 %v4244, 7
        %v4246 = vsub.s32 4, %v4245
        %v4247 = vrot.slane %v1798, %v4246
        %v4248 = vlaneseq
        %v4249 = vshrl.u32 %v4248, 7
        %v4250 = vsub.s32 4, %v4249
        %v4251 = vrot.slane %v1802, %v4250
        %v4252 = vlaneseq
        %v4253 = vshrl.u32 %v4252, 7
        %v4254 = vsub.s32 4, %v4253
        %v4255 = vrot.slane %v1806, %v4254
        %4257 = vset.pattern.permute.xlu0 0
        %4258 = vperm.xlu0 %4257, %v1888
        %v4259 = vpop.permute.xlu0 %4258
        %4262 = vset.pattern.permute.xlu0 0
        %4263 = vperm.xlu0 %4262, %v1889
        %v4264 = vpop.permute.xlu0 %4263
        %4267 = vset.pattern.permute.xlu0 0
        %4268 = vperm.xlu0 %4267, %v1890
        %v4269 = vpop.permute.xlu0 %4268
        %4272 = vset.pattern.permute.xlu0 0
        %4273 = vperm.xlu0 %4272, %v1891
        %v4274 = vpop.permute.xlu0 %4273
        %v4276 = vmul.f32 %v4227, %v4259
        %v4277 = vmul.f32 %v4227, %v4264
        %v4278 = vmul.f32 %v4227, %v4269
        %v4279 = vmul.f32 %v4227, %v4274
        %v4280 = vmul.f32 %v4231, %v4259
        %v4281 = vmul.f32 %v4231, %v4264
        %v4282 = vmul.f32 %v4231, %v4269
        %v4283 = vmul.f32 %v4231, %v4274
        %v4284 = vmul.f32 %v4235, %v4259
        %v4285 = vmul.f32 %v4235, %v4264
        %v4286 = vmul.f32 %v4235, %v4269
        %v4287 = vmul.f32 %v4235, %v4274
        %v4288 = vmul.f32 %v4239, %v4259
        %v4289 = vmul.f32 %v4239, %v4264
        %v4290 = vmul.f32 %v4239, %v4269
        %v4291 = vmul.f32 %v4239, %v4274
        %v4292 = vmul.f32 %v4243, %v4259
        %v4293 = vmul.f32 %v4243, %v4264
        %v4294 = vmul.f32 %v4243, %v4269
        %v4295 = vmul.f32 %v4243, %v4274
        %v4296 = vmul.f32 %v4247, %v4259
        %v4297 = vmul.f32 %v4247, %v4264
        %v4298 = vmul.f32 %v4247, %v4269
        %v4299 = vmul.f32 %v4247, %v4274
        %v4300 = vmul.f32 %v4251, %v4259
        %v4301 = vmul.f32 %v4251, %v4264
        %v4302 = vmul.f32 %v4251, %v4269
        %v4303 = vmul.f32 %v4251, %v4274
        %v4304 = vmul.f32 %v4255, %v4259
        %v4305 = vmul.f32 %v4255, %v4264
        %v4306 = vmul.f32 %v4255, %v4269
        %v4307 = vmul.f32 %v4255, %v4274
        %v4308 = vadd.f32 %v4192, %v4276
        %v4309 = vadd.f32 %v4193, %v4277
        %v4310 = vadd.f32 %v4194, %v4278
        %v4311 = vadd.f32 %v4195, %v4279
        %v4312 = vadd.f32 %v4196, %v4280
        %v4313 = vadd.f32 %v4197, %v4281
        %v4314 = vadd.f32 %v4198, %v4282
        %v4315 = vadd.f32 %v4199, %v4283
        %v4316 = vadd.f32 %v4200, %v4284
        %v4317 = vadd.f32 %v4201, %v4285
        %v4318 = vadd.f32 %v4202, %v4286
        %v4319 = vadd.f32 %v4203, %v4287
        %v4320 = vadd.f32 %v4204, %v4288
        %v4321 = vadd.f32 %v4205, %v4289
        %v4322 = vadd.f32 %v4206, %v4290
        %v4323 = vadd.f32 %v4207, %v4291
        %v4324 = vadd.f32 %v4208, %v4292
        %v4325 = vadd.f32 %v4209, %v4293
        %v4326 = vadd.f32 %v4210, %v4294
        %v4327 = vadd.f32 %v4211, %v4295
        %v4328 = vadd.f32 %v4212, %v4296
        %v4329 = vadd.f32 %v4213, %v4297
        %v4330 = vadd.f32 %v4214, %v4298
        %v4331 = vadd.f32 %v4215, %v4299
        %v4332 = vadd.f32 %v4216, %v4300
        %v4333 = vadd.f32 %v4217, %v4301
        %v4334 = vadd.f32 %v4218, %v4302
        %v4335 = vadd.f32 %v4219, %v4303
        %v4336 = vadd.f32 %v4220, %v4304
        %v4337 = vadd.f32 %v4221, %v4305
        %v4338 = vadd.f32 %v4222, %v4306
        %v4339 = vadd.f32 %v4223, %v4307
        %v4340 = vlaneseq
        %v4341 = vshrl.u32 %v4340, 7
        %v4342 = vsub.s32 5, %v4341
        %v4343 = vrot.slane %v1778, %v4342
        %v4344 = vlaneseq
        %v4345 = vshrl.u32 %v4344, 7
        %v4346 = vsub.s32 5, %v4345
        %v4347 = vrot.slane %v1782, %v4346
        %v4348 = vlaneseq
        %v4349 = vshrl.u32 %v4348, 7
        %v4350 = vsub.s32 5, %v4349
        %v4351 = vrot.slane %v1786, %v4350
        %v4352 = vlaneseq
        %v4353 = vshrl.u32 %v4352, 7
        %v4354 = vsub.s32 5, %v4353
        %v4355 = vrot.slane %v1790, %v4354
        %v4356 = vlaneseq
        %v4357 = vshrl.u32 %v4356, 7
        %v4358 = vsub.s32 5, %v4357
        %v4359 = vrot.slane %v1794, %v4358
        %v4360 = vlaneseq
        %v4361 = vshrl.u32 %v4360, 7
        %v4362 = vsub.s32 5, %v4361
        %v4363 = vrot.slane %v1798, %v4362
        %v4364 = vlaneseq
        %v4365 = vshrl.u32 %v4364, 7
        %v4366 = vsub.s32 5, %v4365
        %v4367 = vrot.slane %v1802, %v4366
        %v4368 = vlaneseq
        %v4369 = vshrl.u32 %v4368, 7
        %v4370 = vsub.s32 5, %v4369
        %v4371 = vrot.slane %v1806, %v4370
        %4373 = vset.pattern.permute.xlu0 0
        %4374 = vperm.xlu0 %4373, %v1892
        %v4375 = vpop.permute.xlu0 %4374
        %4378 = vset.pattern.permute.xlu0 0
        %4379 = vperm.xlu0 %4378, %v1893
        %v4380 = vpop.permute.xlu0 %4379
        %4383 = vset.pattern.permute.xlu0 0
        %4384 = vperm.xlu0 %4383, %v1894
        %v4385 = vpop.permute.xlu0 %4384
        %4388 = vset.pattern.permute.xlu0 0
        %4389 = vperm.xlu0 %4388, %v1895
        %v4390 = vpop.permute.xlu0 %4389
        %v4392 = vmul.f32 %v4343, %v4375
        %v4393 = vmul.f32 %v4343, %v4380
        %v4394 = vmul.f32 %v4343, %v4385
        %v4395 = vmul.f32 %v4343, %v4390
        %v4396 = vmul.f32 %v4347, %v4375
        %v4397 = vmul.f32 %v4347, %v4380
        %v4398 = vmul.f32 %v4347, %v4385
        %v4399 = vmul.f32 %v4347, %v4390
        %v4400 = vmul.f32 %v4351, %v4375
        %v4401 = vmul.f32 %v4351, %v4380
        %v4402 = vmul.f32 %v4351, %v4385
        %v4403 = vmul.f32 %v4351, %v4390
        %v4404 = vmul.f32 %v4355, %v4375
        %v4405 = vmul.f32 %v4355, %v4380
        %v4406 = vmul.f32 %v4355, %v4385
        %v4407 = vmul.f32 %v4355, %v4390
        %v4408 = vmul.f32 %v4359, %v4375
        %v4409 = vmul.f32 %v4359, %v4380
        %v4410 = vmul.f32 %v4359, %v4385
        %v4411 = vmul.f32 %v4359, %v4390
        %v4412 = vmul.f32 %v4363, %v4375
        %v4413 = vmul.f32 %v4363, %v4380
        %v4414 = vmul.f32 %v4363, %v4385
        %v4415 = vmul.f32 %v4363, %v4390
        %v4416 = vmul.f32 %v4367, %v4375
        %v4417 = vmul.f32 %v4367, %v4380
        %v4418 = vmul.f32 %v4367, %v4385
        %v4419 = vmul.f32 %v4367, %v4390
        %v4420 = vmul.f32 %v4371, %v4375
        %v4421 = vmul.f32 %v4371, %v4380
        %v4422 = vmul.f32 %v4371, %v4385
        %v4423 = vmul.f32 %v4371, %v4390
        %v4424 = vadd.f32 %v4308, %v4392
        %v4425 = vadd.f32 %v4309, %v4393
        %v4426 = vadd.f32 %v4310, %v4394
        %v4427 = vadd.f32 %v4311, %v4395
        %v4428 = vadd.f32 %v4312, %v4396
        %v4429 = vadd.f32 %v4313, %v4397
        %v4430 = vadd.f32 %v4314, %v4398
        %v4431 = vadd.f32 %v4315, %v4399
        %v4432 = vadd.f32 %v4316, %v4400
        %v4433 = vadd.f32 %v4317, %v4401
        %v4434 = vadd.f32 %v4318, %v4402
        %v4435 = vadd.f32 %v4319, %v4403
        %v4436 = vadd.f32 %v4320, %v4404
        %v4437 = vadd.f32 %v4321, %v4405
        %v4438 = vadd.f32 %v4322, %v4406
        %v4439 = vadd.f32 %v4323, %v4407
        %v4440 = vadd.f32 %v4324, %v4408
        %v4441 = vadd.f32 %v4325, %v4409
        %v4442 = vadd.f32 %v4326, %v4410
        %v4443 = vadd.f32 %v4327, %v4411
        %v4444 = vadd.f32 %v4328, %v4412
        %v4445 = vadd.f32 %v4329, %v4413
        %v4446 = vadd.f32 %v4330, %v4414
        %v4447 = vadd.f32 %v4331, %v4415
        %v4448 = vadd.f32 %v4332, %v4416
        %v4449 = vadd.f32 %v4333, %v4417
        %v4450 = vadd.f32 %v4334, %v4418
        %v4451 = vadd.f32 %v4335, %v4419
        %v4452 = vadd.f32 %v4336, %v4420
        %v4453 = vadd.f32 %v4337, %v4421
        %v4454 = vadd.f32 %v4338, %v4422
        %v4455 = vadd.f32 %v4339, %v4423
        %v4456 = vlaneseq
        %v4457 = vshrl.u32 %v4456, 7
        %v4458 = vsub.s32 6, %v4457
        %v4459 = vrot.slane %v1778, %v4458
        %v4460 = vlaneseq
        %v4461 = vshrl.u32 %v4460, 7
        %v4462 = vsub.s32 6, %v4461
        %v4463 = vrot.slane %v1782, %v4462
        %v4464 = vlaneseq
        %v4465 = vshrl.u32 %v4464, 7
        %v4466 = vsub.s32 6, %v4465
        %v4467 = vrot.slane %v1786, %v4466
        %v4468 = vlaneseq
        %v4469 = vshrl.u32 %v4468, 7
        %v4470 = vsub.s32 6, %v4469
        %v4471 = vrot.slane %v1790, %v4470
        %v4472 = vlaneseq
        %v4473 = vshrl.u32 %v4472, 7
        %v4474 = vsub.s32 6, %v4473
        %v4475 = vrot.slane %v1794, %v4474
        %v4476 = vlaneseq
        %v4477 = vshrl.u32 %v4476, 7
        %v4478 = vsub.s32 6, %v4477
        %v4479 = vrot.slane %v1798, %v4478
        %v4480 = vlaneseq
        %v4481 = vshrl.u32 %v4480, 7
        %v4482 = vsub.s32 6, %v4481
        %v4483 = vrot.slane %v1802, %v4482
        %v4484 = vlaneseq
        %v4485 = vshrl.u32 %v4484, 7
        %v4486 = vsub.s32 6, %v4485
        %v4487 = vrot.slane %v1806, %v4486
        %4489 = vset.pattern.permute.xlu0 0
        %4490 = vperm.xlu0 %4489, %v1896
        %v4491 = vpop.permute.xlu0 %4490
        %4494 = vset.pattern.permute.xlu0 0
        %4495 = vperm.xlu0 %4494, %v1897
        %v4496 = vpop.permute.xlu0 %4495
        %4499 = vset.pattern.permute.xlu0 0
        %4500 = vperm.xlu0 %4499, %v1898
        %v4501 = vpop.permute.xlu0 %4500
        %4504 = vset.pattern.permute.xlu0 0
        %4505 = vperm.xlu0 %4504, %v1899
        %v4506 = vpop.permute.xlu0 %4505
        %v4508 = vmul.f32 %v4459, %v4491
        %v4509 = vmul.f32 %v4459, %v4496
        %v4510 = vmul.f32 %v4459, %v4501
        %v4511 = vmul.f32 %v4459, %v4506
        %v4512 = vmul.f32 %v4463, %v4491
        %v4513 = vmul.f32 %v4463, %v4496
        %v4514 = vmul.f32 %v4463, %v4501
        %v4515 = vmul.f32 %v4463, %v4506
        %v4516 = vmul.f32 %v4467, %v4491
        %v4517 = vmul.f32 %v4467, %v4496
        %v4518 = vmul.f32 %v4467, %v4501
        %v4519 = vmul.f32 %v4467, %v4506
        %v4520 = vmul.f32 %v4471, %v4491
        %v4521 = vmul.f32 %v4471, %v4496
        %v4522 = vmul.f32 %v4471, %v4501
        %v4523 = vmul.f32 %v4471, %v4506
        %v4524 = vmul.f32 %v4475, %v4491
        %v4525 = vmul.f32 %v4475, %v4496
        %v4526 = vmul.f32 %v4475, %v4501
        %v4527 = vmul.f32 %v4475, %v4506
        %v4528 = vmul.f32 %v4479, %v4491
        %v4529 = vmul.f32 %v4479, %v4496
        %v4530 = vmul.f32 %v4479, %v4501
        %v4531 = vmul.f32 %v4479, %v4506
        %v4532 = vmul.f32 %v4483, %v4491
        %v4533 = vmul.f32 %v4483, %v4496
        %v4534 = vmul.f32 %v4483, %v4501
        %v4535 = vmul.f32 %v4483, %v4506
        %v4536 = vmul.f32 %v4487, %v4491
        %v4537 = vmul.f32 %v4487, %v4496
        %v4538 = vmul.f32 %v4487, %v4501
        %v4539 = vmul.f32 %v4487, %v4506
        %v4540 = vadd.f32 %v4424, %v4508
        %v4541 = vadd.f32 %v4425, %v4509
        %v4542 = vadd.f32 %v4426, %v4510
        %v4543 = vadd.f32 %v4427, %v4511
        %v4544 = vadd.f32 %v4428, %v4512
        %v4545 = vadd.f32 %v4429, %v4513
        %v4546 = vadd.f32 %v4430, %v4514
        %v4547 = vadd.f32 %v4431, %v4515
        %v4548 = vadd.f32 %v4432, %v4516
        %v4549 = vadd.f32 %v4433, %v4517
        %v4550 = vadd.f32 %v4434, %v4518
        %v4551 = vadd.f32 %v4435, %v4519
        %v4552 = vadd.f32 %v4436, %v4520
        %v4553 = vadd.f32 %v4437, %v4521
        %v4554 = vadd.f32 %v4438, %v4522
        %v4555 = vadd.f32 %v4439, %v4523
        %v4556 = vadd.f32 %v4440, %v4524
        %v4557 = vadd.f32 %v4441, %v4525
        %v4558 = vadd.f32 %v4442, %v4526
        %v4559 = vadd.f32 %v4443, %v4527
        %v4560 = vadd.f32 %v4444, %v4528
        %v4561 = vadd.f32 %v4445, %v4529
        %v4562 = vadd.f32 %v4446, %v4530
        %v4563 = vadd.f32 %v4447, %v4531
        %v4564 = vadd.f32 %v4448, %v4532
        %v4565 = vadd.f32 %v4449, %v4533
        %v4566 = vadd.f32 %v4450, %v4534
        %v4567 = vadd.f32 %v4451, %v4535
        %v4568 = vadd.f32 %v4452, %v4536
        %v4569 = vadd.f32 %v4453, %v4537
        %v4570 = vadd.f32 %v4454, %v4538
        %v4571 = vadd.f32 %v4455, %v4539
        %v4572 = vlaneseq
        %v4573 = vshrl.u32 %v4572, 7
        %v4574 = vsub.s32 7, %v4573
        %v4575 = vrot.slane %v1778, %v4574
        %v4576 = vlaneseq
        %v4577 = vshrl.u32 %v4576, 7
        %v4578 = vsub.s32 7, %v4577
        %v4579 = vrot.slane %v1782, %v4578
        %v4580 = vlaneseq
        %v4581 = vshrl.u32 %v4580, 7
        %v4582 = vsub.s32 7, %v4581
        %v4583 = vrot.slane %v1786, %v4582
        %v4584 = vlaneseq
        %v4585 = vshrl.u32 %v4584, 7
        %v4586 = vsub.s32 7, %v4585
        %v4587 = vrot.slane %v1790, %v4586
        %v4588 = vlaneseq
        %v4589 = vshrl.u32 %v4588, 7
        %v4590 = vsub.s32 7, %v4589
        %v4591 = vrot.slane %v1794, %v4590
        %v4592 = vlaneseq
        %v4593 = vshrl.u32 %v4592, 7
        %v4594 = vsub.s32 7, %v4593
        %v4595 = vrot.slane %v1798, %v4594
        %v4596 = vlaneseq
        %v4597 = vshrl.u32 %v4596, 7
        %v4598 = vsub.s32 7, %v4597
        %v4599 = vrot.slane %v1802, %v4598
        %v4600 = vlaneseq
        %v4601 = vshrl.u32 %v4600, 7
        %v4602 = vsub.s32 7, %v4601
        %v4603 = vrot.slane %v1806, %v4602
        %4605 = vset.pattern.permute.xlu0 0
        %4606 = vperm.xlu0 %4605, %v1900
        %v4607 = vpop.permute.xlu0 %4606
        %4610 = vset.pattern.permute.xlu0 0
        %4611 = vperm.xlu0 %4610, %v1901
        %v4612 = vpop.permute.xlu0 %4611
        %4615 = vset.pattern.permute.xlu0 0
        %4616 = vperm.xlu0 %4615, %v1902
        %v4617 = vpop.permute.xlu0 %4616
        %4620 = vset.pattern.permute.xlu0 0
        %4621 = vperm.xlu0 %4620, %v1903
        %v4622 = vpop.permute.xlu0 %4621
        %v4624 = vmul.f32 %v4575, %v4607
        %v4625 = vmul.f32 %v4575, %v4612
        %v4626 = vmul.f32 %v4575, %v4617
        %v4627 = vmul.f32 %v4575, %v4622
        %v4628 = vmul.f32 %v4579, %v4607
        %v4629 = vmul.f32 %v4579, %v4612
        %v4630 = vmul.f32 %v4579, %v4617
        %v4631 = vmul.f32 %v4579, %v4622
        %v4632 = vmul.f32 %v4583, %v4607
        %v4633 = vmul.f32 %v4583, %v4612
        %v4634 = vmul.f32 %v4583, %v4617
        %v4635 = vmul.f32 %v4583, %v4622
        %v4636 = vmul.f32 %v4587, %v4607
        %v4637 = vmul.f32 %v4587, %v4612
        %v4638 = vmul.f32 %v4587, %v4617
        %v4639 = vmul.f32 %v4587, %v4622
        %v4640 = vmul.f32 %v4591, %v4607
        %v4641 = vmul.f32 %v4591, %v4612
        %v4642 = vmul.f32 %v4591, %v4617
        %v4643 = vmul.f32 %v4591, %v4622
        %v4644 = vmul.f32 %v4595, %v4607
        %v4645 = vmul.f32 %v4595, %v4612
        %v4646 = vmul.f32 %v4595, %v4617
        %v4647 = vmul.f32 %v4595, %v4622
        %v4648 = vmul.f32 %v4599, %v4607
        %v4649 = vmul.f32 %v4599, %v4612
        %v4650 = vmul.f32 %v4599, %v4617
        %v4651 = vmul.f32 %v4599, %v4622
        %v4652 = vmul.f32 %v4603, %v4607
        %v4653 = vmul.f32 %v4603, %v4612
        %v4654 = vmul.f32 %v4603, %v4617
        %v4655 = vmul.f32 %v4603, %v4622
        %v4656 = vadd.f32 %v4540, %v4624
        %v4657 = vadd.f32 %v4541, %v4625
        %v4658 = vadd.f32 %v4542, %v4626
        %v4659 = vadd.f32 %v4543, %v4627
        %v4660 = vadd.f32 %v4544, %v4628
        %v4661 = vadd.f32 %v4545, %v4629
        %v4662 = vadd.f32 %v4546, %v4630
        %v4663 = vadd.f32 %v4547, %v4631
        %v4664 = vadd.f32 %v4548, %v4632
        %v4665 = vadd.f32 %v4549, %v4633
        %v4666 = vadd.f32 %v4550, %v4634
        %v4667 = vadd.f32 %v4551, %v4635
        %v4668 = vadd.f32 %v4552, %v4636
        %v4669 = vadd.f32 %v4553, %v4637
        %v4670 = vadd.f32 %v4554, %v4638
        %v4671 = vadd.f32 %v4555, %v4639
        %v4672 = vadd.f32 %v4556, %v4640
        %v4673 = vadd.f32 %v4557, %v4641
        %v4674 = vadd.f32 %v4558, %v4642
        %v4675 = vadd.f32 %v4559, %v4643
        %v4676 = vadd.f32 %v4560, %v4644
        %v4677 = vadd.f32 %v4561, %v4645
        %v4678 = vadd.f32 %v4562, %v4646
        %v4679 = vadd.f32 %v4563, %v4647
        %v4680 = vadd.f32 %v4564, %v4648
        %v4681 = vadd.f32 %v4565, %v4649
        %v4682 = vadd.f32 %v4566, %v4650
        %v4683 = vadd.f32 %v4567, %v4651
        %v4684 = vadd.f32 %v4568, %v4652
        %v4685 = vadd.f32 %v4569, %v4653
        %v4686 = vadd.f32 %v4570, %v4654
        %v4687 = vadd.f32 %v4571, %v4655
        %v4688 = vlaneseq
        %v4689 = vshrl.u32 %v4688, 7
        %v4690 = vsub.s32 0, %v4689
        %v4691 = vrot.slane %v1779, %v4690
        %v4692 = vlaneseq
        %v4693 = vshrl.u32 %v4692, 7
        %v4694 = vsub.s32 0, %v4693
        %v4695 = vrot.slane %v1783, %v4694
        %v4696 = vlaneseq
        %v4697 = vshrl.u32 %v4696, 7
        %v4698 = vsub.s32 0, %v4697
        %v4699 = vrot.slane %v1787, %v4698
        %v4700 = vlaneseq
        %v4701 = vshrl.u32 %v4700, 7
        %v4702 = vsub.s32 0, %v4701
        %v4703 = vrot.slane %v1791, %v4702
        %v4704 = vlaneseq
        %v4705 = vshrl.u32 %v4704, 7
        %v4706 = vsub.s32 0, %v4705
        %v4707 = vrot.slane %v1795, %v4706
        %v4708 = vlaneseq
        %v4709 = vshrl.u32 %v4708, 7
        %v4710 = vsub.s32 0, %v4709
        %v4711 = vrot.slane %v1799, %v4710
        %v4712 = vlaneseq
        %v4713 = vshrl.u32 %v4712, 7
        %v4714 = vsub.s32 0, %v4713
        %v4715 = vrot.slane %v1803, %v4714
        %v4716 = vlaneseq
        %v4717 = vshrl.u32 %v4716, 7
        %v4718 = vsub.s32 0, %v4717
        %v4719 = vrot.slane %v1807, %v4718
        %4721 = vset.pattern.permute.xlu0 0
        %4722 = vperm.xlu0 %4721, %v1904
        %v4723 = vpop.permute.xlu0 %4722
        %4726 = vset.pattern.permute.xlu0 0
        %4727 = vperm.xlu0 %4726, %v1905
        %v4728 = vpop.permute.xlu0 %4727
        %4731 = vset.pattern.permute.xlu0 0
        %4732 = vperm.xlu0 %4731, %v1906
        %v4733 = vpop.permute.xlu0 %4732
        %4736 = vset.pattern.permute.xlu0 0
        %4737 = vperm.xlu0 %4736, %v1907
        %v4738 = vpop.permute.xlu0 %4737
        %v4740 = vmul.f32 %v4691, %v4723
        %v4741 = vmul.f32 %v4691, %v4728
        %v4742 = vmul.f32 %v4691, %v4733
        %v4743 = vmul.f32 %v4691, %v4738
        %v4744 = vmul.f32 %v4695, %v4723
        %v4745 = vmul.f32 %v4695, %v4728
        %v4746 = vmul.f32 %v4695, %v4733
        %v4747 = vmul.f32 %v4695, %v4738
        %v4748 = vmul.f32 %v4699, %v4723
        %v4749 = vmul.f32 %v4699, %v4728
        %v4750 = vmul.f32 %v4699, %v4733
        %v4751 = vmul.f32 %v4699, %v4738
        %v4752 = vmul.f32 %v4703, %v4723
        %v4753 = vmul.f32 %v4703, %v4728
        %v4754 = vmul.f32 %v4703, %v4733
        %v4755 = vmul.f32 %v4703, %v4738
        %v4756 = vmul.f32 %v4707, %v4723
        %v4757 = vmul.f32 %v4707, %v4728
        %v4758 = vmul.f32 %v4707, %v4733
        %v4759 = vmul.f32 %v4707, %v4738
        %v4760 = vmul.f32 %v4711, %v4723
        %v4761 = vmul.f32 %v4711, %v4728
        %v4762 = vmul.f32 %v4711, %v4733
        %v4763 = vmul.f32 %v4711, %v4738
        %v4764 = vmul.f32 %v4715, %v4723
        %v4765 = vmul.f32 %v4715, %v4728
        %v4766 = vmul.f32 %v4715, %v4733
        %v4767 = vmul.f32 %v4715, %v4738
        %v4768 = vmul.f32 %v4719, %v4723
        %v4769 = vmul.f32 %v4719, %v4728
        %v4770 = vmul.f32 %v4719, %v4733
        %v4771 = vmul.f32 %v4719, %v4738
        %v4772 = vadd.f32 %v4656, %v4740
        %v4773 = vadd.f32 %v4657, %v4741
        %v4774 = vadd.f32 %v4658, %v4742
        %v4775 = vadd.f32 %v4659, %v4743
        %v4776 = vadd.f32 %v4660, %v4744
        %v4777 = vadd.f32 %v4661, %v4745
        %v4778 = vadd.f32 %v4662, %v4746
        %v4779 = vadd.f32 %v4663, %v4747
        %v4780 = vadd.f32 %v4664, %v4748
        %v4781 = vadd.f32 %v4665, %v4749
        %v4782 = vadd.f32 %v4666, %v4750
        %v4783 = vadd.f32 %v4667, %v4751
        %v4784 = vadd.f32 %v4668, %v4752
        %v4785 = vadd.f32 %v4669, %v4753
        %v4786 = vadd.f32 %v4670, %v4754
        %v4787 = vadd.f32 %v4671, %v4755
        %v4788 = vadd.f32 %v4672, %v4756
        %v4789 = vadd.f32 %v4673, %v4757
        %v4790 = vadd.f32 %v4674, %v4758
        %v4791 = vadd.f32 %v4675, %v4759
        %v4792 = vadd.f32 %v4676, %v4760
        %v4793 = vadd.f32 %v4677, %v4761
        %v4794 = vadd.f32 %v4678, %v4762
        %v4795 = vadd.f32 %v4679, %v4763
        %v4796 = vadd.f32 %v4680, %v4764
        %v4797 = vadd.f32 %v4681, %v4765
        %v4798 = vadd.f32 %v4682, %v4766
        %v4799 = vadd.f32 %v4683, %v4767
        %v4800 = vadd.f32 %v4684, %v4768
        %v4801 = vadd.f32 %v4685, %v4769
        %v4802 = vadd.f32 %v4686, %v4770
        %v4803 = vadd.f32 %v4687, %v4771
        %v4804 = vlaneseq
        %v4805 = vshrl.u32 %v4804, 7
        %v4806 = vsub.s32 1, %v4805
        %v4807 = vrot.slane %v1779, %v4806
        %v4808 = vlaneseq
        %v4809 = vshrl.u32 %v4808, 7
        %v4810 = vsub.s32 1, %v4809
        %v4811 = vrot.slane %v1783, %v4810
        %v4812 = vlaneseq
        %v4813 = vshrl.u32 %v4812, 7
        %v4814 = vsub.s32 1, %v4813
        %v4815 = vrot.slane %v1787, %v4814
        %v4816 = vlaneseq
        %v4817 = vshrl.u32 %v4816, 7
        %v4818 = vsub.s32 1, %v4817
        %v4819 = vrot.slane %v1791, %v4818
        %v4820 = vlaneseq
        %v4821 = vshrl.u32 %v4820, 7
        %v4822 = vsub.s32 1, %v4821
        %v4823 = vrot.slane %v1795, %v4822
        %v4824 = vlaneseq
        %v4825 = vshrl.u32 %v4824, 7
        %v4826 = vsub.s32 1, %v4825
        %v4827 = vrot.slane %v1799, %v4826
        %v4828 = vlaneseq
        %v4829 = vshrl.u32 %v4828, 7
        %v4830 = vsub.s32 1, %v4829
        %v4831 = vrot.slane %v1803, %v4830
        %v4832 = vlaneseq
        %v4833 = vshrl.u32 %v4832, 7
        %v4834 = vsub.s32 1, %v4833
        %v4835 = vrot.slane %v1807, %v4834
        %4837 = vset.pattern.permute.xlu0 0
        %4838 = vperm.xlu0 %4837, %v1908
        %v4839 = vpop.permute.xlu0 %4838
        %4842 = vset.pattern.permute.xlu0 0
        %4843 = vperm.xlu0 %4842, %v1909
        %v4844 = vpop.permute.xlu0 %4843
        %4847 = vset.pattern.permute.xlu0 0
        %4848 = vperm.xlu0 %4847, %v1910
        %v4849 = vpop.permute.xlu0 %4848
        %4852 = vset.pattern.permute.xlu0 0
        %4853 = vperm.xlu0 %4852, %v1911
        %v4854 = vpop.permute.xlu0 %4853
        %v4856 = vmul.f32 %v4807, %v4839
        %v4857 = vmul.f32 %v4807, %v4844
        %v4858 = vmul.f32 %v4807, %v4849
        %v4859 = vmul.f32 %v4807, %v4854
        %v4860 = vmul.f32 %v4811, %v4839
        %v4861 = vmul.f32 %v4811, %v4844
        %v4862 = vmul.f32 %v4811, %v4849
        %v4863 = vmul.f32 %v4811, %v4854
        %v4864 = vmul.f32 %v4815, %v4839
        %v4865 = vmul.f32 %v4815, %v4844
        %v4866 = vmul.f32 %v4815, %v4849
        %v4867 = vmul.f32 %v4815, %v4854
        %v4868 = vmul.f32 %v4819, %v4839
        %v4869 = vmul.f32 %v4819, %v4844
        %v4870 = vmul.f32 %v4819, %v4849
        %v4871 = vmul.f32 %v4819, %v4854
        %v4872 = vmul.f32 %v4823, %v4839
        %v4873 = vmul.f32 %v4823, %v4844
        %v4874 = vmul.f32 %v4823, %v4849
        %v4875 = vmul.f32 %v4823, %v4854
        %v4876 = vmul.f32 %v4827, %v4839
        %v4877 = vmul.f32 %v4827, %v4844
        %v4878 = vmul.f32 %v4827, %v4849
        %v4879 = vmul.f32 %v4827, %v4854
        %v4880 = vmul.f32 %v4831, %v4839
        %v4881 = vmul.f32 %v4831, %v4844
        %v4882 = vmul.f32 %v4831, %v4849
        %v4883 = vmul.f32 %v4831, %v4854
        %v4884 = vmul.f32 %v4835, %v4839
        %v4885 = vmul.f32 %v4835, %v4844
        %v4886 = vmul.f32 %v4835, %v4849
        %v4887 = vmul.f32 %v4835, %v4854
        %v4888 = vadd.f32 %v4772, %v4856
        %v4889 = vadd.f32 %v4773, %v4857
        %v4890 = vadd.f32 %v4774, %v4858
        %v4891 = vadd.f32 %v4775, %v4859
        %v4892 = vadd.f32 %v4776, %v4860
        %v4893 = vadd.f32 %v4777, %v4861
        %v4894 = vadd.f32 %v4778, %v4862
        %v4895 = vadd.f32 %v4779, %v4863
        %v4896 = vadd.f32 %v4780, %v4864
        %v4897 = vadd.f32 %v4781, %v4865
        %v4898 = vadd.f32 %v4782, %v4866
        %v4899 = vadd.f32 %v4783, %v4867
        %v4900 = vadd.f32 %v4784, %v4868
        %v4901 = vadd.f32 %v4785, %v4869
        %v4902 = vadd.f32 %v4786, %v4870
        %v4903 = vadd.f32 %v4787, %v4871
        %v4904 = vadd.f32 %v4788, %v4872
        %v4905 = vadd.f32 %v4789, %v4873
        %v4906 = vadd.f32 %v4790, %v4874
        %v4907 = vadd.f32 %v4791, %v4875
        %v4908 = vadd.f32 %v4792, %v4876
        %v4909 = vadd.f32 %v4793, %v4877
        %v4910 = vadd.f32 %v4794, %v4878
        %v4911 = vadd.f32 %v4795, %v4879
        %v4912 = vadd.f32 %v4796, %v4880
        %v4913 = vadd.f32 %v4797, %v4881
        %v4914 = vadd.f32 %v4798, %v4882
        %v4915 = vadd.f32 %v4799, %v4883
        %v4916 = vadd.f32 %v4800, %v4884
        %v4917 = vadd.f32 %v4801, %v4885
        %v4918 = vadd.f32 %v4802, %v4886
        %v4919 = vadd.f32 %v4803, %v4887
        %v4920 = vlaneseq
        %v4921 = vshrl.u32 %v4920, 7
        %v4922 = vsub.s32 2, %v4921
        %v4923 = vrot.slane %v1779, %v4922
        %v4924 = vlaneseq
        %v4925 = vshrl.u32 %v4924, 7
        %v4926 = vsub.s32 2, %v4925
        %v4927 = vrot.slane %v1783, %v4926
        %v4928 = vlaneseq
        %v4929 = vshrl.u32 %v4928, 7
        %v4930 = vsub.s32 2, %v4929
        %v4931 = vrot.slane %v1787, %v4930
        %v4932 = vlaneseq
        %v4933 = vshrl.u32 %v4932, 7
        %v4934 = vsub.s32 2, %v4933
        %v4935 = vrot.slane %v1791, %v4934
        %v4936 = vlaneseq
        %v4937 = vshrl.u32 %v4936, 7
        %v4938 = vsub.s32 2, %v4937
        %v4939 = vrot.slane %v1795, %v4938
        %v4940 = vlaneseq
        %v4941 = vshrl.u32 %v4940, 7
        %v4942 = vsub.s32 2, %v4941
        %v4943 = vrot.slane %v1799, %v4942
        %v4944 = vlaneseq
        %v4945 = vshrl.u32 %v4944, 7
        %v4946 = vsub.s32 2, %v4945
        %v4947 = vrot.slane %v1803, %v4946
        %v4948 = vlaneseq
        %v4949 = vshrl.u32 %v4948, 7
        %v4950 = vsub.s32 2, %v4949
        %v4951 = vrot.slane %v1807, %v4950
        %4953 = vset.pattern.permute.xlu0 0
        %4954 = vperm.xlu0 %4953, %v1912
        %v4955 = vpop.permute.xlu0 %4954
        %4958 = vset.pattern.permute.xlu0 0
        %4959 = vperm.xlu0 %4958, %v1913
        %v4960 = vpop.permute.xlu0 %4959
        %4963 = vset.pattern.permute.xlu0 0
        %4964 = vperm.xlu0 %4963, %v1914
        %v4965 = vpop.permute.xlu0 %4964
        %4968 = vset.pattern.permute.xlu0 0
        %4969 = vperm.xlu0 %4968, %v1915
        %v4970 = vpop.permute.xlu0 %4969
        %v4972 = vmul.f32 %v4923, %v4955
        %v4973 = vmul.f32 %v4923, %v4960
        %v4974 = vmul.f32 %v4923, %v4965
        %v4975 = vmul.f32 %v4923, %v4970
        %v4976 = vmul.f32 %v4927, %v4955
        %v4977 = vmul.f32 %v4927, %v4960
        %v4978 = vmul.f32 %v4927, %v4965
        %v4979 = vmul.f32 %v4927, %v4970
        %v4980 = vmul.f32 %v4931, %v4955
        %v4981 = vmul.f32 %v4931, %v4960
        %v4982 = vmul.f32 %v4931, %v4965
        %v4983 = vmul.f32 %v4931, %v4970
        %v4984 = vmul.f32 %v4935, %v4955
        %v4985 = vmul.f32 %v4935, %v4960
        %v4986 = vmul.f32 %v4935, %v4965
        %v4987 = vmul.f32 %v4935, %v4970
        %v4988 = vmul.f32 %v4939, %v4955
        %v4989 = vmul.f32 %v4939, %v4960
        %v4990 = vmul.f32 %v4939, %v4965
        %v4991 = vmul.f32 %v4939, %v4970
        %v4992 = vmul.f32 %v4943, %v4955
        %v4993 = vmul.f32 %v4943, %v4960
        %v4994 = vmul.f32 %v4943, %v4965
        %v4995 = vmul.f32 %v4943, %v4970
        %v4996 = vmul.f32 %v4947, %v4955
        %v4997 = vmul.f32 %v4947, %v4960
        %v4998 = vmul.f32 %v4947, %v4965
        %v4999 = vmul.f32 %v4947, %v4970
        %v5000 = vmul.f32 %v4951, %v4955
        %v5001 = vmul.f32 %v4951, %v4960
        %v5002 = vmul.f32 %v4951, %v4965
        %v5003 = vmul.f32 %v4951, %v4970
        %v5004 = vadd.f32 %v4888, %v4972
        %v5005 = vadd.f32 %v4889, %v4973
        %v5006 = vadd.f32 %v4890, %v4974
        %v5007 = vadd.f32 %v4891, %v4975
        %v5008 = vadd.f32 %v4892, %v4976
        %v5009 = vadd.f32 %v4893, %v4977
        %v5010 = vadd.f32 %v4894, %v4978
        %v5011 = vadd.f32 %v4895, %v4979
        %v5012 = vadd.f32 %v4896, %v4980
        %v5013 = vadd.f32 %v4897, %v4981
        %v5014 = vadd.f32 %v4898, %v4982
        %v5015 = vadd.f32 %v4899, %v4983
        %v5016 = vadd.f32 %v4900, %v4984
        %v5017 = vadd.f32 %v4901, %v4985
        %v5018 = vadd.f32 %v4902, %v4986
        %v5019 = vadd.f32 %v4903, %v4987
        %v5020 = vadd.f32 %v4904, %v4988
        %v5021 = vadd.f32 %v4905, %v4989
        %v5022 = vadd.f32 %v4906, %v4990
        %v5023 = vadd.f32 %v4907, %v4991
        %v5024 = vadd.f32 %v4908, %v4992
        %v5025 = vadd.f32 %v4909, %v4993
        %v5026 = vadd.f32 %v4910, %v4994
        %v5027 = vadd.f32 %v4911, %v4995
        %v5028 = vadd.f32 %v4912, %v4996
        %v5029 = vadd.f32 %v4913, %v4997
        %v5030 = vadd.f32 %v4914, %v4998
        %v5031 = vadd.f32 %v4915, %v4999
        %v5032 = vadd.f32 %v4916, %v5000
        %v5033 = vadd.f32 %v4917, %v5001
        %v5034 = vadd.f32 %v4918, %v5002
        %v5035 = vadd.f32 %v4919, %v5003
        %v5036 = vlaneseq
        %v5037 = vshrl.u32 %v5036, 7
        %v5038 = vsub.s32 3, %v5037
        %v5039 = vrot.slane %v1779, %v5038
        %v5040 = vlaneseq
        %v5041 = vshrl.u32 %v5040, 7
        %v5042 = vsub.s32 3, %v5041
        %v5043 = vrot.slane %v1783, %v5042
        %v5044 = vlaneseq
        %v5045 = vshrl.u32 %v5044, 7
        %v5046 = vsub.s32 3, %v5045
        %v5047 = vrot.slane %v1787, %v5046
        %v5048 = vlaneseq
        %v5049 = vshrl.u32 %v5048, 7
        %v5050 = vsub.s32 3, %v5049
        %v5051 = vrot.slane %v1791, %v5050
        %v5052 = vlaneseq
        %v5053 = vshrl.u32 %v5052, 7
        %v5054 = vsub.s32 3, %v5053
        %v5055 = vrot.slane %v1795, %v5054
        %v5056 = vlaneseq
        %v5057 = vshrl.u32 %v5056, 7
        %v5058 = vsub.s32 3, %v5057
        %v5059 = vrot.slane %v1799, %v5058
        %v5060 = vlaneseq
        %v5061 = vshrl.u32 %v5060, 7
        %v5062 = vsub.s32 3, %v5061
        %v5063 = vrot.slane %v1803, %v5062
        %v5064 = vlaneseq
        %v5065 = vshrl.u32 %v5064, 7
        %v5066 = vsub.s32 3, %v5065
        %v5067 = vrot.slane %v1807, %v5066
        %5069 = vset.pattern.permute.xlu0 0
        %5070 = vperm.xlu0 %5069, %v1916
        %v5071 = vpop.permute.xlu0 %5070
        %5074 = vset.pattern.permute.xlu0 0
        %5075 = vperm.xlu0 %5074, %v1917
        %v5076 = vpop.permute.xlu0 %5075
        %5079 = vset.pattern.permute.xlu0 0
        %5080 = vperm.xlu0 %5079, %v1918
        %v5081 = vpop.permute.xlu0 %5080
        %5084 = vset.pattern.permute.xlu0 0
        %5085 = vperm.xlu0 %5084, %v1919
        %v5086 = vpop.permute.xlu0 %5085
        %v5088 = vmul.f32 %v5039, %v5071
        %v5089 = vmul.f32 %v5039, %v5076
        %v5090 = vmul.f32 %v5039, %v5081
        %v5091 = vmul.f32 %v5039, %v5086
        %v5092 = vmul.f32 %v5043, %v5071
        %v5093 = vmul.f32 %v5043, %v5076
        %v5094 = vmul.f32 %v5043, %v5081
        %v5095 = vmul.f32 %v5043, %v5086
        %v5096 = vmul.f32 %v5047, %v5071
        %v5097 = vmul.f32 %v5047, %v5076
        %v5098 = vmul.f32 %v5047, %v5081
        %v5099 = vmul.f32 %v5047, %v5086
        %v5100 = vmul.f32 %v5051, %v5071
        %v5101 = vmul.f32 %v5051, %v5076
        %v5102 = vmul.f32 %v5051, %v5081
        %v5103 = vmul.f32 %v5051, %v5086
        %v5104 = vmul.f32 %v5055, %v5071
        %v5105 = vmul.f32 %v5055, %v5076
        %v5106 = vmul.f32 %v5055, %v5081
        %v5107 = vmul.f32 %v5055, %v5086
        %v5108 = vmul.f32 %v5059, %v5071
        %v5109 = vmul.f32 %v5059, %v5076
        %v5110 = vmul.f32 %v5059, %v5081
        %v5111 = vmul.f32 %v5059, %v5086
        %v5112 = vmul.f32 %v5063, %v5071
        %v5113 = vmul.f32 %v5063, %v5076
        %v5114 = vmul.f32 %v5063, %v5081
        %v5115 = vmul.f32 %v5063, %v5086
        %v5116 = vmul.f32 %v5067, %v5071
        %v5117 = vmul.f32 %v5067, %v5076
        %v5118 = vmul.f32 %v5067, %v5081
        %v5119 = vmul.f32 %v5067, %v5086
        %v5120 = vadd.f32 %v5004, %v5088
        %v5121 = vadd.f32 %v5005, %v5089
        %v5122 = vadd.f32 %v5006, %v5090
        %v5123 = vadd.f32 %v5007, %v5091
        %v5124 = vadd.f32 %v5008, %v5092
        %v5125 = vadd.f32 %v5009, %v5093
        %v5126 = vadd.f32 %v5010, %v5094
        %v5127 = vadd.f32 %v5011, %v5095
        %v5128 = vadd.f32 %v5012, %v5096
        %v5129 = vadd.f32 %v5013, %v5097
        %v5130 = vadd.f32 %v5014, %v5098
        %v5131 = vadd.f32 %v5015, %v5099
        %v5132 = vadd.f32 %v5016, %v5100
        %v5133 = vadd.f32 %v5017, %v5101
        %v5134 = vadd.f32 %v5018, %v5102
        %v5135 = vadd.f32 %v5019, %v5103
        %v5136 = vadd.f32 %v5020, %v5104
        %v5137 = vadd.f32 %v5021, %v5105
        %v5138 = vadd.f32 %v5022, %v5106
        %v5139 = vadd.f32 %v5023, %v5107
        %v5140 = vadd.f32 %v5024, %v5108
        %v5141 = vadd.f32 %v5025, %v5109
        %v5142 = vadd.f32 %v5026, %v5110
        %v5143 = vadd.f32 %v5027, %v5111
        %v5144 = vadd.f32 %v5028, %v5112
        %v5145 = vadd.f32 %v5029, %v5113
        %v5146 = vadd.f32 %v5030, %v5114
        %v5147 = vadd.f32 %v5031, %v5115
        %v5148 = vadd.f32 %v5032, %v5116
        %v5149 = vadd.f32 %v5033, %v5117
        %v5150 = vadd.f32 %v5034, %v5118
        %v5151 = vadd.f32 %v5035, %v5119
        %v5152 = vlaneseq
        %v5153 = vshrl.u32 %v5152, 7
        %v5154 = vsub.s32 4, %v5153
        %v5155 = vrot.slane %v1779, %v5154
        %v5156 = vlaneseq
        %v5157 = vshrl.u32 %v5156, 7
        %v5158 = vsub.s32 4, %v5157
        %v5159 = vrot.slane %v1783, %v5158
        %v5160 = vlaneseq
        %v5161 = vshrl.u32 %v5160, 7
        %v5162 = vsub.s32 4, %v5161
        %v5163 = vrot.slane %v1787, %v5162
        %v5164 = vlaneseq
        %v5165 = vshrl.u32 %v5164, 7
        %v5166 = vsub.s32 4, %v5165
        %v5167 = vrot.slane %v1791, %v5166
        %v5168 = vlaneseq
        %v5169 = vshrl.u32 %v5168, 7
        %v5170 = vsub.s32 4, %v5169
        %v5171 = vrot.slane %v1795, %v5170
        %v5172 = vlaneseq
        %v5173 = vshrl.u32 %v5172, 7
        %v5174 = vsub.s32 4, %v5173
        %v5175 = vrot.slane %v1799, %v5174
        %v5176 = vlaneseq
        %v5177 = vshrl.u32 %v5176, 7
        %v5178 = vsub.s32 4, %v5177
        %v5179 = vrot.slane %v1803, %v5178
        %v5180 = vlaneseq
        %v5181 = vshrl.u32 %v5180, 7
        %v5182 = vsub.s32 4, %v5181
        %v5183 = vrot.slane %v1807, %v5182
        %5185 = vset.pattern.permute.xlu0 0
        %5186 = vperm.xlu0 %5185, %v1920
        %v5187 = vpop.permute.xlu0 %5186
        %5190 = vset.pattern.permute.xlu0 0
        %5191 = vperm.xlu0 %5190, %v1921
        %v5192 = vpop.permute.xlu0 %5191
        %5195 = vset.pattern.permute.xlu0 0
        %5196 = vperm.xlu0 %5195, %v1922
        %v5197 = vpop.permute.xlu0 %5196
        %5200 = vset.pattern.permute.xlu0 0
        %5201 = vperm.xlu0 %5200, %v1923
        %v5202 = vpop.permute.xlu0 %5201
        %v5204 = vmul.f32 %v5155, %v5187
        %v5205 = vmul.f32 %v5155, %v5192
        %v5206 = vmul.f32 %v5155, %v5197
        %v5207 = vmul.f32 %v5155, %v5202
        %v5208 = vmul.f32 %v5159, %v5187
        %v5209 = vmul.f32 %v5159, %v5192
        %v5210 = vmul.f32 %v5159, %v5197
        %v5211 = vmul.f32 %v5159, %v5202
        %v5212 = vmul.f32 %v5163, %v5187
        %v5213 = vmul.f32 %v5163, %v5192
        %v5214 = vmul.f32 %v5163, %v5197
        %v5215 = vmul.f32 %v5163, %v5202
        %v5216 = vmul.f32 %v5167, %v5187
        %v5217 = vmul.f32 %v5167, %v5192
        %v5218 = vmul.f32 %v5167, %v5197
        %v5219 = vmul.f32 %v5167, %v5202
        %v5220 = vmul.f32 %v5171, %v5187
        %v5221 = vmul.f32 %v5171, %v5192
        %v5222 = vmul.f32 %v5171, %v5197
        %v5223 = vmul.f32 %v5171, %v5202
        %v5224 = vmul.f32 %v5175, %v5187
        %v5225 = vmul.f32 %v5175, %v5192
        %v5226 = vmul.f32 %v5175, %v5197
        %v5227 = vmul.f32 %v5175, %v5202
        %v5228 = vmul.f32 %v5179, %v5187
        %v5229 = vmul.f32 %v5179, %v5192
        %v5230 = vmul.f32 %v5179, %v5197
        %v5231 = vmul.f32 %v5179, %v5202
        %v5232 = vmul.f32 %v5183, %v5187
        %v5233 = vmul.f32 %v5183, %v5192
        %v5234 = vmul.f32 %v5183, %v5197
        %v5235 = vmul.f32 %v5183, %v5202
        %v5236 = vadd.f32 %v5120, %v5204
        %v5237 = vadd.f32 %v5121, %v5205
        %v5238 = vadd.f32 %v5122, %v5206
        %v5239 = vadd.f32 %v5123, %v5207
        %v5240 = vadd.f32 %v5124, %v5208
        %v5241 = vadd.f32 %v5125, %v5209
        %v5242 = vadd.f32 %v5126, %v5210
        %v5243 = vadd.f32 %v5127, %v5211
        %v5244 = vadd.f32 %v5128, %v5212
        %v5245 = vadd.f32 %v5129, %v5213
        %v5246 = vadd.f32 %v5130, %v5214
        %v5247 = vadd.f32 %v5131, %v5215
        %v5248 = vadd.f32 %v5132, %v5216
        %v5249 = vadd.f32 %v5133, %v5217
        %v5250 = vadd.f32 %v5134, %v5218
        %v5251 = vadd.f32 %v5135, %v5219
        %v5252 = vadd.f32 %v5136, %v5220
        %v5253 = vadd.f32 %v5137, %v5221
        %v5254 = vadd.f32 %v5138, %v5222
        %v5255 = vadd.f32 %v5139, %v5223
        %v5256 = vadd.f32 %v5140, %v5224
        %v5257 = vadd.f32 %v5141, %v5225
        %v5258 = vadd.f32 %v5142, %v5226
        %v5259 = vadd.f32 %v5143, %v5227
        %v5260 = vadd.f32 %v5144, %v5228
        %v5261 = vadd.f32 %v5145, %v5229
        %v5262 = vadd.f32 %v5146, %v5230
        %v5263 = vadd.f32 %v5147, %v5231
        %v5264 = vadd.f32 %v5148, %v5232
        %v5265 = vadd.f32 %v5149, %v5233
        %v5266 = vadd.f32 %v5150, %v5234
        %v5267 = vadd.f32 %v5151, %v5235
        %v5268 = vlaneseq
        %v5269 = vshrl.u32 %v5268, 7
        %v5270 = vsub.s32 5, %v5269
        %v5271 = vrot.slane %v1779, %v5270
        %v5272 = vlaneseq
        %v5273 = vshrl.u32 %v5272, 7
        %v5274 = vsub.s32 5, %v5273
        %v5275 = vrot.slane %v1783, %v5274
        %v5276 = vlaneseq
        %v5277 = vshrl.u32 %v5276, 7
        %v5278 = vsub.s32 5, %v5277
        %v5279 = vrot.slane %v1787, %v5278
        %v5280 = vlaneseq
        %v5281 = vshrl.u32 %v5280, 7
        %v5282 = vsub.s32 5, %v5281
        %v5283 = vrot.slane %v1791, %v5282
        %v5284 = vlaneseq
        %v5285 = vshrl.u32 %v5284, 7
        %v5286 = vsub.s32 5, %v5285
        %v5287 = vrot.slane %v1795, %v5286
        %v5288 = vlaneseq
        %v5289 = vshrl.u32 %v5288, 7
        %v5290 = vsub.s32 5, %v5289
        %v5291 = vrot.slane %v1799, %v5290
        %v5292 = vlaneseq
        %v5293 = vshrl.u32 %v5292, 7
        %v5294 = vsub.s32 5, %v5293
        %v5295 = vrot.slane %v1803, %v5294
        %v5296 = vlaneseq
        %v5297 = vshrl.u32 %v5296, 7
        %v5298 = vsub.s32 5, %v5297
        %v5299 = vrot.slane %v1807, %v5298
        %5301 = vset.pattern.permute.xlu0 0
        %5302 = vperm.xlu0 %5301, %v1924
        %v5303 = vpop.permute.xlu0 %5302
        %5306 = vset.pattern.permute.xlu0 0
        %5307 = vperm.xlu0 %5306, %v1925
        %v5308 = vpop.permute.xlu0 %5307
        %5311 = vset.pattern.permute.xlu0 0
        %5312 = vperm.xlu0 %5311, %v1926
        %v5313 = vpop.permute.xlu0 %5312
        %5316 = vset.pattern.permute.xlu0 0
        %5317 = vperm.xlu0 %5316, %v1927
        %v5318 = vpop.permute.xlu0 %5317
        %v5320 = vmul.f32 %v5271, %v5303
        %v5321 = vmul.f32 %v5271, %v5308
        %v5322 = vmul.f32 %v5271, %v5313
        %v5323 = vmul.f32 %v5271, %v5318
        %v5324 = vmul.f32 %v5275, %v5303
        %v5325 = vmul.f32 %v5275, %v5308
        %v5326 = vmul.f32 %v5275, %v5313
        %v5327 = vmul.f32 %v5275, %v5318
        %v5328 = vmul.f32 %v5279, %v5303
        %v5329 = vmul.f32 %v5279, %v5308
        %v5330 = vmul.f32 %v5279, %v5313
        %v5331 = vmul.f32 %v5279, %v5318
        %v5332 = vmul.f32 %v5283, %v5303
        %v5333 = vmul.f32 %v5283, %v5308
        %v5334 = vmul.f32 %v5283, %v5313
        %v5335 = vmul.f32 %v5283, %v5318
        %v5336 = vmul.f32 %v5287, %v5303
        %v5337 = vmul.f32 %v5287, %v5308
        %v5338 = vmul.f32 %v5287, %v5313
        %v5339 = vmul.f32 %v5287, %v5318
        %v5340 = vmul.f32 %v5291, %v5303
        %v5341 = vmul.f32 %v5291, %v5308
        %v5342 = vmul.f32 %v5291, %v5313
        %v5343 = vmul.f32 %v5291, %v5318
        %v5344 = vmul.f32 %v5295, %v5303
        %v5345 = vmul.f32 %v5295, %v5308
        %v5346 = vmul.f32 %v5295, %v5313
        %v5347 = vmul.f32 %v5295, %v5318
        %v5348 = vmul.f32 %v5299, %v5303
        %v5349 = vmul.f32 %v5299, %v5308
        %v5350 = vmul.f32 %v5299, %v5313
        %v5351 = vmul.f32 %v5299, %v5318
        %v5352 = vadd.f32 %v5236, %v5320
        %v5353 = vadd.f32 %v5237, %v5321
        %v5354 = vadd.f32 %v5238, %v5322
        %v5355 = vadd.f32 %v5239, %v5323
        %v5356 = vadd.f32 %v5240, %v5324
        %v5357 = vadd.f32 %v5241, %v5325
        %v5358 = vadd.f32 %v5242, %v5326
        %v5359 = vadd.f32 %v5243, %v5327
        %v5360 = vadd.f32 %v5244, %v5328
        %v5361 = vadd.f32 %v5245, %v5329
        %v5362 = vadd.f32 %v5246, %v5330
        %v5363 = vadd.f32 %v5247, %v5331
        %v5364 = vadd.f32 %v5248, %v5332
        %v5365 = vadd.f32 %v5249, %v5333
        %v5366 = vadd.f32 %v5250, %v5334
        %v5367 = vadd.f32 %v5251, %v5335
        %v5368 = vadd.f32 %v5252, %v5336
        %v5369 = vadd.f32 %v5253, %v5337
        %v5370 = vadd.f32 %v5254, %v5338
        %v5371 = vadd.f32 %v5255, %v5339
        %v5372 = vadd.f32 %v5256, %v5340
        %v5373 = vadd.f32 %v5257, %v5341
        %v5374 = vadd.f32 %v5258, %v5342
        %v5375 = vadd.f32 %v5259, %v5343
        %v5376 = vadd.f32 %v5260, %v5344
        %v5377 = vadd.f32 %v5261, %v5345
        %v5378 = vadd.f32 %v5262, %v5346
        %v5379 = vadd.f32 %v5263, %v5347
        %v5380 = vadd.f32 %v5264, %v5348
        %v5381 = vadd.f32 %v5265, %v5349
        %v5382 = vadd.f32 %v5266, %v5350
        %v5383 = vadd.f32 %v5267, %v5351
        %v5384 = vlaneseq
        %v5385 = vshrl.u32 %v5384, 7
        %v5386 = vsub.s32 6, %v5385
        %v5387 = vrot.slane %v1779, %v5386
        %v5388 = vlaneseq
        %v5389 = vshrl.u32 %v5388, 7
        %v5390 = vsub.s32 6, %v5389
        %v5391 = vrot.slane %v1783, %v5390
        %v5392 = vlaneseq
        %v5393 = vshrl.u32 %v5392, 7
        %v5394 = vsub.s32 6, %v5393
        %v5395 = vrot.slane %v1787, %v5394
        %v5396 = vlaneseq
        %v5397 = vshrl.u32 %v5396, 7
        %v5398 = vsub.s32 6, %v5397
        %v5399 = vrot.slane %v1791, %v5398
        %v5400 = vlaneseq
        %v5401 = vshrl.u32 %v5400, 7
        %v5402 = vsub.s32 6, %v5401
        %v5403 = vrot.slane %v1795, %v5402
        %v5404 = vlaneseq
        %v5405 = vshrl.u32 %v5404, 7
        %v5406 = vsub.s32 6, %v5405
        %v5407 = vrot.slane %v1799, %v5406
        %v5408 = vlaneseq
        %v5409 = vshrl.u32 %v5408, 7
        %v5410 = vsub.s32 6, %v5409
        %v5411 = vrot.slane %v1803, %v5410
        %v5412 = vlaneseq
        %v5413 = vshrl.u32 %v5412, 7
        %v5414 = vsub.s32 6, %v5413
        %v5415 = vrot.slane %v1807, %v5414
        %5417 = vset.pattern.permute.xlu0 0
        %5418 = vperm.xlu0 %5417, %v1928
        %v5419 = vpop.permute.xlu0 %5418
        %5422 = vset.pattern.permute.xlu0 0
        %5423 = vperm.xlu0 %5422, %v1929
        %v5424 = vpop.permute.xlu0 %5423
        %5427 = vset.pattern.permute.xlu0 0
        %5428 = vperm.xlu0 %5427, %v1930
        %v5429 = vpop.permute.xlu0 %5428
        %5432 = vset.pattern.permute.xlu0 0
        %5433 = vperm.xlu0 %5432, %v1931
        %v5434 = vpop.permute.xlu0 %5433
        %v5436 = vmul.f32 %v5387, %v5419
        %v5437 = vmul.f32 %v5387, %v5424
        %v5438 = vmul.f32 %v5387, %v5429
        %v5439 = vmul.f32 %v5387, %v5434
        %v5440 = vmul.f32 %v5391, %v5419
        %v5441 = vmul.f32 %v5391, %v5424
        %v5442 = vmul.f32 %v5391, %v5429
        %v5443 = vmul.f32 %v5391, %v5434
        %v5444 = vmul.f32 %v5395, %v5419
        %v5445 = vmul.f32 %v5395, %v5424
        %v5446 = vmul.f32 %v5395, %v5429
        %v5447 = vmul.f32 %v5395, %v5434
        %v5448 = vmul.f32 %v5399, %v5419
        %v5449 = vmul.f32 %v5399, %v5424
        %v5450 = vmul.f32 %v5399, %v5429
        %v5451 = vmul.f32 %v5399, %v5434
        %v5452 = vmul.f32 %v5403, %v5419
        %v5453 = vmul.f32 %v5403, %v5424
        %v5454 = vmul.f32 %v5403, %v5429
        %v5455 = vmul.f32 %v5403, %v5434
        %v5456 = vmul.f32 %v5407, %v5419
        %v5457 = vmul.f32 %v5407, %v5424
        %v5458 = vmul.f32 %v5407, %v5429
        %v5459 = vmul.f32 %v5407, %v5434
        %v5460 = vmul.f32 %v5411, %v5419
        %v5461 = vmul.f32 %v5411, %v5424
        %v5462 = vmul.f32 %v5411, %v5429
        %v5463 = vmul.f32 %v5411, %v5434
        %v5464 = vmul.f32 %v5415, %v5419
        %v5465 = vmul.f32 %v5415, %v5424
        %v5466 = vmul.f32 %v5415, %v5429
        %v5467 = vmul.f32 %v5415, %v5434
        %v5468 = vadd.f32 %v5352, %v5436
        %v5469 = vadd.f32 %v5353, %v5437
        %v5470 = vadd.f32 %v5354, %v5438
        %v5471 = vadd.f32 %v5355, %v5439
        %v5472 = vadd.f32 %v5356, %v5440
        %v5473 = vadd.f32 %v5357, %v5441
        %v5474 = vadd.f32 %v5358, %v5442
        %v5475 = vadd.f32 %v5359, %v5443
        %v5476 = vadd.f32 %v5360, %v5444
        %v5477 = vadd.f32 %v5361, %v5445
        %v5478 = vadd.f32 %v5362, %v5446
        %v5479 = vadd.f32 %v5363, %v5447
        %v5480 = vadd.f32 %v5364, %v5448
        %v5481 = vadd.f32 %v5365, %v5449
        %v5482 = vadd.f32 %v5366, %v5450
        %v5483 = vadd.f32 %v5367, %v5451
        %v5484 = vadd.f32 %v5368, %v5452
        %v5485 = vadd.f32 %v5369, %v5453
        %v5486 = vadd.f32 %v5370, %v5454
        %v5487 = vadd.f32 %v5371, %v5455
        %v5488 = vadd.f32 %v5372, %v5456
        %v5489 = vadd.f32 %v5373, %v5457
        %v5490 = vadd.f32 %v5374, %v5458
        %v5491 = vadd.f32 %v5375, %v5459
        %v5492 = vadd.f32 %v5376, %v5460
        %v5493 = vadd.f32 %v5377, %v5461
        %v5494 = vadd.f32 %v5378, %v5462
        %v5495 = vadd.f32 %v5379, %v5463
        %v5496 = vadd.f32 %v5380, %v5464
        %v5497 = vadd.f32 %v5381, %v5465
        %v5498 = vadd.f32 %v5382, %v5466
        %v5499 = vadd.f32 %v5383, %v5467
        %v5500 = vlaneseq
        %v5501 = vshrl.u32 %v5500, 7
        %v5502 = vsub.s32 7, %v5501
        %v5503 = vrot.slane %v1779, %v5502
        %v5504 = vlaneseq
        %v5505 = vshrl.u32 %v5504, 7
        %v5506 = vsub.s32 7, %v5505
        %v5507 = vrot.slane %v1783, %v5506
        %v5508 = vlaneseq
        %v5509 = vshrl.u32 %v5508, 7
        %v5510 = vsub.s32 7, %v5509
        %v5511 = vrot.slane %v1787, %v5510
        %v5512 = vlaneseq
        %v5513 = vshrl.u32 %v5512, 7
        %v5514 = vsub.s32 7, %v5513
        %v5515 = vrot.slane %v1791, %v5514
        %v5516 = vlaneseq
        %v5517 = vshrl.u32 %v5516, 7
        %v5518 = vsub.s32 7, %v5517
        %v5519 = vrot.slane %v1795, %v5518
        %v5520 = vlaneseq
        %v5521 = vshrl.u32 %v5520, 7
        %v5522 = vsub.s32 7, %v5521
        %v5523 = vrot.slane %v1799, %v5522
        %v5524 = vlaneseq
        %v5525 = vshrl.u32 %v5524, 7
        %v5526 = vsub.s32 7, %v5525
        %v5527 = vrot.slane %v1803, %v5526
        %v5528 = vlaneseq
        %v5529 = vshrl.u32 %v5528, 7
        %v5530 = vsub.s32 7, %v5529
        %v5531 = vrot.slane %v1807, %v5530
        %5533 = vset.pattern.permute.xlu0 0
        %5534 = vperm.xlu0 %5533, %v1932
        %v5535 = vpop.permute.xlu0 %5534
        %5538 = vset.pattern.permute.xlu0 0
        %5539 = vperm.xlu0 %5538, %v1933
        %v5540 = vpop.permute.xlu0 %5539
        %5543 = vset.pattern.permute.xlu0 0
        %5544 = vperm.xlu0 %5543, %v1934
        %v5545 = vpop.permute.xlu0 %5544
        %5548 = vset.pattern.permute.xlu0 0
        %5549 = vperm.xlu0 %5548, %v1935
        %v5550 = vpop.permute.xlu0 %5549
        %v5552 = vmul.f32 %v5503, %v5535
        %v5553 = vmul.f32 %v5503, %v5540
        %v5554 = vmul.f32 %v5503, %v5545
        %v5555 = vmul.f32 %v5503, %v5550
        %v5556 = vmul.f32 %v5507, %v5535
        %v5557 = vmul.f32 %v5507, %v5540
        %v5558 = vmul.f32 %v5507, %v5545
        %v5559 = vmul.f32 %v5507, %v5550
        %v5560 = vmul.f32 %v5511, %v5535
        %v5561 = vmul.f32 %v5511, %v5540
        %v5562 = vmul.f32 %v5511, %v5545
        %v5563 = vmul.f32 %v5511, %v5550
        %v5564 = vmul.f32 %v5515, %v5535
        %v5565 = vmul.f32 %v5515, %v5540
        %v5566 = vmul.f32 %v5515, %v5545
        %v5567 = vmul.f32 %v5515, %v5550
        %v5568 = vmul.f32 %v5519, %v5535
        %v5569 = vmul.f32 %v5519, %v5540
        %v5570 = vmul.f32 %v5519, %v5545
        %v5571 = vmul.f32 %v5519, %v5550
        %v5572 = vmul.f32 %v5523, %v5535
        %v5573 = vmul.f32 %v5523, %v5540
        %v5574 = vmul.f32 %v5523, %v5545
        %v5575 = vmul.f32 %v5523, %v5550
        %v5576 = vmul.f32 %v5527, %v5535
        %v5577 = vmul.f32 %v5527, %v5540
        %v5578 = vmul.f32 %v5527, %v5545
        %v5579 = vmul.f32 %v5527, %v5550
        %v5580 = vmul.f32 %v5531, %v5535
        %v5581 = vmul.f32 %v5531, %v5540
        %v5582 = vmul.f32 %v5531, %v5545
        %v5583 = vmul.f32 %v5531, %v5550
        %v5584 = vadd.f32 %v5468, %v5552
        %v5585 = vadd.f32 %v5469, %v5553
        %v5586 = vadd.f32 %v5470, %v5554
        %v5587 = vadd.f32 %v5471, %v5555
        %v5588 = vadd.f32 %v5472, %v5556
        %v5589 = vadd.f32 %v5473, %v5557
        %v5590 = vadd.f32 %v5474, %v5558
        %v5591 = vadd.f32 %v5475, %v5559
        %v5592 = vadd.f32 %v5476, %v5560
        %v5593 = vadd.f32 %v5477, %v5561
        %v5594 = vadd.f32 %v5478, %v5562
        %v5595 = vadd.f32 %v5479, %v5563
        %v5596 = vadd.f32 %v5480, %v5564
        %v5597 = vadd.f32 %v5481, %v5565
        %v5598 = vadd.f32 %v5482, %v5566
        %v5599 = vadd.f32 %v5483, %v5567
        %v5600 = vadd.f32 %v5484, %v5568
        %v5601 = vadd.f32 %v5485, %v5569
        %v5602 = vadd.f32 %v5486, %v5570
        %v5603 = vadd.f32 %v5487, %v5571
        %v5604 = vadd.f32 %v5488, %v5572
        %v5605 = vadd.f32 %v5489, %v5573
        %v5606 = vadd.f32 %v5490, %v5574
        %v5607 = vadd.f32 %v5491, %v5575
        %v5608 = vadd.f32 %v5492, %v5576
        %v5609 = vadd.f32 %v5493, %v5577
        %v5610 = vadd.f32 %v5494, %v5578
        %v5611 = vadd.f32 %v5495, %v5579
        %v5612 = vadd.f32 %v5496, %v5580
        %v5613 = vadd.f32 %v5497, %v5581
        %v5614 = vadd.f32 %v5498, %v5582
        %v5615 = vadd.f32 %v5499, %v5583
        %v5616 = vmul.f32 %v440, %v5584
        %v5617 = vmul.f32 %v440, %v5585
        %v5618 = vmul.f32 %v440, %v5586
        %v5619 = vmul.f32 %v440, %v5587
        %v5620 = vmul.f32 %v441, %v5588
        %v5621 = vmul.f32 %v441, %v5589
        %v5622 = vmul.f32 %v441, %v5590
        %v5623 = vmul.f32 %v441, %v5591
        %v5624 = vmul.f32 %v442, %v5592
        %v5625 = vmul.f32 %v442, %v5593
        %v5626 = vmul.f32 %v442, %v5594
        %v5627 = vmul.f32 %v442, %v5595
        %v5628 = vmul.f32 %v443, %v5596
        %v5629 = vmul.f32 %v443, %v5597
        %v5630 = vmul.f32 %v443, %v5598
        %v5631 = vmul.f32 %v443, %v5599
        %v5632 = vmul.f32 %v444, %v5600
        %v5633 = vmul.f32 %v444, %v5601
        %v5634 = vmul.f32 %v444, %v5602
        %v5635 = vmul.f32 %v444, %v5603
        %v5636 = vmul.f32 %v445, %v5604
        %v5637 = vmul.f32 %v445, %v5605
        %v5638 = vmul.f32 %v445, %v5606
        %v5639 = vmul.f32 %v445, %v5607
        %v5640 = vmul.f32 %v446, %v5608
        %v5641 = vmul.f32 %v446, %v5609
        %v5642 = vmul.f32 %v446, %v5610
        %v5643 = vmul.f32 %v446, %v5611
        %v5644 = vmul.f32 %v447, %v5612
        %v5645 = vmul.f32 %v447, %v5613
        %v5646 = vmul.f32 %v447, %v5614
        %v5647 = vmul.f32 %v447, %v5615
        %v5648 = vmul.f32 %v947, %v5616
        %v5649 = vmul.f32 %v947, %v5617
        %v5650 = vmul.f32 %v947, %v5618
        %v5651 = vmul.f32 %v947, %v5619
        %v5652 = vmul.f32 %v951, %v5616
        %v5653 = vmul.f32 %v951, %v5617
        %v5654 = vmul.f32 %v951, %v5618
        %v5655 = vmul.f32 %v951, %v5619
        %v5656 = vmul.f32 %v955, %v5616
        %v5657 = vmul.f32 %v955, %v5617
        %v5658 = vmul.f32 %v955, %v5618
        %v5659 = vmul.f32 %v955, %v5619
        %v5660 = vmul.f32 %v959, %v5616
        %v5661 = vmul.f32 %v959, %v5617
        %v5662 = vmul.f32 %v959, %v5618
        %v5663 = vmul.f32 %v959, %v5619
        %v5664 = vmul.f32 %v963, %v5616
        %v5665 = vmul.f32 %v963, %v5617
        %v5666 = vmul.f32 %v963, %v5618
        %v5667 = vmul.f32 %v963, %v5619
        %v5668 = vmul.f32 %v967, %v5616
        %v5669 = vmul.f32 %v967, %v5617
        %v5670 = vmul.f32 %v967, %v5618
        %v5671 = vmul.f32 %v967, %v5619
        %v5672 = vmul.f32 %v971, %v5616
        %v5673 = vmul.f32 %v971, %v5617
        %v5674 = vmul.f32 %v971, %v5618
        %v5675 = vmul.f32 %v971, %v5619
        %v5676 = vmul.f32 %v975, %v5616
        %v5677 = vmul.f32 %v975, %v5617
        %v5678 = vmul.f32 %v975, %v5618
        %v5679 = vmul.f32 %v975, %v5619
        %v5680 = vmul.f32 %v1011, %v5620
        %v5681 = vmul.f32 %v1011, %v5621
        %v5682 = vmul.f32 %v1011, %v5622
        %v5683 = vmul.f32 %v1011, %v5623
        %v5684 = vmul.f32 %v1015, %v5620
        %v5685 = vmul.f32 %v1015, %v5621
        %v5686 = vmul.f32 %v1015, %v5622
        %v5687 = vmul.f32 %v1015, %v5623
        %v5688 = vmul.f32 %v1019, %v5620
        %v5689 = vmul.f32 %v1019, %v5621
        %v5690 = vmul.f32 %v1019, %v5622
        %v5691 = vmul.f32 %v1019, %v5623
        %v5692 = vmul.f32 %v1023, %v5620
        %v5693 = vmul.f32 %v1023, %v5621
        %v5694 = vmul.f32 %v1023, %v5622
        %v5695 = vmul.f32 %v1023, %v5623
        %v5696 = vmul.f32 %v1027, %v5620
        %v5697 = vmul.f32 %v1027, %v5621
        %v5698 = vmul.f32 %v1027, %v5622
        %v5699 = vmul.f32 %v1027, %v5623
        %v5700 = vmul.f32 %v1031, %v5620
        %v5701 = vmul.f32 %v1031, %v5621
        %v5702 = vmul.f32 %v1031, %v5622
        %v5703 = vmul.f32 %v1031, %v5623
        %v5704 = vmul.f32 %v1035, %v5620
        %v5705 = vmul.f32 %v1035, %v5621
        %v5706 = vmul.f32 %v1035, %v5622
        %v5707 = vmul.f32 %v1035, %v5623
        %v5708 = vmul.f32 %v1039, %v5620
        %v5709 = vmul.f32 %v1039, %v5621
        %v5710 = vmul.f32 %v1039, %v5622
        %v5711 = vmul.f32 %v1039, %v5623
        %v5712 = vadd.f32 %v5648, %v5680
        %v5713 = vadd.f32 %v5649, %v5681
        %v5714 = vadd.f32 %v5650, %v5682
        %v5715 = vadd.f32 %v5651, %v5683
        %v5716 = vadd.f32 %v5652, %v5684
        %v5717 = vadd.f32 %v5653, %v5685
        %v5718 = vadd.f32 %v5654, %v5686
        %v5719 = vadd.f32 %v5655, %v5687
        %v5720 = vadd.f32 %v5656, %v5688
        %v5721 = vadd.f32 %v5657, %v5689
        %v5722 = vadd.f32 %v5658, %v5690
        %v5723 = vadd.f32 %v5659, %v5691
        %v5724 = vadd.f32 %v5660, %v5692
        %v5725 = vadd.f32 %v5661, %v5693
        %v5726 = vadd.f32 %v5662, %v5694
        %v5727 = vadd.f32 %v5663, %v5695
        %v5728 = vadd.f32 %v5664, %v5696
        %v5729 = vadd.f32 %v5665, %v5697
        %v5730 = vadd.f32 %v5666, %v5698
        %v5731 = vadd.f32 %v5667, %v5699
        %v5732 = vadd.f32 %v5668, %v5700
        %v5733 = vadd.f32 %v5669, %v5701
        %v5734 = vadd.f32 %v5670, %v5702
        %v5735 = vadd.f32 %v5671, %v5703
        %v5736 = vadd.f32 %v5672, %v5704
        %v5737 = vadd.f32 %v5673, %v5705
        %v5738 = vadd.f32 %v5674, %v5706
        %v5739 = vadd.f32 %v5675, %v5707
        %v5740 = vadd.f32 %v5676, %v5708
        %v5741 = vadd.f32 %v5677, %v5709
        %v5742 = vadd.f32 %v5678, %v5710
        %v5743 = vadd.f32 %v5679, %v5711
        %v5744 = vmul.f32 %v1107, %v5624
        %v5745 = vmul.f32 %v1107, %v5625
        %v5746 = vmul.f32 %v1107, %v5626
        %v5747 = vmul.f32 %v1107, %v5627
        %v5748 = vmul.f32 %v1111, %v5624
        %v5749 = vmul.f32 %v1111, %v5625
        %v5750 = vmul.f32 %v1111, %v5626
        %v5751 = vmul.f32 %v1111, %v5627
        %v5752 = vmul.f32 %v1115, %v5624
        %v5753 = vmul.f32 %v1115, %v5625
        %v5754 = vmul.f32 %v1115, %v5626
        %v5755 = vmul.f32 %v1115, %v5627
        %v5756 = vmul.f32 %v1119, %v5624
        %v5757 = vmul.f32 %v1119, %v5625
        %v5758 = vmul.f32 %v1119, %v5626
        %v5759 = vmul.f32 %v1119, %v5627
        %v5760 = vmul.f32 %v1123, %v5624
        %v5761 = vmul.f32 %v1123, %v5625
        %v5762 = vmul.f32 %v1123, %v5626
        %v5763 = vmul.f32 %v1123, %v5627
        %v5764 = vmul.f32 %v1127, %v5624
        %v5765 = vmul.f32 %v1127, %v5625
        %v5766 = vmul.f32 %v1127, %v5626
        %v5767 = vmul.f32 %v1127, %v5627
        %v5768 = vmul.f32 %v1131, %v5624
        %v5769 = vmul.f32 %v1131, %v5625
        %v5770 = vmul.f32 %v1131, %v5626
        %v5771 = vmul.f32 %v1131, %v5627
        %v5772 = vmul.f32 %v1135, %v5624
        %v5773 = vmul.f32 %v1135, %v5625
        %v5774 = vmul.f32 %v1135, %v5626
        %v5775 = vmul.f32 %v1135, %v5627
        %v5776 = vadd.f32 %v5712, %v5744
        %v5777 = vadd.f32 %v5713, %v5745
        %v5778 = vadd.f32 %v5714, %v5746
        %v5779 = vadd.f32 %v5715, %v5747
        %v5780 = vadd.f32 %v5716, %v5748
        %v5781 = vadd.f32 %v5717, %v5749
        %v5782 = vadd.f32 %v5718, %v5750
        %v5783 = vadd.f32 %v5719, %v5751
        %v5784 = vadd.f32 %v5720, %v5752
        %v5785 = vadd.f32 %v5721, %v5753
        %v5786 = vadd.f32 %v5722, %v5754
        %v5787 = vadd.f32 %v5723, %v5755
        %v5788 = vadd.f32 %v5724, %v5756
        %v5789 = vadd.f32 %v5725, %v5757
        %v5790 = vadd.f32 %v5726, %v5758
        %v5791 = vadd.f32 %v5727, %v5759
        %v5792 = vadd.f32 %v5728, %v5760
        %v5793 = vadd.f32 %v5729, %v5761
        %v5794 = vadd.f32 %v5730, %v5762
        %v5795 = vadd.f32 %v5731, %v5763
        %v5796 = vadd.f32 %v5732, %v5764
        %v5797 = vadd.f32 %v5733, %v5765
        %v5798 = vadd.f32 %v5734, %v5766
        %v5799 = vadd.f32 %v5735, %v5767
        %v5800 = vadd.f32 %v5736, %v5768
        %v5801 = vadd.f32 %v5737, %v5769
        %v5802 = vadd.f32 %v5738, %v5770
        %v5803 = vadd.f32 %v5739, %v5771
        %v5804 = vadd.f32 %v5740, %v5772
        %v5805 = vadd.f32 %v5741, %v5773
        %v5806 = vadd.f32 %v5742, %v5774
        %v5807 = vadd.f32 %v5743, %v5775
        %v5808 = vmul.f32 %v1203, %v5628
        %v5809 = vmul.f32 %v1203, %v5629
        %v5810 = vmul.f32 %v1203, %v5630
        %v5811 = vmul.f32 %v1203, %v5631
        %v5812 = vmul.f32 %v1207, %v5628
        %v5813 = vmul.f32 %v1207, %v5629
        %v5814 = vmul.f32 %v1207, %v5630
        %v5815 = vmul.f32 %v1207, %v5631
        %v5816 = vmul.f32 %v1211, %v5628
        %v5817 = vmul.f32 %v1211, %v5629
        %v5818 = vmul.f32 %v1211, %v5630
        %v5819 = vmul.f32 %v1211, %v5631
        %v5820 = vmul.f32 %v1215, %v5628
        %v5821 = vmul.f32 %v1215, %v5629
        %v5822 = vmul.f32 %v1215, %v5630
        %v5823 = vmul.f32 %v1215, %v5631
        %v5824 = vmul.f32 %v1219, %v5628
        %v5825 = vmul.f32 %v1219, %v5629
        %v5826 = vmul.f32 %v1219, %v5630
        %v5827 = vmul.f32 %v1219, %v5631
        %v5828 = vmul.f32 %v1223, %v5628
        %v5829 = vmul.f32 %v1223, %v5629
        %v5830 = vmul.f32 %v1223, %v5630
        %v5831 = vmul.f32 %v1223, %v5631
        %v5832 = vmul.f32 %v1227, %v5628
        %v5833 = vmul.f32 %v1227, %v5629
        %v5834 = vmul.f32 %v1227, %v5630
        %v5835 = vmul.f32 %v1227, %v5631
        %v5836 = vmul.f32 %v1231, %v5628
        %v5837 = vmul.f32 %v1231, %v5629
        %v5838 = vmul.f32 %v1231, %v5630
        %v5839 = vmul.f32 %v1231, %v5631
        %v5840 = vadd.f32 %v5776, %v5808
        %v5841 = vadd.f32 %v5777, %v5809
        %v5842 = vadd.f32 %v5778, %v5810
        %v5843 = vadd.f32 %v5779, %v5811
        %v5844 = vadd.f32 %v5780, %v5812
        %v5845 = vadd.f32 %v5781, %v5813
        %v5846 = vadd.f32 %v5782, %v5814
        %v5847 = vadd.f32 %v5783, %v5815
        %v5848 = vadd.f32 %v5784, %v5816
        %v5849 = vadd.f32 %v5785, %v5817
        %v5850 = vadd.f32 %v5786, %v5818
        %v5851 = vadd.f32 %v5787, %v5819
        %v5852 = vadd.f32 %v5788, %v5820
        %v5853 = vadd.f32 %v5789, %v5821
        %v5854 = vadd.f32 %v5790, %v5822
        %v5855 = vadd.f32 %v5791, %v5823
        %v5856 = vadd.f32 %v5792, %v5824
        %v5857 = vadd.f32 %v5793, %v5825
        %v5858 = vadd.f32 %v5794, %v5826
        %v5859 = vadd.f32 %v5795, %v5827
        %v5860 = vadd.f32 %v5796, %v5828
        %v5861 = vadd.f32 %v5797, %v5829
        %v5862 = vadd.f32 %v5798, %v5830
        %v5863 = vadd.f32 %v5799, %v5831
        %v5864 = vadd.f32 %v5800, %v5832
        %v5865 = vadd.f32 %v5801, %v5833
        %v5866 = vadd.f32 %v5802, %v5834
        %v5867 = vadd.f32 %v5803, %v5835
        %v5868 = vadd.f32 %v5804, %v5836
        %v5869 = vadd.f32 %v5805, %v5837
        %v5870 = vadd.f32 %v5806, %v5838
        %v5871 = vadd.f32 %v5807, %v5839
        %v5872 = vmul.f32 %v1299, %v5632
        %v5873 = vmul.f32 %v1299, %v5633
        %v5874 = vmul.f32 %v1299, %v5634
        %v5875 = vmul.f32 %v1299, %v5635
        %v5876 = vmul.f32 %v1303, %v5632
        %v5877 = vmul.f32 %v1303, %v5633
        %v5878 = vmul.f32 %v1303, %v5634
        %v5879 = vmul.f32 %v1303, %v5635
        %v5880 = vmul.f32 %v1307, %v5632
        %v5881 = vmul.f32 %v1307, %v5633
        %v5882 = vmul.f32 %v1307, %v5634
        %v5883 = vmul.f32 %v1307, %v5635
        %v5884 = vmul.f32 %v1311, %v5632
        %v5885 = vmul.f32 %v1311, %v5633
        %v5886 = vmul.f32 %v1311, %v5634
        %v5887 = vmul.f32 %v1311, %v5635
        %v5888 = vmul.f32 %v1315, %v5632
        %v5889 = vmul.f32 %v1315, %v5633
        %v5890 = vmul.f32 %v1315, %v5634
        %v5891 = vmul.f32 %v1315, %v5635
        %v5892 = vmul.f32 %v1319, %v5632
        %v5893 = vmul.f32 %v1319, %v5633
        %v5894 = vmul.f32 %v1319, %v5634
        %v5895 = vmul.f32 %v1319, %v5635
        %v5896 = vmul.f32 %v1323, %v5632
        %v5897 = vmul.f32 %v1323, %v5633
        %v5898 = vmul.f32 %v1323, %v5634
        %v5899 = vmul.f32 %v1323, %v5635
        %v5900 = vmul.f32 %v1327, %v5632
        %v5901 = vmul.f32 %v1327, %v5633
        %v5902 = vmul.f32 %v1327, %v5634
        %v5903 = vmul.f32 %v1327, %v5635
        %v5904 = vadd.f32 %v5840, %v5872
        %v5905 = vadd.f32 %v5841, %v5873
        %v5906 = vadd.f32 %v5842, %v5874
        %v5907 = vadd.f32 %v5843, %v5875
        %v5908 = vadd.f32 %v5844, %v5876
        %v5909 = vadd.f32 %v5845, %v5877
        %v5910 = vadd.f32 %v5846, %v5878
        %v5911 = vadd.f32 %v5847, %v5879
        %v5912 = vadd.f32 %v5848, %v5880
        %v5913 = vadd.f32 %v5849, %v5881
        %v5914 = vadd.f32 %v5850, %v5882
        %v5915 = vadd.f32 %v5851, %v5883
        %v5916 = vadd.f32 %v5852, %v5884
        %v5917 = vadd.f32 %v5853, %v5885
        %v5918 = vadd.f32 %v5854, %v5886
        %v5919 = vadd.f32 %v5855, %v5887
        %v5920 = vadd.f32 %v5856, %v5888
        %v5921 = vadd.f32 %v5857, %v5889
        %v5922 = vadd.f32 %v5858, %v5890
        %v5923 = vadd.f32 %v5859, %v5891
        %v5924 = vadd.f32 %v5860, %v5892
        %v5925 = vadd.f32 %v5861, %v5893
        %v5926 = vadd.f32 %v5862, %v5894
        %v5927 = vadd.f32 %v5863, %v5895
        %v5928 = vadd.f32 %v5864, %v5896
        %v5929 = vadd.f32 %v5865, %v5897
        %v5930 = vadd.f32 %v5866, %v5898
        %v5931 = vadd.f32 %v5867, %v5899
        %v5932 = vadd.f32 %v5868, %v5900
        %v5933 = vadd.f32 %v5869, %v5901
        %v5934 = vadd.f32 %v5870, %v5902
        %v5935 = vadd.f32 %v5871, %v5903
        %v5936 = vmul.f32 %v1395, %v5636
        %v5937 = vmul.f32 %v1395, %v5637
        %v5938 = vmul.f32 %v1395, %v5638
        %v5939 = vmul.f32 %v1395, %v5639
        %v5940 = vmul.f32 %v1399, %v5636
        %v5941 = vmul.f32 %v1399, %v5637
        %v5942 = vmul.f32 %v1399, %v5638
        %v5943 = vmul.f32 %v1399, %v5639
        %v5944 = vmul.f32 %v1403, %v5636
        %v5945 = vmul.f32 %v1403, %v5637
        %v5946 = vmul.f32 %v1403, %v5638
        %v5947 = vmul.f32 %v1403, %v5639
        %v5948 = vmul.f32 %v1407, %v5636
        %v5949 = vmul.f32 %v1407, %v5637
        %v5950 = vmul.f32 %v1407, %v5638
        %v5951 = vmul.f32 %v1407, %v5639
        %v5952 = vmul.f32 %v1411, %v5636
        %v5953 = vmul.f32 %v1411, %v5637
        %v5954 = vmul.f32 %v1411, %v5638
        %v5955 = vmul.f32 %v1411, %v5639
        %v5956 = vmul.f32 %v1415, %v5636
        %v5957 = vmul.f32 %v1415, %v5637
        %v5958 = vmul.f32 %v1415, %v5638
        %v5959 = vmul.f32 %v1415, %v5639
        %v5960 = vmul.f32 %v1419, %v5636
        %v5961 = vmul.f32 %v1419, %v5637
        %v5962 = vmul.f32 %v1419, %v5638
        %v5963 = vmul.f32 %v1419, %v5639
        %v5964 = vmul.f32 %v1423, %v5636
        %v5965 = vmul.f32 %v1423, %v5637
        %v5966 = vmul.f32 %v1423, %v5638
        %v5967 = vmul.f32 %v1423, %v5639
        %v5968 = vadd.f32 %v5904, %v5936
        %v5969 = vadd.f32 %v5905, %v5937
        %v5970 = vadd.f32 %v5906, %v5938
        %v5971 = vadd.f32 %v5907, %v5939
        %v5972 = vadd.f32 %v5908, %v5940
        %v5973 = vadd.f32 %v5909, %v5941
        %v5974 = vadd.f32 %v5910, %v5942
        %v5975 = vadd.f32 %v5911, %v5943
        %v5976 = vadd.f32 %v5912, %v5944
        %v5977 = vadd.f32 %v5913, %v5945
        %v5978 = vadd.f32 %v5914, %v5946
        %v5979 = vadd.f32 %v5915, %v5947
        %v5980 = vadd.f32 %v5916, %v5948
        %v5981 = vadd.f32 %v5917, %v5949
        %v5982 = vadd.f32 %v5918, %v5950
        %v5983 = vadd.f32 %v5919, %v5951
        %v5984 = vadd.f32 %v5920, %v5952
        %v5985 = vadd.f32 %v5921, %v5953
        %v5986 = vadd.f32 %v5922, %v5954
        %v5987 = vadd.f32 %v5923, %v5955
        %v5988 = vadd.f32 %v5924, %v5956
        %v5989 = vadd.f32 %v5925, %v5957
        %v5990 = vadd.f32 %v5926, %v5958
        %v5991 = vadd.f32 %v5927, %v5959
        %v5992 = vadd.f32 %v5928, %v5960
        %v5993 = vadd.f32 %v5929, %v5961
        %v5994 = vadd.f32 %v5930, %v5962
        %v5995 = vadd.f32 %v5931, %v5963
        %v5996 = vadd.f32 %v5932, %v5964
        %v5997 = vadd.f32 %v5933, %v5965
        %v5998 = vadd.f32 %v5934, %v5966
        %v5999 = vadd.f32 %v5935, %v5967
        %v6000 = vmul.f32 %v1491, %v5640
        %v6001 = vmul.f32 %v1491, %v5641
        %v6002 = vmul.f32 %v1491, %v5642
        %v6003 = vmul.f32 %v1491, %v5643
        %v6004 = vmul.f32 %v1495, %v5640
        %v6005 = vmul.f32 %v1495, %v5641
        %v6006 = vmul.f32 %v1495, %v5642
        %v6007 = vmul.f32 %v1495, %v5643
        %v6008 = vmul.f32 %v1499, %v5640
        %v6009 = vmul.f32 %v1499, %v5641
        %v6010 = vmul.f32 %v1499, %v5642
        %v6011 = vmul.f32 %v1499, %v5643
        %v6012 = vmul.f32 %v1503, %v5640
        %v6013 = vmul.f32 %v1503, %v5641
        %v6014 = vmul.f32 %v1503, %v5642
        %v6015 = vmul.f32 %v1503, %v5643
        %v6016 = vmul.f32 %v1507, %v5640
        %v6017 = vmul.f32 %v1507, %v5641
        %v6018 = vmul.f32 %v1507, %v5642
        %v6019 = vmul.f32 %v1507, %v5643
        %v6020 = vmul.f32 %v1511, %v5640
        %v6021 = vmul.f32 %v1511, %v5641
        %v6022 = vmul.f32 %v1511, %v5642
        %v6023 = vmul.f32 %v1511, %v5643
        %v6024 = vmul.f32 %v1515, %v5640
        %v6025 = vmul.f32 %v1515, %v5641
        %v6026 = vmul.f32 %v1515, %v5642
        %v6027 = vmul.f32 %v1515, %v5643
        %v6028 = vmul.f32 %v1519, %v5640
        %v6029 = vmul.f32 %v1519, %v5641
        %v6030 = vmul.f32 %v1519, %v5642
        %v6031 = vmul.f32 %v1519, %v5643
        %v6032 = vadd.f32 %v5968, %v6000
        %v6033 = vadd.f32 %v5969, %v6001
        %v6034 = vadd.f32 %v5970, %v6002
        %v6035 = vadd.f32 %v5971, %v6003
        %v6036 = vadd.f32 %v5972, %v6004
        %v6037 = vadd.f32 %v5973, %v6005
        %v6038 = vadd.f32 %v5974, %v6006
        %v6039 = vadd.f32 %v5975, %v6007
        %v6040 = vadd.f32 %v5976, %v6008
        %v6041 = vadd.f32 %v5977, %v6009
        %v6042 = vadd.f32 %v5978, %v6010
        %v6043 = vadd.f32 %v5979, %v6011
        %v6044 = vadd.f32 %v5980, %v6012
        %v6045 = vadd.f32 %v5981, %v6013
        %v6046 = vadd.f32 %v5982, %v6014
        %v6047 = vadd.f32 %v5983, %v6015
        %v6048 = vadd.f32 %v5984, %v6016
        %v6049 = vadd.f32 %v5985, %v6017
        %v6050 = vadd.f32 %v5986, %v6018
        %v6051 = vadd.f32 %v5987, %v6019
        %v6052 = vadd.f32 %v5988, %v6020
        %v6053 = vadd.f32 %v5989, %v6021
        %v6054 = vadd.f32 %v5990, %v6022
        %v6055 = vadd.f32 %v5991, %v6023
        %v6056 = vadd.f32 %v5992, %v6024
        %v6057 = vadd.f32 %v5993, %v6025
        %v6058 = vadd.f32 %v5994, %v6026
        %v6059 = vadd.f32 %v5995, %v6027
        %v6060 = vadd.f32 %v5996, %v6028
        %v6061 = vadd.f32 %v5997, %v6029
        %v6062 = vadd.f32 %v5998, %v6030
        %v6063 = vadd.f32 %v5999, %v6031
        %v6064 = vmul.f32 %v1587, %v5644
        %v6065 = vmul.f32 %v1587, %v5645
        %v6066 = vmul.f32 %v1587, %v5646
        %v6067 = vmul.f32 %v1587, %v5647
        %v6068 = vmul.f32 %v1591, %v5644
        %v6069 = vmul.f32 %v1591, %v5645
        %v6070 = vmul.f32 %v1591, %v5646
        %v6071 = vmul.f32 %v1591, %v5647
        %v6072 = vmul.f32 %v1595, %v5644
        %v6073 = vmul.f32 %v1595, %v5645
        %v6074 = vmul.f32 %v1595, %v5646
        %v6075 = vmul.f32 %v1595, %v5647
        %v6076 = vmul.f32 %v1599, %v5644
        %v6077 = vmul.f32 %v1599, %v5645
        %v6078 = vmul.f32 %v1599, %v5646
        %v6079 = vmul.f32 %v1599, %v5647
        %v6080 = vmul.f32 %v1603, %v5644
        %v6081 = vmul.f32 %v1603, %v5645
        %v6082 = vmul.f32 %v1603, %v5646
        %v6083 = vmul.f32 %v1603, %v5647
        %v6084 = vmul.f32 %v1607, %v5644
        %v6085 = vmul.f32 %v1607, %v5645
        %v6086 = vmul.f32 %v1607, %v5646
        %v6087 = vmul.f32 %v1607, %v5647
        %v6088 = vmul.f32 %v1611, %v5644
        %v6089 = vmul.f32 %v1611, %v5645
        %v6090 = vmul.f32 %v1611, %v5646
        %v6091 = vmul.f32 %v1611, %v5647
        %v6092 = vmul.f32 %v1615, %v5644
        %v6093 = vmul.f32 %v1615, %v5645
        %v6094 = vmul.f32 %v1615, %v5646
        %v6095 = vmul.f32 %v1615, %v5647
        %v6096 = vadd.f32 %v6032, %v6064
        %v6097 = vadd.f32 %v6033, %v6065
        %v6098 = vadd.f32 %v6034, %v6066
        %v6099 = vadd.f32 %v6035, %v6067
        %v6100 = vadd.f32 %v6036, %v6068
        %v6101 = vadd.f32 %v6037, %v6069
        %v6102 = vadd.f32 %v6038, %v6070
        %v6103 = vadd.f32 %v6039, %v6071
        %v6104 = vadd.f32 %v6040, %v6072
        %v6105 = vadd.f32 %v6041, %v6073
        %v6106 = vadd.f32 %v6042, %v6074
        %v6107 = vadd.f32 %v6043, %v6075
        %v6108 = vadd.f32 %v6044, %v6076
        %v6109 = vadd.f32 %v6045, %v6077
        %v6110 = vadd.f32 %v6046, %v6078
        %v6111 = vadd.f32 %v6047, %v6079
        %v6112 = vadd.f32 %v6048, %v6080
        %v6113 = vadd.f32 %v6049, %v6081
        %v6114 = vadd.f32 %v6050, %v6082
        %v6115 = vadd.f32 %v6051, %v6083
        %v6116 = vadd.f32 %v6052, %v6084
        %v6117 = vadd.f32 %v6053, %v6085
        %v6118 = vadd.f32 %v6054, %v6086
        %v6119 = vadd.f32 %v6055, %v6087
        %v6120 = vadd.f32 %v6056, %v6088
        %v6121 = vadd.f32 %v6057, %v6089
        %v6122 = vadd.f32 %v6058, %v6090
        %v6123 = vadd.f32 %v6059, %v6091
        %v6124 = vadd.f32 %v6060, %v6092
        %v6125 = vadd.f32 %v6061, %v6093
        %v6126 = vadd.f32 %v6062, %v6094
        %v6127 = vadd.f32 %v6063, %v6095
        %v6128 = vmul.f32 %v440, %v6096
        %v6129 = vmul.f32 %v440, %v6097
        %v6130 = vmul.f32 %v440, %v6098
        %v6131 = vmul.f32 %v440, %v6099
        %v6132 = vmul.f32 %v441, %v6100
        %v6133 = vmul.f32 %v441, %v6101
        %v6134 = vmul.f32 %v441, %v6102
        %v6135 = vmul.f32 %v441, %v6103
        %v6136 = vmul.f32 %v442, %v6104
        %v6137 = vmul.f32 %v442, %v6105
        %v6138 = vmul.f32 %v442, %v6106
        %v6139 = vmul.f32 %v442, %v6107
        %v6140 = vmul.f32 %v443, %v6108
        %v6141 = vmul.f32 %v443, %v6109
        %v6142 = vmul.f32 %v443, %v6110
        %v6143 = vmul.f32 %v443, %v6111
        %v6144 = vmul.f32 %v444, %v6112
        %v6145 = vmul.f32 %v444, %v6113
        %v6146 = vmul.f32 %v444, %v6114
        %v6147 = vmul.f32 %v444, %v6115
        %v6148 = vmul.f32 %v445, %v6116
        %v6149 = vmul.f32 %v445, %v6117
        %v6150 = vmul.f32 %v445, %v6118
        %v6151 = vmul.f32 %v445, %v6119
        %v6152 = vmul.f32 %v446, %v6120
        %v6153 = vmul.f32 %v446, %v6121
        %v6154 = vmul.f32 %v446, %v6122
        %v6155 = vmul.f32 %v446, %v6123
        %v6156 = vmul.f32 %v447, %v6124
        %v6157 = vmul.f32 %v447, %v6125
        %v6158 = vmul.f32 %v447, %v6126
        %v6159 = vmul.f32 %v447, %v6127
        %v6160 = vmul.f32 %v448, %v5584
        %v6161 = vmul.f32 %v448, %v5585
        %v6162 = vmul.f32 %v448, %v5586
        %v6163 = vmul.f32 %v448, %v5587
        %v6164 = vmul.f32 %v449, %v5588
        %v6165 = vmul.f32 %v449, %v5589
        %v6166 = vmul.f32 %v449, %v5590
        %v6167 = vmul.f32 %v449, %v5591
        %v6168 = vmul.f32 %v450, %v5592
        %v6169 = vmul.f32 %v450, %v5593
        %v6170 = vmul.f32 %v450, %v5594
        %v6171 = vmul.f32 %v450, %v5595
        %v6172 = vmul.f32 %v451, %v5596
        %v6173 = vmul.f32 %v451, %v5597
        %v6174 = vmul.f32 %v451, %v5598
        %v6175 = vmul.f32 %v451, %v5599
        %v6176 = vmul.f32 %v452, %v5600
        %v6177 = vmul.f32 %v452, %v5601
        %v6178 = vmul.f32 %v452, %v5602
        %v6179 = vmul.f32 %v452, %v5603
        %v6180 = vmul.f32 %v453, %v5604
        %v6181 = vmul.f32 %v453, %v5605
        %v6182 = vmul.f32 %v453, %v5606
        %v6183 = vmul.f32 %v453, %v5607
        %v6184 = vmul.f32 %v454, %v5608
        %v6185 = vmul.f32 %v454, %v5609
        %v6186 = vmul.f32 %v454, %v5610
        %v6187 = vmul.f32 %v454, %v5611
        %v6188 = vmul.f32 %v455, %v5612
        %v6189 = vmul.f32 %v455, %v5613
        %v6190 = vmul.f32 %v455, %v5614
        %v6191 = vmul.f32 %v455, %v5615
        %v6192 = vadd.f32 %v6128, %v6160
        %v6193 = vadd.f32 %v6129, %v6161
        %v6194 = vadd.f32 %v6130, %v6162
        %v6195 = vadd.f32 %v6131, %v6163
        %v6196 = vadd.f32 %v6132, %v6164
        %v6197 = vadd.f32 %v6133, %v6165
        %v6198 = vadd.f32 %v6134, %v6166
        %v6199 = vadd.f32 %v6135, %v6167
        %v6200 = vadd.f32 %v6136, %v6168
        %v6201 = vadd.f32 %v6137, %v6169
        %v6202 = vadd.f32 %v6138, %v6170
        %v6203 = vadd.f32 %v6139, %v6171
        %v6204 = vadd.f32 %v6140, %v6172
        %v6205 = vadd.f32 %v6141, %v6173
        %v6206 = vadd.f32 %v6142, %v6174
        %v6207 = vadd.f32 %v6143, %v6175
        %v6208 = vadd.f32 %v6144, %v6176
        %v6209 = vadd.f32 %v6145, %v6177
        %v6210 = vadd.f32 %v6146, %v6178
        %v6211 = vadd.f32 %v6147, %v6179
        %v6212 = vadd.f32 %v6148, %v6180
        %v6213 = vadd.f32 %v6149, %v6181
        %v6214 = vadd.f32 %v6150, %v6182
        %v6215 = vadd.f32 %v6151, %v6183
        %v6216 = vadd.f32 %v6152, %v6184
        %v6217 = vadd.f32 %v6153, %v6185
        %v6218 = vadd.f32 %v6154, %v6186
        %v6219 = vadd.f32 %v6155, %v6187
        %v6220 = vadd.f32 %v6156, %v6188
        %v6221 = vadd.f32 %v6157, %v6189
        %v6222 = vadd.f32 %v6158, %v6190
        %v6223 = vadd.f32 %v6159, %v6191
        %v6224 = vmax.f32 %v6192, 0.0
        %v6225 = vmax.f32 %v6193, 0.0
        %v6226 = vmax.f32 %v6194, 0.0
        %v6227 = vmax.f32 %v6195, 0.0
        %v6228 = vmax.f32 %v6196, 0.0
        %v6229 = vmax.f32 %v6197, 0.0
        %v6230 = vmax.f32 %v6198, 0.0
        %v6231 = vmax.f32 %v6199, 0.0
        %v6232 = vmax.f32 %v6200, 0.0
        %v6233 = vmax.f32 %v6201, 0.0
        %v6234 = vmax.f32 %v6202, 0.0
        %v6235 = vmax.f32 %v6203, 0.0
        %v6236 = vmax.f32 %v6204, 0.0
        %v6237 = vmax.f32 %v6205, 0.0
        %v6238 = vmax.f32 %v6206, 0.0
        %v6239 = vmax.f32 %v6207, 0.0
        %v6240 = vmax.f32 %v6208, 0.0
        %v6241 = vmax.f32 %v6209, 0.0
        %v6242 = vmax.f32 %v6210, 0.0
        %v6243 = vmax.f32 %v6211, 0.0
        %v6244 = vmax.f32 %v6212, 0.0
        %v6245 = vmax.f32 %v6213, 0.0
        %v6246 = vmax.f32 %v6214, 0.0
        %v6247 = vmax.f32 %v6215, 0.0
        %v6248 = vmax.f32 %v6216, 0.0
        %v6249 = vmax.f32 %v6217, 0.0
        %v6250 = vmax.f32 %v6218, 0.0
        %v6251 = vmax.f32 %v6219, 0.0
        %v6252 = vmax.f32 %v6220, 0.0
        %v6253 = vmax.f32 %v6221, 0.0
        %v6254 = vmax.f32 %v6222, 0.0
        %v6255 = vmax.f32 %v6223, 0.0
        %v6256 = vadd.f32 %v6224, %v6228
        %v6257 = vadd.f32 %v6256, %v6232
        %v6258 = vadd.f32 %v6257, %v6236
        %v6259 = vadd.f32 %v6258, %v6240
        %v6260 = vadd.f32 %v6259, %v6244
        %v6261 = vadd.f32 %v6260, %v6248
        %v6262 = vadd.f32 %v6261, %v6252
        %v6263 = vadd.f32 %v6225, %v6229
        %v6264 = vadd.f32 %v6263, %v6233
        %v6265 = vadd.f32 %v6264, %v6237
        %v6266 = vadd.f32 %v6265, %v6241
        %v6267 = vadd.f32 %v6266, %v6245
        %v6268 = vadd.f32 %v6267, %v6249
        %v6269 = vadd.f32 %v6268, %v6253
        %v6270 = vadd.f32 %v6226, %v6230
        %v6271 = vadd.f32 %v6270, %v6234
        %v6272 = vadd.f32 %v6271, %v6238
        %v6273 = vadd.f32 %v6272, %v6242
        %v6274 = vadd.f32 %v6273, %v6246
        %v6275 = vadd.f32 %v6274, %v6250
        %v6276 = vadd.f32 %v6275, %v6254
        %v6277 = vadd.f32 %v6227, %v6231
        %v6278 = vadd.f32 %v6277, %v6235
        %v6279 = vadd.f32 %v6278, %v6239
        %v6280 = vadd.f32 %v6279, %v6243
        %v6281 = vadd.f32 %v6280, %v6247
        %v6282 = vadd.f32 %v6281, %v6251
        %v6283 = vadd.f32 %v6282, %v6255
        %v6284 = vld [vmem:[%s4] sm:$0xff]
        %v6285 = vld [vmem:[%s4 + $0x8] sm:$0xff]
        %v6286 = vld [vmem:[%s4 + $0x10] sm:$0xff]
        %v6287 = vld [vmem:[%s4 + $0x18] sm:$0xff]
        %6289 = vset.pattern.permute.xlu0 0
        %6290 = vperm.xlu0 %6289, %v6284
        %v6291 = vpop.permute.xlu0 %6290
        %6294 = vset.pattern.permute.xlu0 0
        %6295 = vperm.xlu0 %6294, %v6285
        %v6296 = vpop.permute.xlu0 %6295
        %6299 = vset.pattern.permute.xlu0 0
        %6300 = vperm.xlu0 %6299, %v6286
        %v6301 = vpop.permute.xlu0 %6300
        %6304 = vset.pattern.permute.xlu0 0
        %6305 = vperm.xlu0 %6304, %v6287
        %v6306 = vpop.permute.xlu0 %6305
        %v6308 = vmul.f32 %v6291, %v6262
        %v6309 = vmul.f32 %v6296, %v6269
        %v6310 = vmul.f32 %v6301, %v6276
        %v6311 = vmul.f32 %v6306, %v6283
        %v6312 = vadd.f32 %v6308, %v6309
        %v6313 = vadd.f32 %v6312, %v6310
        %v6314 = vadd.f32 %v6313, %v6311
        %v6315 = vrot.slane %v6314, 4
        %v6316 = vadd.f32 %v6314, %v6315
        %v6317 = vrot.slane %v6316, 2
        %v6318 = vadd.f32 %v6316, %v6317
        %v6319 = vrot.slane %v6318, 1
        %v6320 = vadd.f32 %v6318, %v6319
        %6321 = vst [vmem:[%s375] sm:$0x1] %v6320
        %s6322 = sand.u32 %s142, 1
        %s6323 = scalar_lea.sflag [#allocation5], %s6322
        %s6324 = sand.u32 %s142, 1
        %s6325 = scalar_lea.vmem [#allocation4], %s6324
        // Predicated region
        $region120: #{tpu_custom_call.1} parent=110 // pred_check
          %p6326 = pneg %p152
        $region121: #{tpu_custom_call.1} parent=110 // pred_check_branch
          %6328 = sbr.rel (%p6326) target = $region123
        $region122: #{tpu_custom_call.1} parent=110 // pred_region
          %s6330 = ssub.s32 16, 16
          %6331 = vsyncadd %s6323, %s6330
          %s6332 = smul.addr %s19, 16
          %s6333 = scalar_lea.hbm %s5, %s6332
          %s6335 = sshll.u32 %s6325, 4
          %s6336 = int_to_ptr.vmem [resolvable:$true] %s6335
          %6338 = dma.vmem_to_hbm [thread:$0]  %s6336, 16, %s6333, %s6323
        $region123: #{tpu_custom_call.1} parent=110 // pred_fallthru
          _
      $region111: #{tpu_custom_call.1} parent=5 // pred_fallthru
        _
      %p6339 = scmp.le.s32.totalorder 2, %s14
      // Predicated region
      $region124: #{tpu_custom_call.1} parent=5 // pred_check
        %p6340 = pneg %p6339
      $region125: #{tpu_custom_call.1} parent=5 // pred_check_branch
        %6342 = sbr.rel (%p6340) target = $region127
      $region126: #{tpu_custom_call.1} parent=5 // pred_region
        %s6343 = ssub.s32 %s14, 2
        // Predicated region
        $region128: #{tpu_custom_call.1} parent=126 // pred_check
          %p6344 = pneg %p158
        $region129: #{tpu_custom_call.1} parent=126 // pred_check_branch
          %6346 = sbr.rel (%p6344) target = $region131
        $region130: #{tpu_custom_call.1} parent=126 // pred_region
          %s6347 = sand.u32 %s143, 1
          %s6348 = scalar_lea.sflag [#allocation5], %s6347
          %s6349 = sand.u32 %s143, 1
          %s6350 = scalar_lea.vmem [#allocation4], %s6349
          %6351 = dma.done %s6348, 16
        $region131: #{tpu_custom_call.1} parent=126 // pred_fallthru
          _
      $region127: #{tpu_custom_call.1} parent=5 // pred_fallthru
        _
    $region6: #{tpu_custom_call.1} parent=1 // loop_footer
      %s18 = sadd.s32 1, %s14
    $region7: #{tpu_custom_call.1} parent=1 // loop_footer_branch
      %13 = sbr.rel target = $region3
    $region8: #{tpu_custom_call.1} parent=1 // loop_exit
      _
    %6352 = vsyncpa [#allocation5], 1
    %s6353 = scalar_lea.sflag [#allocation5], 1
    %6354 = vsyncpa %s6353, 1

</llo_original>
